<compile_context>
chip_gen: v7x
topology: tpu7x:2x2x1
jax: 0.10.0
libtpu: 0.0.40
codegen_flags: <defaults>
</compile_context>

<pallas_src>
import jax
import jax.numpy as jnp
from jax.experimental import pallas as pl
from jax.experimental.pallas import tpu as pltpu

BN_EPS = 1e-5
SE_RATIO = 16
NEG_FILL = -1e30          # stand-in for -inf in the shared conv/maxpool halo


# --------------------------------------------------------------------------
# Fused kernel builder (all shapes / loop bounds are static Python values).
# One grid step == one batch sample.
# --------------------------------------------------------------------------
def build_resnet_block_kernel(B, H, W, Cin, Cout, stride):
    assert stride in (1, 2)
    if stride == 2:
        assert H % 2 == 0 and W % 2 == 0
        Ho, Wo = H // 2, W // 2
    else:
        assert Cin == Cout, "stride=1 identity skip requires Cin == Cout"
        Ho, Wo = H, W
    HWo = Ho * Wo
    K1, K2 = 9 * Cin, 9 * Cout

    # stride-2 polyphase tap table: conv/pool tap offset d in {0,1,2} ->
    #   (parity of the source phase, start offset into the front-padded phase buffer)
    TAP = {0: (1, 0), 1: (0, 1), 2: (1, 1)}

    def _conv2_se_combine(y1, skip, w2_ref, wse1_ref, wse2_ref, o_ref,
                          pad2, patches2):
        # conv2: 3x3 / stride 1 / pad 1 on y1 (HWo, Cout); zero halo, one slab
        # write of conv1's output, one slab store per tap for the patches.
        zrow = jnp.zeros((1, Wo + 2, Cout), jnp.float32)
        zcol = jnp.zeros((Ho + 2, 1, Cout), jnp.float32)
        pad2[0:1, :, :] = zrow
        pad2[Ho + 1:Ho + 2, :, :] = zrow
        pad2[:, 0:1, :] = zcol
        pad2[:, Wo + 1:Wo + 2, :] = zcol
        pad2[1:Ho + 1, 1:Wo + 1, :] = y1.reshape(Ho, Wo, Cout)
        for dy in range(3):
            for dx in range(3):
                t = dy * 3 + dx
                patches2[:, :, t * Cout:(t + 1) * Cout] = (
                    pad2[dy:dy + Ho, dx:dx + Wo, :].astype(jnp.bfloat16))
        xr = jnp.dot(patches2[...].reshape(HWo, K2), w2_ref[...],
                     preferred_element_type=jnp.float32)            # (HWo, Cout)

        # SEBlock: this grid step holds exactly one batch sample, so the squeeze
        # is a plain spatial row-mean and the gate broadcasts over the rows.
        se_in = jnp.mean(xr, axis=0, keepdims=True)                  # (1, Cout)
        se_h = jnp.maximum(
            jnp.dot(se_in, wse1_ref[...], preferred_element_type=jnp.float32), 0.0)
        se_s = jax.nn.sigmoid(
            jnp.dot(se_h, wse2_ref[...], preferred_element_type=jnp.float32))
        o_ref[...] = xr * se_s + skip

    if stride == 2:
        def kernel(xph_ref, sc_ref, sh_ref, w1_ref, b1_ref, w2_ref,
                   wse1_ref, wse2_ref, wskip_ref, o_ref,
                   ph, patches1, pad2, patches2):
            # eval-mode BatchNorm on the 4 polyphase components (NHWC, one sample)
            xb = xph_ref[0] * sc_ref[0] + sh_ref[0]          # (4, Ho, Wo, Cin)

            # ONE padded phase buffer holds raw BN(x) with a NEG_FILL front halo:
            #   relu(slab)  -> zero padding for the conv path
            #   max(slabs)  -> -inf padding for the maxpool skip path
            ph[:, 0:1, :, :] = jnp.full((4, 1, Wo + 1, Cin), NEG_FILL, jnp.float32)
            ph[:, :, 0:1, :] = jnp.full((4, Ho + 1, 1, Cin), NEG_FILL, jnp.float32)
            ph[:, 1:, 1:, :] = xb

            # conv1 patches (one slab store per tap) + fused maxpool running max
            mp = None
            for dy in range(3):
                pr, rs = TAP[dy]
                for dx in range(3):
                    pc, cs = TAP[dx]
                    t = dy * 3 + dx
                    slab = ph[pr * 2 + pc, rs:rs + Ho, cs:cs + Wo, :]   # (Ho,Wo,Cin)
                    patches1[:, :, t * Cin:(t + 1) * Cin] = (
                        jnp.maximum(slab, 0.0).astype(jnp.bfloat16))
                    mp = slab if mp is None else jnp.maximum(mp, slab)

            # conv1 (post-conv BatchNorm folded into w1/b1) + ReLU
            y1 = jnp.maximum(
                jnp.dot(patches1[...].reshape(HWo, K1), w1_ref[...],
                        preferred_element_type=jnp.float32) + b1_ref[...], 0.0)

            # skip = Conv1x1(MaxPool3x3/s2(BN(x)))   (bf16 MXU operands, f32 acc)
            skip = jnp.dot(mp.reshape(HWo, Cin).astype(jnp.bfloat16),
                           wskip_ref[...], preferred_element_type=jnp.float32)

            _conv2_se_combine(y1, skip, w2_ref, wse1_ref, wse2_ref, o_ref,
                              pad2, patches2)

        scratch = [
            pltpu.VMEM((4, Ho + 1, Wo + 1, Cin), jnp.float32),      # ph
            pltpu.VMEM((Ho, Wo, K1), jnp.bfloat16),                 # patches1
            pltpu.VMEM((Ho + 2, Wo + 2, Cout), jnp.float32),        # pad2
            pltpu.VMEM((Ho, Wo, K2), jnp.bfloat16),                 # patches2
        ]
    else:
        def kernel(x_ref, sc_ref, sh_ref, w1_ref, b1_ref, w2_ref,
                   wse1_ref, wse2_ref, o_ref,
                   pad1, patches1, pad2, patches2):
            xb = x_ref[0] * sc_ref[0] + sh_ref[0]            # (H, W, Cin)

            # zero halo; interior holds relu(BN(x)) — one slab write.
            zrow = jnp.zeros((1, W + 2, Cin), jnp.float32)
            zcol = jnp.zeros((H + 2, 1, Cin), jnp.float32)
            pad1[0:1, :, :] = zrow
            pad1[H + 1:H + 2, :, :] = zrow
            pad1[:, 0:1, :] = zcol
            pad1[:, W + 1:W + 2, :] = zcol
            pad1[1:H + 1, 1:W + 1, :] = jnp.maximum(xb, 0.0)

            # conv1: 3x3 / stride 1 / pad 1 — one slab store per tap
            for dy in range(3):
                for dx in range(3):
                    t = dy * 3 + dx
                    patches1[:, :, t * Cin:(t + 1) * Cin] = (
                        pad1[dy:dy + H, dx:dx + W, :].astype(jnp.bfloat16))

            y1 = jnp.maximum(
                jnp.dot(patches1[...].reshape(HWo, K1), w1_ref[...],
                        preferred_element_type=jnp.float32) + b1_ref[...], 0.0)

            skip = xb.reshape(HWo, Cin)       # identity skip = BN(x); Cin == Cout
            _conv2_se_combine(y1, skip, w2_ref, wse1_ref, wse2_ref, o_ref,
                              pad2, patches2)

        scratch = [
            pltpu.VMEM((H + 2, W + 2, Cin), jnp.float32),           # pad1
            pltpu.VMEM((Ho, Wo, K1), jnp.bfloat16),                 # patches1
            pltpu.VMEM((Ho + 2, Wo + 2, Cout), jnp.float32),        # pad2
            pltpu.VMEM((Ho, Wo, K2), jnp.bfloat16),                 # patches2
        ]

    return kernel, scratch, (Ho, Wo, HWo)


# --------------------------------------------------------------------------
# Wrapper
# --------------------------------------------------------------------------
def resnet_block_forward(x, params, stride):
    """x: (B, Cin, H, W) float32 NCHW (PyTorch layout). Returns (B, Cout, Ho, Wo)."""
    B, Cin, H, W = x.shape
    Cout = params["w2"].shape[0]
    kernel, scratch, (Ho, Wo, HWo) = build_resnet_block_kernel(B, H, W, Cin, Cout, stride)

    x_nhwc = jnp.transpose(x, (0, 2, 3, 1)).astype(jnp.float32)
    scale = params["bn1_scale"].reshape(1, Cin)
    shift = params["bn1_shift"].reshape(1, Cin)

    def resident(a):
        # whole-array block with a constant index_map: DMA'd once, stays in VMEM.
        zeros = (0,) * a.ndim
        return pl.BlockSpec(a.shape, lambda b, _z=zeros: _z)

    if stride == 2:
        # polyphase split (layout plumbing, done once on the input):
        #   phases[:, ph*2+pw] = x[:, ph::2, pw::2, :]
        phases = jnp.stack(
            [x_nhwc[:, ph::2, pw::2, :] for ph in (0, 1) for pw in (0, 1)], axis=1)
        ins = (phases, scale, shift, params["k_w1"], params["k_b1"], params["k_w2"],
               params["w_se1"], params["w_se2"], params["k_wskip"])
        x_spec = pl.BlockSpec((1, 4, Ho, Wo, Cin), lambda b: (b, 0, 0, 0, 0))
    else:
        ins = (x_nhwc, scale, shift, params["k_w1"], params["k_b1"], params["k_w2"],
               params["w_se1"], params["w_se2"])
        x_spec = pl.BlockSpec((1, H, W, Cin), lambda b: (b, 0, 0, 0))

    in_specs = [x_spec] + [resident(a) for a in ins[1:]]

    out2d = pl.pallas_call(
        kernel,
        grid=(B,),
        out_shape=jax.ShapeDtypeStruct((B * HWo, Cout), jnp.float32),
        in_specs=in_specs,
        out_specs=pl.BlockSpec((HWo, Cout), lambda b: (b, 0)),
        scratch_shapes=scratch,
        compiler_params=pltpu.CompilerParams(
            dimension_semantics=("parallel",)),   # batch samples shard across TCs
    )(*ins)
    return out2d.reshape(B, Ho, Wo, Cout).transpose(0, 3, 1, 2)


# --------------------------------------------------------------------------
# Parameters (PyTorch layouts + kernel layouts, BN2 folded into conv1)
# --------------------------------------------------------------------------
def init_params(key, Cin, Cout, stride, ratio=SE_RATIO):
    ks = iter(jax.random.split(key, 16))
    p = {}

    def bn_affine(n):
        g = 1.0 + 0.1 * jax.random.normal(next(ks), (n,))
        b = 0.1 * jax.random.normal(next(ks), (n,))
        rm = 0.1 * jax.random.normal(next(ks), (n,))
        rv = 1.0 + 0.1 * jax.random.uniform(next(ks), (n,))
        sc = g / jnp.sqrt(rv + BN_EPS)
        return sc.astype(jnp.float32), (b - rm * sc).astype(jnp.float32)

    p["bn1_scale"], p["bn1_shift"] = bn_affine(Cin)
    p["w1"] = (0.1 * jax.random.normal(next(ks), (Cout, Cin, 3, 3))).astype(jnp.float32)
    p["bn2_scale"], p["bn2_shift"] = bn_affine(Cout)
    p["w2"] = (0.1 * jax.random.normal(next(ks), (Cout, Cout, 3, 3))).astype(jnp.float32)
    p["w_se1"] = (0.3 * jax.random.normal(next(ks), (Cout, Cout // ratio))).astype(jnp.float32)
    p["w_se2"] = (0.3 * jax.random.normal(next(ks), (Cout // ratio, Cout))).astype(jnp.float32)

    # kernel-layout conv weights (tap-major im2col order: (dy, dx, ci) x co),
    # with the post-conv1 BatchNorm folded into conv1's weight/bias.
    w1_folded = p["w1"] * p["bn2_scale"][:, None, None, None]
    p["k_w1"] = w1_folded.transpose(2, 3, 1, 0).reshape(9 * Cin, Cout).astype(jnp.bfloat16)
    p["k_b1"] = p["bn2_shift"].reshape(1, Cout).astype(jnp.float32)
    p["k_w2"] = p["w2"].transpose(2, 3, 1, 0).reshape(9 * Cout, Cout).astype(jnp.bfloat16)

    if stride == 2:
        p["w_skip"] = (0.15 * jax.random.normal(next(ks), (Cout, Cin, 1, 1))).astype(jnp.float32)
        p["k_wskip"] = p["w_skip"].reshape(Cout, Cin).T.astype(jnp.bfloat16)
    return p


# --------------------------------------------------------------------------
# Pure-JAX reference (PyTorch semantics, f32) for correctness checking
# --------------------------------------------------------------------------
def reference_forward(x, p, stride):
    dn = ("NCHW", "OIHW", "NCHW")
    hp = jax.lax.Precision.HIGHEST
    xb = x * p["bn1_scale"][None, :, None, None] + p["bn1_shift"][None, :, None, None]
    h = jnp.maximum(xb, 0.0)
    y = jax.lax.conv_general_dilated(h, p["w1"], (stride, stride), ((1, 1), (1, 1)),
                                     dimension_numbers=dn, precision=hp)
    y = y * p["bn2_scale"][None, :, None, None] + p["bn2_shift"][None, :, None, None]
    y = jnp.maximum(y, 0.0)
    y = jax.lax.conv_general_dilated(y, p["w2"], (1, 1), ((1, 1), (1, 1)),
                                     dimension_numbers=dn, precision=hp)
    m = jnp.mean(y, axis=(2, 3))
    s = jax.nn.sigmoid(jnp.maximum(m @ p["w_se1"], 0.0) @ p["w_se2"])
    xr = y * s[:, :, None, None]
    if stride == 2:
        mp = jax.lax.reduce_window(xb, -jnp.inf, jax.lax.max, (1, 1, 3, 3), (1, 1, 2, 2),
                                   padding=((0, 0), (0, 0), (1, 1), (1, 1)))
        sk = jax.lax.conv_general_dilated(mp, p["w_skip"], (1, 1), "VALID",
                                          dimension_numbers=dn, precision=hp)
        return sk + xr
    return xb + xr


def _assert_close(got, want, name):
    err = float(jnp.max(jnp.abs(got - want)))
    scale = float(jnp.max(jnp.abs(want)))
    # bf16 MXU operands (f32 accumulation) -> allow a few % of the output scale.
    if not err <= 5e-2 * scale + 1e-3:
        raise AssertionError(f"{name}: max abs err {err:.4e} (scale {scale:.4e})")


# --------------------------------------------------------------------------
if __name__ == "__main__":
    key = jax.random.PRNGKey(0)
    k1, k2, k3, k4 = jax.random.split(key, 4)

    # Config A: stride=2 (skip = MaxPool3x3/2 + 1x1 conv), Cin != Cout
    B, Cin, H, W, Cout = 2, 32, 16, 16, 64
    x2 = jax.random.normal(k1, (B, Cin, H, W), dtype=jnp.float32)
    p2 = init_params(k2, Cin, Cout, stride=2)
    out2 = jax.block_until_ready(resnet_block_forward(x2, p2, 2))
    assert out2.shape == (B, Cout, H // 2, W // 2), out2.shape
    ref2 = jax.block_until_ready(reference_forward(x2, p2, 2))
    _assert_close(out2, ref2, "stride=2")

    # Config B: stride=1 (identity skip), Cin == Cout
    B1, C1, H1, W1 = 2, 32, 8, 8
    x1 = jax.random.normal(k3, (B1, C1, H1, W1), dtype=jnp.float32)
    p1 = init_params(k4, C1, C1, stride=1)
    out1 = jax.block_until_ready(resnet_block_forward(x1, p1, 1))
    assert out1.shape == (B1, C1, H1, W1), out1.shape
    ref1 = jax.block_until_ready(reference_forward(x1, p1, 1))
    _assert_close(out1, ref1, "stride=1")

    print("KERNEL_OK")
</pallas_src>

<mosaic_0001>
module attributes {stable_mosaic.version = 11 : i64} {
  func.func @kernel(%arg0: i32, %arg1: memref<1x4x8x8x32xf32, #tpu.memory_space<vmem>>, %arg2: memref<1x32xf32, #tpu.memory_space<vmem>>, %arg3: memref<1x32xf32, #tpu.memory_space<vmem>>, %arg4: memref<288x64xbf16, #tpu.memory_space<vmem>>, %arg5: memref<1x64xf32, #tpu.memory_space<vmem>>, %arg6: memref<576x64xbf16, #tpu.memory_space<vmem>>, %arg7: memref<64x4xf32, #tpu.memory_space<vmem>>, %arg8: memref<4x64xf32, #tpu.memory_space<vmem>>, %arg9: memref<32x64xbf16, #tpu.memory_space<vmem>>, %arg10: memref<64x64xf32, #tpu.memory_space<vmem>>, %arg11: memref<4x9x9x32xf32, #tpu.memory_space<vmem>>, %arg12: memref<8x8x288xbf16, #tpu.memory_space<vmem>>, %arg13: memref<10x10x64xf32, #tpu.memory_space<vmem>>, %arg14: memref<8x8x576xbf16, #tpu.memory_space<vmem>>) attributes {dimension_semantics = [#tpu.dimension_semantics<parallel>], iteration_bounds = array<i64: 2>, scalar_prefetch = 0 : i64, scratch_operands = 4 : i64, tpu.core_type = #tpu.core_type<tc>, window_params = [{transform_indices = @transform_0, window_bounds = array<i64: 1, 4, 8, 8, 32>}, {pipeline_mode = #tpu.pipeline_mode<synchronous>, transform_indices = @transform_1, window_bounds = array<i64: 1, 32>}, {pipeline_mode = #tpu.pipeline_mode<synchronous>, transform_indices = @transform_2, window_bounds = array<i64: 1, 32>}, {pipeline_mode = #tpu.pipeline_mode<synchronous>, transform_indices = @transform_3, window_bounds = array<i64: 288, 64>}, {pipeline_mode = #tpu.pipeline_mode<synchronous>, transform_indices = @transform_4, window_bounds = array<i64: 1, 64>}, {pipeline_mode = #tpu.pipeline_mode<synchronous>, transform_indices = @transform_5, window_bounds = array<i64: 576, 64>}, {pipeline_mode = #tpu.pipeline_mode<synchronous>, transform_indices = @transform_6, window_bounds = array<i64: 64, 4>}, {pipeline_mode = #tpu.pipeline_mode<synchronous>, transform_indices = @transform_7, window_bounds = array<i64: 4, 64>}, {pipeline_mode = #tpu.pipeline_mode<synchronous>, transform_indices = @transform_8, window_bounds = array<i64: 32, 64>}, {transform_indices = @transform_9, window_bounds = array<i64: 64, 64>}]} {
    %c0 = arith.constant 0 : index
    %c0_0 = arith.constant 0 : index
    %c0_1 = arith.constant 0 : index
    %c0_2 = arith.constant 0 : index
    %c0_3 = arith.constant 0 : index
    %0 = vector.load %arg1[%c0, %c0_0, %c0_1, %c0_2, %c0_3] : memref<1x4x8x8x32xf32, #tpu.memory_space<vmem>>, vector<1x4x8x8x32xf32>
    %1 = vector.shape_cast %0 : vector<1x4x8x8x32xf32> to vector<4x8x8x32xf32>
    %c0_4 = arith.constant 0 : index
    %c0_5 = arith.constant 0 : index
    %2 = vector.load %arg2[%c0_4, %c0_5] : memref<1x32xf32, #tpu.memory_space<vmem>>, vector<1x32xf32>
    %3 = vector.shape_cast %2 : vector<1x32xf32> to vector<32xf32>
    %4 = vector.shape_cast %3 : vector<32xf32> to vector<1x1x1x32xf32>
    %5 = vector.broadcast %4 : vector<1x1x1x32xf32> to vector<4x8x8x32xf32>
    %6 = arith.mulf %1, %5 : vector<4x8x8x32xf32>
    %c0_6 = arith.constant 0 : index
    %c0_7 = arith.constant 0 : index
    %7 = vector.load %arg3[%c0_6, %c0_7] : memref<1x32xf32, #tpu.memory_space<vmem>>, vector<1x32xf32>
    %8 = vector.shape_cast %7 : vector<1x32xf32> to vector<32xf32>
    %9 = vector.shape_cast %8 : vector<32xf32> to vector<1x1x1x32xf32>
    %10 = vector.broadcast %9 : vector<1x1x1x32xf32> to vector<4x8x8x32xf32>
    %11 = arith.addf %6, %10 : vector<4x8x8x32xf32>
    %cst = arith.constant -1.000000e+30 : f32
    %12 = vector.broadcast %cst : f32 to vector<4x1x9x32xf32>
    %c0_8 = arith.constant 0 : index
    %c0_9 = arith.constant 0 : index
    %c0_10 = arith.constant 0 : index
    %c0_11 = arith.constant 0 : index
    %13 = vector.load %arg11[%c0_8, %c0_9, %c0_10, %c0_11] : memref<4x9x9x32xf32, #tpu.memory_space<vmem>>, vector<4x1x9x32xf32>
    tpu.vector_store %arg11[%c0_8, %c0_9, %c0_10, %c0_11], %12 {strides = array<i32>} : memref<4x9x9x32xf32, #tpu.memory_space<vmem>>, vector<4x1x9x32xf32>,
    %cst_12 = arith.constant -1.000000e+30 : f32
    %14 = vector.broadcast %cst_12 : f32 to vector<4x9x1x32xf32>
    %c0_13 = arith.constant 0 : index
    %c0_14 = arith.constant 0 : index
    %c0_15 = arith.constant 0 : index
    %c0_16 = arith.constant 0 : index
    %15 = vector.load %arg11[%c0_13, %c0_14, %c0_15, %c0_16] : memref<4x9x9x32xf32, #tpu.memory_space<vmem>>, vector<4x9x1x32xf32>
    tpu.vector_store %arg11[%c0_13, %c0_14, %c0_15, %c0_16], %14 {strides = array<i32>} : memref<4x9x9x32xf32, #tpu.memory_space<vmem>>, vector<4x9x1x32xf32>,
    %c0_17 = arith.constant 0 : index
    %c1 = arith.constant 1 : index
    %c1_18 = arith.constant 1 : index
    %c0_19 = arith.constant 0 : index
    %16 = vector.load %arg11[%c0_17, %c1, %c1_18, %c0_19] : memref<4x9x9x32xf32, #tpu.memory_space<vmem>>, vector<4x8x8x32xf32>
    tpu.vector_store %arg11[%c0_17, %c1, %c1_18, %c0_19], %11 {strides = array<i32>} : memref<4x9x9x32xf32, #tpu.memory_space<vmem>>, vector<4x8x8x32xf32>,
    %c3 = arith.constant 3 : index
    %c0_20 = arith.constant 0 : index
    %c0_21 = arith.constant 0 : index
    %c0_22 = arith.constant 0 : index
    %17 = vector.load %arg11[%c3, %c0_20, %c0_21, %c0_22] : memref<4x9x9x32xf32, #tpu.memory_space<vmem>>, vector<1x8x8x32xf32>
    %18 = vector.shape_cast %17 : vector<1x8x8x32xf32> to vector<8x8x32xf32>
    %cst_23 = arith.constant 0.000000e+00 : f32
    %19 = vector.broadcast %cst_23 : f32 to vector<8x8x32xf32>
    %20 = arith.maximumf %18, %19 : vector<8x8x32xf32>
    %21 = arith.truncf %20 : vector<8x8x32xf32> to vector<8x8x32xbf16>
    %c0_24 = arith.constant 0 : index
    %c0_25 = arith.constant 0 : index
    %c0_26 = arith.constant 0 : index
    %22 = vector.load %arg12[%c0_24, %c0_25, %c0_26] : memref<8x8x288xbf16, #tpu.memory_space<vmem>>, vector<8x8x32xbf16>
    tpu.vector_store %arg12[%c0_24, %c0_25, %c0_26], %21 {strides = array<i32>} : memref<8x8x288xbf16, #tpu.memory_space<vmem>>, vector<8x8x32xbf16>,
    %c2 = arith.constant 2 : index
    %c0_27 = arith.constant 0 : index
    %c1_28 = arith.constant 1 : index
    %c0_29 = arith.constant 0 : index
    %23 = vector.load %arg11[%c2, %c0_27, %c1_28, %c0_29] : memref<4x9x9x32xf32, #tpu.memory_space<vmem>>, vector<1x8x8x32xf32>
    %24 = vector.shape_cast %23 : vector<1x8x8x32xf32> to vector<8x8x32xf32>
    %cst_30 = arith.constant 0.000000e+00 : f32
    %25 = vector.broadcast %cst_30 : f32 to vector<8x8x32xf32>
    %26 = arith.maximumf %24, %25 : vector<8x8x32xf32>
    %27 = arith.truncf %26 : vector<8x8x32xf32> to vector<8x8x32xbf16>
    %c0_31 = arith.constant 0 : index
    %c0_32 = arith.constant 0 : index
    %c32 = arith.constant 32 : index
    %28 = vector.load %arg12[%c0_31, %c0_32, %c32] : memref<8x8x288xbf16, #tpu.memory_space<vmem>>, vector<8x8x32xbf16>
    tpu.vector_store %arg12[%c0_31, %c0_32, %c32], %27 {strides = array<i32>} : memref<8x8x288xbf16, #tpu.memory_space<vmem>>, vector<8x8x32xbf16>,
    %29 = arith.maximumf %18, %24 : vector<8x8x32xf32>
    %c3_33 = arith.constant 3 : index
    %c0_34 = arith.constant 0 : index
    %c1_35 = arith.constant 1 : index
    %c0_36 = arith.constant 0 : index
    %30 = vector.load %arg11[%c3_33, %c0_34, %c1_35, %c0_36] : memref<4x9x9x32xf32, #tpu.memory_space<vmem>>, vector<1x8x8x32xf32>
    %31 = vector.shape_cast %30 : vector<1x8x8x32xf32> to vector<8x8x32xf32>
    %cst_37 = arith.constant 0.000000e+00 : f32
    %32 = vector.broadcast %cst_37 : f32 to vector<8x8x32xf32>
    %33 = arith.maximumf %31, %32 : vector<8x8x32xf32>
    %34 = arith.truncf %33 : vector<8x8x32xf32> to vector<8x8x32xbf16>
    %c0_38 = arith.constant 0 : index
    %c0_39 = arith.constant 0 : index
    %c64 = arith.constant 64 : index
    %35 = vector.load %arg12[%c0_38, %c0_39, %c64] : memref<8x8x288xbf16, #tpu.memory_space<vmem>>, vector<8x8x32xbf16>
    tpu.vector_store %arg12[%c0_38, %c0_39, %c64], %34 {strides = array<i32>} : memref<8x8x288xbf16, #tpu.memory_space<vmem>>, vector<8x8x32xbf16>,
    %36 = arith.maximumf %29, %31 : vector<8x8x32xf32>
    %c1_40 = arith.constant 1 : index
    %c1_41 = arith.constant 1 : index
    %c0_42 = arith.constant 0 : index
    %c0_43 = arith.constant 0 : index
    %37 = vector.load %arg11[%c1_40, %c1_41, %c0_42, %c0_43] : memref<4x9x9x32xf32, #tpu.memory_space<vmem>>, vector<1x8x8x32xf32>
    %38 = vector.shape_cast %37 : vector<1x8x8x32xf32> to vector<8x8x32xf32>
    %cst_44 = arith.constant 0.000000e+00 : f32
    %39 = vector.broadcast %cst_44 : f32 to vector<8x8x32xf32>
    %40 = arith.maximumf %38, %39 : vector<8x8x32xf32>
    %41 = arith.truncf %40 : vector<8x8x32xf32> to vector<8x8x32xbf16>
    %c0_45 = arith.constant 0 : index
    %c0_46 = arith.constant 0 : index
    %c96 = arith.constant 96 : index
    %42 = vector.load %arg12[%c0_45, %c0_46, %c96] : memref<8x8x288xbf16, #tpu.memory_space<vmem>>, vector<8x8x32xbf16>
    tpu.vector_store %arg12[%c0_45, %c0_46, %c96], %41 {strides = array<i32>} : memref<8x8x288xbf16, #tpu.memory_space<vmem>>, vector<8x8x32xbf16>,
    %43 = arith.maximumf %36, %38 : vector<8x8x32xf32>
    %c0_47 = arith.constant 0 : index
    %c1_48 = arith.constant 1 : index
    %c1_49 = arith.constant 1 : index
    %c0_50 = arith.constant 0 : index
    %44 = vector.load %arg11[%c0_47, %c1_48, %c1_49, %c0_50] : memref<4x9x9x32xf32, #tpu.memory_space<vmem>>, vector<1x8x8x32xf32>
    %45 = vector.shape_cast %44 : vector<1x8x8x32xf32> to vector<8x8x32xf32>
    %cst_51 = arith.constant 0.000000e+00 : f32
    %46 = vector.broadcast %cst_51 : f32 to vector<8x8x32xf32>
    %47 = arith.maximumf %45, %46 : vector<8x8x32xf32>
    %48 = arith.truncf %47 : vector<8x8x32xf32> to vector<8x8x32xbf16>
    %c0_52 = arith.constant 0 : index
    %c0_53 = arith.constant 0 : index
    %c128 = arith.constant 128 : index
    %49 = vector.load %arg12[%c0_52, %c0_53, %c128] : memref<8x8x288xbf16, #tpu.memory_space<vmem>>, vector<8x8x32xbf16>
    tpu.vector_store %arg12[%c0_52, %c0_53, %c128], %48 {strides = array<i32>} : memref<8x8x288xbf16, #tpu.memory_space<vmem>>, vector<8x8x32xbf16>,
    %50 = arith.maximumf %43, %45 : vector<8x8x32xf32>
    %c1_54 = arith.constant 1 : index
    %c1_55 = arith.constant 1 : index
    %c1_56 = arith.constant 1 : index
    %c0_57 = arith.constant 0 : index
    %51 = vector.load %arg11[%c1_54, %c1_55, %c1_56, %c0_57] : memref<4x9x9x32xf32, #tpu.memory_space<vmem>>, vector<1x8x8x32xf32>
    %52 = vector.shape_cast %51 : vector<1x8x8x32xf32> to vector<8x8x32xf32>
    %cst_58 = arith.constant 0.000000e+00 : f32
    %53 = vector.broadcast %cst_58 : f32 to vector<8x8x32xf32>
    %54 = arith.maximumf %52, %53 : vector<8x8x32xf32>
    %55 = arith.truncf %54 : vector<8x8x32xf32> to vector<8x8x32xbf16>
    %c0_59 = arith.constant 0 : index
    %c0_60 = arith.constant 0 : index
    %c160 = arith.constant 160 : index
    %56 = vector.load %arg12[%c0_59, %c0_60, %c160] : memref<8x8x288xbf16, #tpu.memory_space<vmem>>, vector<8x8x32xbf16>
    tpu.vector_store %arg12[%c0_59, %c0_60, %c160], %55 {strides = array<i32>} : memref<8x8x288xbf16, #tpu.memory_space<vmem>>, vector<8x8x32xbf16>,
    %57 = arith.maximumf %50, %52 : vector<8x8x32xf32>
    %c3_61 = arith.constant 3 : index
    %c1_62 = arith.constant 1 : index
    %c0_63 = arith.constant 0 : index
    %c0_64 = arith.constant 0 : index
    %58 = vector.load %arg11[%c3_61, %c1_62, %c0_63, %c0_64] : memref<4x9x9x32xf32, #tpu.memory_space<vmem>>, vector<1x8x8x32xf32>
    %59 = vector.shape_cast %58 : vector<1x8x8x32xf32> to vector<8x8x32xf32>
    %cst_65 = arith.constant 0.000000e+00 : f32
    %60 = vector.broadcast %cst_65 : f32 to vector<8x8x32xf32>
    %61 = arith.maximumf %59, %60 : vector<8x8x32xf32>
    %62 = arith.truncf %61 : vector<8x8x32xf32> to vector<8x8x32xbf16>
    %c0_66 = arith.constant 0 : index
    %c0_67 = arith.constant 0 : index
    %c192 = arith.constant 192 : index
    %63 = vector.load %arg12[%c0_66, %c0_67, %c192] : memref<8x8x288xbf16, #tpu.memory_space<vmem>>, vector<8x8x32xbf16>
    tpu.vector_store %arg12[%c0_66, %c0_67, %c192], %62 {strides = array<i32>} : memref<8x8x288xbf16, #tpu.memory_space<vmem>>, vector<8x8x32xbf16>,
    %64 = arith.maximumf %57, %59 : vector<8x8x32xf32>
    %c2_68 = arith.constant 2 : index
    %c1_69 = arith.constant 1 : index
    %c1_70 = arith.constant 1 : index
    %c0_71 = arith.constant 0 : index
    %65 = vector.load %arg11[%c2_68, %c1_69, %c1_70, %c0_71] : memref<4x9x9x32xf32, #tpu.memory_space<vmem>>, vector<1x8x8x32xf32>
    %66 = vector.shape_cast %65 : vector<1x8x8x32xf32> to vector<8x8x32xf32>
    %cst_72 = arith.constant 0.000000e+00 : f32
    %67 = vector.broadcast %cst_72 : f32 to vector<8x8x32xf32>
    %68 = arith.maximumf %66, %67 : vector<8x8x32xf32>
    %69 = arith.truncf %68 : vector<8x8x32xf32> to vector<8x8x32xbf16>
    %c0_73 = arith.constant 0 : index
    %c0_74 = arith.constant 0 : index
    %c224 = arith.constant 224 : index
    %70 = vector.load %arg12[%c0_73, %c0_74, %c224] : memref<8x8x288xbf16, #tpu.memory_space<vmem>>, vector<8x8x32xbf16>
    tpu.vector_store %arg12[%c0_73, %c0_74, %c224], %69 {strides = array<i32>} : memref<8x8x288xbf16, #tpu.memory_space<vmem>>, vector<8x8x32xbf16>,
    %71 = arith.maximumf %64, %66 : vector<8x8x32xf32>
    %c3_75 = arith.constant 3 : index
    %c1_76 = arith.constant 1 : index
    %c1_77 = arith.constant 1 : index
    %c0_78 = arith.constant 0 : index
    %72 = vector.load %arg11[%c3_75, %c1_76, %c1_77, %c0_78] : memref<4x9x9x32xf32, #tpu.memory_space<vmem>>, vector<1x8x8x32xf32>
    %73 = vector.shape_cast %72 : vector<1x8x8x32xf32> to vector<8x8x32xf32>
    %cst_79 = arith.constant 0.000000e+00 : f32
    %74 = vector.broadcast %cst_79 : f32 to vector<8x8x32xf32>
    %75 = arith.maximumf %73, %74 : vector<8x8x32xf32>
    %76 = arith.truncf %75 : vector<8x8x32xf32> to vector<8x8x32xbf16>
    %c0_80 = arith.constant 0 : index
    %c0_81 = arith.constant 0 : index
    %c256 = arith.constant 256 : index
    %77 = vector.load %arg12[%c0_80, %c0_81, %c256] : memref<8x8x288xbf16, #tpu.memory_space<vmem>>, vector<8x8x32xbf16>
    tpu.vector_store %arg12[%c0_80, %c0_81, %c256], %76 {strides = array<i32>} : memref<8x8x288xbf16, #tpu.memory_space<vmem>>, vector<8x8x32xbf16>,
    %78 = arith.maximumf %71, %73 : vector<8x8x32xf32>
    %c0_82 = arith.constant 0 : index
    %c0_83 = arith.constant 0 : index
    %c0_84 = arith.constant 0 : index
    %79 = vector.load %arg12[%c0_82, %c0_83, %c0_84] : memref<8x8x288xbf16, #tpu.memory_space<vmem>>, vector<8x8x288xbf16>
    %80 = vector.shape_cast %79 : vector<8x8x288xbf16> to vector<64x288xbf16>
    %c0_85 = arith.constant 0 : index
    %c0_86 = arith.constant 0 : index
    %81 = vector.load %arg4[%c0_85, %c0_86] : memref<288x64xbf16, #tpu.memory_space<vmem>>, vector<288x64xbf16>
    %cst_87 = arith.constant dense<0.000000e+00> : vector<64x64xf32>
    %82 = tpu.matmul %80, %81, %cst_87 {dimension_numbers = #tpu.dot_dimension_numbers<[1], [0], [0], [1], [0, 0, 1, 1], [], []>} : vector<64x288xbf16>, vector<288x64xbf16>, vector<64x64xf32> -> vector<64x64xf32>
    %c0_88 = arith.constant 0 : index
    %c0_89 = arith.constant 0 : index
    %83 = vector.load %arg5[%c0_88, %c0_89] : memref<1x64xf32, #tpu.memory_space<vmem>>, vector<1x64xf32>
    %84 = vector.broadcast %83 : vector<1x64xf32> to vector<64x64xf32>
    %85 = arith.addf %82, %84 : vector<64x64xf32>
    %cst_90 = arith.constant 0.000000e+00 : f32
    %86 = vector.broadcast %cst_90 : f32 to vector<64x64xf32>
    %87 = arith.maximumf %85, %86 : vector<64x64xf32>
    %88 = vector.shape_cast %78 : vector<8x8x32xf32> to vector<64x32xf32>
    %89 = arith.truncf %88 : vector<64x32xf32> to vector<64x32xbf16>
    %c0_91 = arith.constant 0 : index
    %c0_92 = arith.constant 0 : index
    %90 = vector.load %arg9[%c0_91, %c0_92] : memref<32x64xbf16, #tpu.memory_space<vmem>>, vector<32x64xbf16>
    %cst_93 = arith.constant dense<0.000000e+00> : vector<64x64xf32>
    %91 = tpu.matmul %89, %90, %cst_93 {dimension_numbers = #tpu.dot_dimension_numbers<[1], [0], [0], [1], [0, 0, 1, 1], [], []>} : vector<64x32xbf16>, vector<32x64xbf16>, vector<64x64xf32> -> vector<64x64xf32>
    %cst_94 = arith.constant 0.000000e+00 : f32
    %92 = vector.broadcast %cst_94 : f32 to vector<1x10x64xf32>
    %cst_95 = arith.constant 0.000000e+00 : f32
    %93 = vector.broadcast %cst_95 : f32 to vector<10x1x64xf32>
    %c0_96 = arith.constant 0 : index
    %c0_97 = arith.constant 0 : index
    %c0_98 = arith.constant 0 : index
    %94 = vector.load %arg13[%c0_96, %c0_97, %c0_98] : memref<10x10x64xf32, #tpu.memory_space<vmem>>, vector<1x10x64xf32>
    tpu.vector_store %arg13[%c0_96, %c0_97, %c0_98], %92 {strides = array<i32>} : memref<10x10x64xf32, #tpu.memory_space<vmem>>, vector<1x10x64xf32>,
    %c9 = arith.constant 9 : index
    %c0_99 = arith.constant 0 : index
    %c0_100 = arith.constant 0 : index
    %95 = vector.load %arg13[%c9, %c0_99, %c0_100] : memref<10x10x64xf32, #tpu.memory_space<vmem>>, vector<1x10x64xf32>
    tpu.vector_store %arg13[%c9, %c0_99, %c0_100], %92 {strides = array<i32>} : memref<10x10x64xf32, #tpu.memory_space<vmem>>, vector<1x10x64xf32>,
    %c0_101 = arith.constant 0 : index
    %c0_102 = arith.constant 0 : index
    %c0_103 = arith.constant 0 : index
    %96 = vector.load %arg13[%c0_101, %c0_102, %c0_103] : memref<10x10x64xf32, #tpu.memory_space<vmem>>, vector<10x1x64xf32>
    tpu.vector_store %arg13[%c0_101, %c0_102, %c0_103], %93 {strides = array<i32>} : memref<10x10x64xf32, #tpu.memory_space<vmem>>, vector<10x1x64xf32>,
    %c0_104 = arith.constant 0 : index
    %c9_105 = arith.constant 9 : index
    %c0_106 = arith.constant 0 : index
    %97 = vector.load %arg13[%c0_104, %c9_105, %c0_106] : memref<10x10x64xf32, #tpu.memory_space<vmem>>, vector<10x1x64xf32>
    tpu.vector_store %arg13[%c0_104, %c9_105, %c0_106], %93 {strides = array<i32>} : memref<10x10x64xf32, #tpu.memory_space<vmem>>, vector<10x1x64xf32>,
    %98 = vector.shape_cast %87 : vector<64x64xf32> to vector<8x8x64xf32>
    %c1_107 = arith.constant 1 : index
    %c1_108 = arith.constant 1 : index
    %c0_109 = arith.constant 0 : index
    %99 = vector.load %arg13[%c1_107, %c1_108, %c0_109] : memref<10x10x64xf32, #tpu.memory_space<vmem>>, vector<8x8x64xf32>
    tpu.vector_store %arg13[%c1_107, %c1_108, %c0_109], %98 {strides = array<i32>} : memref<10x10x64xf32, #tpu.memory_space<vmem>>, vector<8x8x64xf32>,
    %c0_110 = arith.constant 0 : index
    %c0_111 = arith.constant 0 : index
    %c0_112 = arith.constant 0 : index
    %100 = vector.load %arg13[%c0_110, %c0_111, %c0_112] : memref<10x10x64xf32, #tpu.memory_space<vmem>>, vector<8x8x64xf32>
    %101 = arith.truncf %100 : vector<8x8x64xf32> to vector<8x8x64xbf16>
    %c0_113 = arith.constant 0 : index
    %c0_114 = arith.constant 0 : index
    %c0_115 = arith.constant 0 : index
    %102 = vector.load %arg14[%c0_113, %c0_114, %c0_115] : memref<8x8x576xbf16, #tpu.memory_space<vmem>>, vector<8x8x64xbf16>
    tpu.vector_store %arg14[%c0_113, %c0_114, %c0_115], %101 {strides = array<i32>} : memref<8x8x576xbf16, #tpu.memory_space<vmem>>, vector<8x8x64xbf16>,
    %c0_116 = arith.constant 0 : index
    %c1_117 = arith.constant 1 : index
    %c0_118 = arith.constant 0 : index
    %103 = vector.load %arg13[%c0_116, %c1_117, %c0_118] : memref<10x10x64xf32, #tpu.memory_space<vmem>>, vector<8x8x64xf32>
    %104 = arith.truncf %103 : vector<8x8x64xf32> to vector<8x8x64xbf16>
    %c0_119 = arith.constant 0 : index
    %c0_120 = arith.constant 0 : index
    %c64_121 = arith.constant 64 : index
    %105 = vector.load %arg14[%c0_119, %c0_120, %c64_121] : memref<8x8x576xbf16, #tpu.memory_space<vmem>>, vector<8x8x64xbf16>
    tpu.vector_store %arg14[%c0_119, %c0_120, %c64_121], %104 {strides = array<i32>} : memref<8x8x576xbf16, #tpu.memory_space<vmem>>, vector<8x8x64xbf16>,
    %c0_122 = arith.constant 0 : index
    %c2_123 = arith.constant 2 : index
    %c0_124 = arith.constant 0 : index
    %106 = vector.load %arg13[%c0_122, %c2_123, %c0_124] : memref<10x10x64xf32, #tpu.memory_space<vmem>>, vector<8x8x64xf32>
    %107 = arith.truncf %106 : vector<8x8x64xf32> to vector<8x8x64xbf16>
    %c0_125 = arith.constant 0 : index
    %c0_126 = arith.constant 0 : index
    %c128_127 = arith.constant 128 : index
    %108 = vector.load %arg14[%c0_125, %c0_126, %c128_127] : memref<8x8x576xbf16, #tpu.memory_space<vmem>>, vector<8x8x64xbf16>
    tpu.vector_store %arg14[%c0_125, %c0_126, %c128_127], %107 {strides = array<i32>} : memref<8x8x576xbf16, #tpu.memory_space<vmem>>, vector<8x8x64xbf16>,
    %c1_128 = arith.constant 1 : index
    %c0_129 = arith.constant 0 : index
    %c0_130 = arith.constant 0 : index
    %109 = vector.load %arg13[%c1_128, %c0_129, %c0_130] : memref<10x10x64xf32, #tpu.memory_space<vmem>>, vector<8x8x64xf32>
    %110 = arith.truncf %109 : vector<8x8x64xf32> to vector<8x8x64xbf16>
    %c0_131 = arith.constant 0 : index
    %c0_132 = arith.constant 0 : index
    %c192_133 = arith.constant 192 : index
    %111 = vector.load %arg14[%c0_131, %c0_132, %c192_133] : memref<8x8x576xbf16, #tpu.memory_space<vmem>>, vector<8x8x64xbf16>
    tpu.vector_store %arg14[%c0_131, %c0_132, %c192_133], %110 {strides = array<i32>} : memref<8x8x576xbf16, #tpu.memory_space<vmem>>, vector<8x8x64xbf16>,
    %c1_134 = arith.constant 1 : index
    %c1_135 = arith.constant 1 : index
    %c0_136 = arith.constant 0 : index
    %112 = vector.load %arg13[%c1_134, %c1_135, %c0_136] : memref<10x10x64xf32, #tpu.memory_space<vmem>>, vector<8x8x64xf32>
    %113 = arith.truncf %112 : vector<8x8x64xf32> to vector<8x8x64xbf16>
    %c0_137 = arith.constant 0 : index
    %c0_138 = arith.constant 0 : index
    %c256_139 = arith.constant 256 : index
    %114 = vector.load %arg14[%c0_137, %c0_138, %c256_139] : memref<8x8x576xbf16, #tpu.memory_space<vmem>>, vector<8x8x64xbf16>
    tpu.vector_store %arg14[%c0_137, %c0_138, %c256_139], %113 {strides = array<i32>} : memref<8x8x576xbf16, #tpu.memory_space<vmem>>, vector<8x8x64xbf16>,
    %c1_140 = arith.constant 1 : index
    %c2_141 = arith.constant 2 : index
    %c0_142 = arith.constant 0 : index
    %115 = vector.load %arg13[%c1_140, %c2_141, %c0_142] : memref<10x10x64xf32, #tpu.memory_space<vmem>>, vector<8x8x64xf32>
    %116 = arith.truncf %115 : vector<8x8x64xf32> to vector<8x8x64xbf16>
    %c0_143 = arith.constant 0 : index
    %c0_144 = arith.constant 0 : index
    %c320 = arith.constant 320 : index
    %117 = vector.load %arg14[%c0_143, %c0_144, %c320] : memref<8x8x576xbf16, #tpu.memory_space<vmem>>, vector<8x8x64xbf16>
    tpu.vector_store %arg14[%c0_143, %c0_144, %c320], %116 {strides = array<i32>} : memref<8x8x576xbf16, #tpu.memory_space<vmem>>, vector<8x8x64xbf16>,
    %c2_145 = arith.constant 2 : index
    %c0_146 = arith.constant 0 : index
    %c0_147 = arith.constant 0 : index
    %118 = vector.load %arg13[%c2_145, %c0_146, %c0_147] : memref<10x10x64xf32, #tpu.memory_space<vmem>>, vector<8x8x64xf32>
    %119 = arith.truncf %118 : vector<8x8x64xf32> to vector<8x8x64xbf16>
    %c0_148 = arith.constant 0 : index
    %c0_149 = arith.constant 0 : index
    %c384 = arith.constant 384 : index
    %120 = vector.load %arg14[%c0_148, %c0_149, %c384] : memref<8x8x576xbf16, #tpu.memory_space<vmem>>, vector<8x8x64xbf16>
    tpu.vector_store %arg14[%c0_148, %c0_149, %c384], %119 {strides = array<i32>} : memref<8x8x576xbf16, #tpu.memory_space<vmem>>, vector<8x8x64xbf16>,
    %c2_150 = arith.constant 2 : index
    %c1_151 = arith.constant 1 : index
    %c0_152 = arith.constant 0 : index
    %121 = vector.load %arg13[%c2_150, %c1_151, %c0_152] : memref<10x10x64xf32, #tpu.memory_space<vmem>>, vector<8x8x64xf32>
    %122 = arith.truncf %121 : vector<8x8x64xf32> to vector<8x8x64xbf16>
    %c0_153 = arith.constant 0 : index
    %c0_154 = arith.constant 0 : index
    %c448 = arith.constant 448 : index
    %123 = vector.load %arg14[%c0_153, %c0_154, %c448] : memref<8x8x576xbf16, #tpu.memory_space<vmem>>, vector<8x8x64xbf16>
    tpu.vector_store %arg14[%c0_153, %c0_154, %c448], %122 {strides = array<i32>} : memref<8x8x576xbf16, #tpu.memory_space<vmem>>, vector<8x8x64xbf16>,
    %c2_155 = arith.constant 2 : index
    %c2_156 = arith.constant 2 : index
    %c0_157 = arith.constant 0 : index
    %124 = vector.load %arg13[%c2_155, %c2_156, %c0_157] : memref<10x10x64xf32, #tpu.memory_space<vmem>>, vector<8x8x64xf32>
    %125 = arith.truncf %124 : vector<8x8x64xf32> to vector<8x8x64xbf16>
    %c0_158 = arith.constant 0 : index
    %c0_159 = arith.constant 0 : index
    %c512 = arith.constant 512 : index
    %126 = vector.load %arg14[%c0_158, %c0_159, %c512] : memref<8x8x576xbf16, #tpu.memory_space<vmem>>, vector<8x8x64xbf16>
    tpu.vector_store %arg14[%c0_158, %c0_159, %c512], %125 {strides = array<i32>} : memref<8x8x576xbf16, #tpu.memory_space<vmem>>, vector<8x8x64xbf16>,
    %c0_160 = arith.constant 0 : index
    %c0_161 = arith.constant 0 : index
    %c0_162 = arith.constant 0 : index
    %127 = vector.load %arg14[%c0_160, %c0_161, %c0_162] : memref<8x8x576xbf16, #tpu.memory_space<vmem>>, vector<8x8x576xbf16>
    %128 = vector.shape_cast %127 : vector<8x8x576xbf16> to vector<64x576xbf16>
    %c0_163 = arith.constant 0 : index
    %c0_164 = arith.constant 0 : index
    %129 = vector.load %arg6[%c0_163, %c0_164] : memref<576x64xbf16, #tpu.memory_space<vmem>>, vector<576x64xbf16>
    %cst_165 = arith.constant dense<0.000000e+00> : vector<64x64xf32>
    %130 = tpu.matmul %128, %129, %cst_165 {dimension_numbers = #tpu.dot_dimension_numbers<[1], [0], [0], [1], [0, 0, 1, 1], [], []>} : vector<64x576xbf16>, vector<576x64xbf16>, vector<64x64xf32> -> vector<64x64xf32>
    %cst_166 = arith.constant dense<0.000000e+00> : vector<64xf32>
    %131 = vector.multi_reduction <add>, %130, %cst_166 [0] : vector<64x64xf32> to vector<64xf32>
    %132 = vector.shape_cast %131 : vector<64xf32> to vector<1x64xf32>
    %cst_167 = arith.constant 6.400000e+01 : f32
    %133 = vector.broadcast %cst_167 : f32 to vector<1x64xf32>
    %134 = arith.divf %132, %133 : vector<1x64xf32>
    %c0_168 = arith.constant 0 : index
    %c0_169 = arith.constant 0 : index
    %135 = vector.load %arg7[%c0_168, %c0_169] : memref<64x4xf32, #tpu.memory_space<vmem>>, vector<64x4xf32>
    %cst_170 = arith.constant dense<0.000000e+00> : vector<1x4xf32>
    %136 = tpu.matmul %134, %135, %cst_170 {dimension_numbers = #tpu.dot_dimension_numbers<[1], [0], [0], [1], [0, 0, 1, 1], [], []>} : vector<1x64xf32>, vector<64x4xf32>, vector<1x4xf32> -> vector<1x4xf32>
    %cst_171 = arith.constant 0.000000e+00 : f32
    %137 = vector.broadcast %cst_171 : f32 to vector<1x4xf32>
    %138 = arith.maximumf %136, %137 : vector<1x4xf32>
    %c0_172 = arith.constant 0 : index
    %c0_173 = arith.constant 0 : index
    %139 = vector.load %arg8[%c0_172, %c0_173] : memref<4x64xf32, #tpu.memory_space<vmem>>, vector<4x64xf32>
    %cst_174 = arith.constant dense<0.000000e+00> : vector<1x64xf32>
    %140 = tpu.matmul %138, %139, %cst_174 {dimension_numbers = #tpu.dot_dimension_numbers<[1], [0], [0], [1], [0, 0, 1, 1], [], []>} : vector<1x4xf32>, vector<4x64xf32>, vector<1x64xf32> -> vector<1x64xf32>
    %141 = arith.negf %140 : vector<1x64xf32>
    %142 = math.exp %141 : vector<1x64xf32>
    %cst_175 = arith.constant 1.000000e+00 : f32
    %143 = vector.broadcast %cst_175 : f32 to vector<1x64xf32>
    %144 = arith.addf %143, %142 : vector<1x64xf32>
    %145 = arith.divf %143, %144 : vector<1x64xf32>
    %146 = vector.broadcast %145 : vector<1x64xf32> to vector<64x64xf32>
    %147 = arith.mulf %130, %146 : vector<64x64xf32>
    %148 = arith.addf %147, %91 : vector<64x64xf32>
    %c0_176 = arith.constant 0 : index
    %c0_177 = arith.constant 0 : index
    %149 = vector.load %arg10[%c0_176, %c0_177] : memref<64x64xf32, #tpu.memory_space<vmem>>, vector<64x64xf32>
    tpu.vector_store %arg10[%c0_176, %c0_177], %148 {strides = array<i32>} : memref<64x64xf32, #tpu.memory_space<vmem>>, vector<64x64xf32>,
    return
  }
  func.func @transform_0(%arg0: i32) -> (i32, i32, i32, i32, i32) {
    %c0_i32 = arith.constant 0 : i32
    %c0_i32_0 = arith.constant 0 : i32
    %c0_i32_1 = arith.constant 0 : i32
    %c0_i32_2 = arith.constant 0 : i32
    %c0_i32_3 = arith.constant 0 : i32
    return %arg0, %c0_i32, %c0_i32_0, %c0_i32_1, %c0_i32_2 : i32, i32, i32, i32, i32
  }
  func.func @transform_1(%arg0: i32) -> (i32, i32) {
    %c0_i32 = arith.constant 0 : i32
    %c0_i32_0 = arith.constant 0 : i32
    %c0_i32_1 = arith.constant 0 : i32
    return %c0_i32, %c0_i32_0 : i32, i32
  }
  func.func @transform_2(%arg0: i32) -> (i32, i32) {
    %c0_i32 = arith.constant 0 : i32
    %c0_i32_0 = arith.constant 0 : i32
    %c0_i32_1 = arith.constant 0 : i32
    return %c0_i32, %c0_i32_0 : i32, i32
  }
  func.func @transform_3(%arg0: i32) -> (i32, i32) {
    %c0_i32 = arith.constant 0 : i32
    %c0_i32_0 = arith.constant 0 : i32
    %c0_i32_1 = arith.constant 0 : i32
    return %c0_i32, %c0_i32_0 : i32, i32
  }
  func.func @transform_4(%arg0: i32) -> (i32, i32) {
    %c0_i32 = arith.constant 0 : i32
    %c0_i32_0 = arith.constant 0 : i32
    %c0_i32_1 = arith.constant 0 : i32
    return %c0_i32, %c0_i32_0 : i32, i32
  }
  func.func @transform_5(%arg0: i32) -> (i32, i32) {
    %c0_i32 = arith.constant 0 : i32
    %c0_i32_0 = arith.constant 0 : i32
    %c0_i32_1 = arith.constant 0 : i32
    return %c0_i32, %c0_i32_0 : i32, i32
  }
  func.func @transform_6(%arg0: i32) -> (i32, i32) {
    %c0_i32 = arith.constant 0 : i32
    %c0_i32_0 = arith.constant 0 : i32
    %c0_i32_1 = arith.constant 0 : i32
    return %c0_i32, %c0_i32_0 : i32, i32
  }
  func.func @transform_7(%arg0: i32) -> (i32, i32) {
    %c0_i32 = arith.constant 0 : i32
    %c0_i32_0 = arith.constant 0 : i32
    %c0_i32_1 = arith.constant 0 : i32
    return %c0_i32, %c0_i32_0 : i32, i32
  }
  func.func @transform_8(%arg0: i32) -> (i32, i32) {
    %c0_i32 = arith.constant 0 : i32
    %c0_i32_0 = arith.constant 0 : i32
    %c0_i32_1 = arith.constant 0 : i32
    return %c0_i32, %c0_i32_0 : i32, i32
  }
  func.func @transform_9(%arg0: i32) -> (i32, i32) {
    %c0_i32 = arith.constant 0 : i32
    %c0_i32_0 = arith.constant 0 : i32
    return %arg0, %c0_i32 : i32, i32
  }
}

</mosaic_0001>

<llo_original>
// kernel: tpu_custom_call.1
$region0: #{tpu_custom_call.1}
  #allocation0 [shape = 'u32[]', space=smem, size = 0x4, offset = 0x4, fixed_abs, tag = 'smem constant byte address 0x4 - core index']
  #allocation1 [shape = 'u32[144,128]{1,0:T(1,128)}', space=vmem, size = 0x12000, scoped, tag = 'internal scratch']
  #allocation2 [shape = 'f32[4,9,9,32]{3,2,1,0:T(8,128)}', space=vmem, size = 0x48000, scoped, tag = 'scratch operand']
  #allocation3 [shape = 'bf16[8,8,288]{2,1,0:T(8,128)(2,1)}', space=vmem, size = 0xc000, scoped, tag = 'scratch operand']
  #allocation4 [shape = 'f32[10,10,64]{2,1,0:T(8,128)}', space=vmem, size = 0x14000, scoped, tag = 'scratch operand']
  #allocation5 [shape = 'bf16[8,8,576]{2,1,0:T(8,128)(2,1)}', space=vmem, size = 0x14000, scoped, tag = 'scratch operand']
  %s0 = inlined_call_operand.vmem [shape: f32[2,4,8,8,32], index: 0, kind: input, shape index: {}]
  %s1 = inlined_call_operand.vmem [shape: f32[1,32], index: 1, kind: input, shape index: {}]
  %s2 = inlined_call_operand.vmem [shape: f32[1,32], index: 2, kind: input, shape index: {}]
  %s3 = inlined_call_operand.vmem [shape: bf16[288,64], index: 3, kind: input, shape index: {}]
  %s4 = inlined_call_operand.vmem [shape: f32[1,64], index: 4, kind: input, shape index: {}]
  %s5 = inlined_call_operand.vmem [shape: bf16[576,64], index: 5, kind: input, shape index: {}]
  %s6 = inlined_call_operand.vmem [shape: f32[64,4], index: 6, kind: input, shape index: {}]
  %s7 = inlined_call_operand.vmem [shape: f32[4,64], index: 7, kind: input, shape index: {}]
  %s8 = inlined_call_operand.vmem [shape: bf16[32,64], index: 8, kind: input, shape index: {}]
  %s9 = inlined_call_operand.vmem [shape: f32[128,64], index: 9, kind: output, shape index: {}]
  %s10 = sld [smem:[#allocation0]]
  $region69: #{tpu_custom_call.1} parent=0
    _
  %s12 = ssub.s32 1, %s10
  %s13 = scalar_select 0, %s12, %s10
  loop: start=0, step=1, limit=4
  $region2: #{tpu_custom_call.1} parent=0 // loop_pre_header
    _
  $region3: #{tpu_custom_call.1} parent=0 // loop_header
    %s15 = sphi 0, %s19
    %p16 = scmp.ge.s32.totalorder %s15, 4
    %s25 = sphi 0, %s27
    %s28 = sphi 0, %s25
    %s29 = sphi 0, %s28
    %s45 = sphi 0, %s29
    %s49 = sphi 0, %s49
    %s51 = sphi 0, %s49
    %s52 = sphi 0, %s51
    %s66 = sphi 0, %s52
    %s70 = sphi 0, %s70
    %s72 = sphi 0, %s70
    %s73 = sphi 0, %s72
    %s87 = sphi 0, %s73
    %s91 = sphi 0, %s91
    %s93 = sphi 0, %s91
    %s94 = sphi 0, %s93
    %s108 = sphi 0, %s94
    %s112 = sphi 0, %s112
    %s114 = sphi 0, %s112
    %s115 = sphi 0, %s114
    %s129 = sphi 0, %s115
    %s133 = sphi 0, %s133
    %s135 = sphi 0, %s133
    %s136 = sphi 0, %s135
    %s150 = sphi 0, %s136
    %s154 = sphi 0, %s154
    %s156 = sphi 0, %s154
    %s157 = sphi 0, %s156
    %s171 = sphi 0, %s157
    %s175 = sphi 0, %s175
    %s177 = sphi 0, %s175
    %s178 = sphi 0, %s177
    %s192 = sphi 0, %s178
    %s196 = sphi 0, %s196
    %s198 = sphi 0, %s196
    %s199 = sphi 0, %s198
    %s213 = sphi 0, %s199
    %s219 = sphi 0, %s221
    %s222 = sphi 0, %s219
    %s223 = sphi 0, %s222
    %s239 = sphi 0, %s223
  $region4: #{tpu_custom_call.1} parent=0 // loop_header_branch
    %18 = sbr.rel (%p16) target = $region8
  $region5: #{tpu_custom_call.1} parent=0 // loop_body
    %s20 = ssub.s32 %s15, 1
    %s21 = ssub.s32 %s15, 2
    %s22 = sadd.s32 %s15, 1
    %s23 = ssub.s32 %s15, %s22
    %p24 = scmp.eq.s32.totalorder %s23, 0
    %s26 = sadd.s32 %s25, 1
    %s27 = scalar_select %p24, %s25, %s26
    %p30 = pneg %p24
    %p31 = scmp.eq.s32.totalorder %s15, 1
    %p32 = por %p30, %p31
    %p33 = scmp.ne.s32.totalorder %s25, %s28
    %p34 = scmp.eq.s32.totalorder %s15, 0
    %p35 = por %p33, %p34
    %p36 = scmp.ne.s32.totalorder %s25, %s28
    %p37 = scmp.eq.s32.totalorder %s20, 1
    %p38 = por %p36, %p37
    %p39 = scmp.ne.s32.totalorder %s28, %s29
    %p40 = scmp.eq.s32.totalorder %s20, 0
    %p41 = por %p39, %p40
    %p42 = scmp.ne.s32.totalorder %s28, %s29
    %p43 = scmp.eq.s32.totalorder %s21, 1
    %p44 = por %p42, %p43
    %p46 = scmp.ne.s32.totalorder %s29, %s45
    %p47 = scmp.eq.s32.totalorder %s21, 0
    %p48 = por %p46, %p47
    %s50 = sadd.s32 %s49, 1
    %p53 = scmp.eq.s32.totalorder %s15, 1
    %p54 = scmp.ne.s32.totalorder %s49, %s51
    %p55 = scmp.eq.s32.totalorder %s15, 0
    %p56 = por %p54, %p55
    %p57 = scmp.ne.s32.totalorder %s49, %s51
    %p58 = scmp.eq.s32.totalorder %s20, 1
    %p59 = por %p57, %p58
    %p60 = scmp.ne.s32.totalorder %s51, %s52
    %p61 = scmp.eq.s32.totalorder %s20, 0
    %p62 = por %p60, %p61
    %p63 = scmp.ne.s32.totalorder %s51, %s52
    %p64 = scmp.eq.s32.totalorder %s21, 1
    %p65 = por %p63, %p64
    %p67 = scmp.ne.s32.totalorder %s52, %s66
    %p68 = scmp.eq.s32.totalorder %s21, 0
    %p69 = por %p67, %p68
    %s71 = sadd.s32 %s70, 1
    %p74 = scmp.eq.s32.totalorder %s15, 1
    %p75 = scmp.ne.s32.totalorder %s70, %s72
    %p76 = scmp.eq.s32.totalorder %s15, 0
    %p77 = por %p75, %p76
    %p78 = scmp.ne.s32.totalorder %s70, %s72
    %p79 = scmp.eq.s32.totalorder %s20, 1
    %p80 = por %p78, %p79
    %p81 = scmp.ne.s32.totalorder %s72, %s73
    %p82 = scmp.eq.s32.totalorder %s20, 0
    %p83 = por %p81, %p82
    %p84 = scmp.ne.s32.totalorder %s72, %s73
    %p85 = scmp.eq.s32.totalorder %s21, 1
    %p86 = por %p84, %p85
    %p88 = scmp.ne.s32.totalorder %s73, %s87
    %p89 = scmp.eq.s32.totalorder %s21, 0
    %p90 = por %p88, %p89
    %s92 = sadd.s32 %s91, 1
    %p95 = scmp.eq.s32.totalorder %s15, 1
    %p96 = scmp.ne.s32.totalorder %s91, %s93
    %p97 = scmp.eq.s32.totalorder %s15, 0
    %p98 = por %p96, %p97
    %p99 = scmp.ne.s32.totalorder %s91, %s93
    %p100 = scmp.eq.s32.totalorder %s20, 1
    %p101 = por %p99, %p100
    %p102 = scmp.ne.s32.totalorder %s93, %s94
    %p103 = scmp.eq.s32.totalorder %s20, 0
    %p104 = por %p102, %p103
    %p105 = scmp.ne.s32.totalorder %s93, %s94
    %p106 = scmp.eq.s32.totalorder %s21, 1
    %p107 = por %p105, %p106
    %p109 = scmp.ne.s32.totalorder %s94, %s108
    %p110 = scmp.eq.s32.totalorder %s21, 0
    %p111 = por %p109, %p110
    %s113 = sadd.s32 %s112, 1
    %p116 = scmp.eq.s32.totalorder %s15, 1
    %p117 = scmp.ne.s32.totalorder %s112, %s114
    %p118 = scmp.eq.s32.totalorder %s15, 0
    %p119 = por %p117, %p118
    %p120 = scmp.ne.s32.totalorder %s112, %s114
    %p121 = scmp.eq.s32.totalorder %s20, 1
    %p122 = por %p120, %p121
    %p123 = scmp.ne.s32.totalorder %s114, %s115
    %p124 = scmp.eq.s32.totalorder %s20, 0
    %p125 = por %p123, %p124
    %p126 = scmp.ne.s32.totalorder %s114, %s115
    %p127 = scmp.eq.s32.totalorder %s21, 1
    %p128 = por %p126, %p127
    %p130 = scmp.ne.s32.totalorder %s115, %s129
    %p131 = scmp.eq.s32.totalorder %s21, 0
    %p132 = por %p130, %p131
    %s134 = sadd.s32 %s133, 1
    %p137 = scmp.eq.s32.totalorder %s15, 1
    %p138 = scmp.ne.s32.totalorder %s133, %s135
    %p139 = scmp.eq.s32.totalorder %s15, 0
    %p140 = por %p138, %p139
    %p141 = scmp.ne.s32.totalorder %s133, %s135
    %p142 = scmp.eq.s32.totalorder %s20, 1
    %p143 = por %p141, %p142
    %p144 = scmp.ne.s32.totalorder %s135, %s136
    %p145 = scmp.eq.s32.totalorder %s20, 0
    %p146 = por %p144, %p145
    %p147 = scmp.ne.s32.totalorder %s135, %s136
    %p148 = scmp.eq.s32.totalorder %s21, 1
    %p149 = por %p147, %p148
    %p151 = scmp.ne.s32.totalorder %s136, %s150
    %p152 = scmp.eq.s32.totalorder %s21, 0
    %p153 = por %p151, %p152
    %s155 = sadd.s32 %s154, 1
    %p158 = scmp.eq.s32.totalorder %s15, 1
    %p159 = scmp.ne.s32.totalorder %s154, %s156
    %p160 = scmp.eq.s32.totalorder %s15, 0
    %p161 = por %p159, %p160
    %p162 = scmp.ne.s32.totalorder %s154, %s156
    %p163 = scmp.eq.s32.totalorder %s20, 1
    %p164 = por %p162, %p163
    %p165 = scmp.ne.s32.totalorder %s156, %s157
    %p166 = scmp.eq.s32.totalorder %s20, 0
    %p167 = por %p165, %p166
    %p168 = scmp.ne.s32.totalorder %s156, %s157
    %p169 = scmp.eq.s32.totalorder %s21, 1
    %p170 = por %p168, %p169
    %p172 = scmp.ne.s32.totalorder %s157, %s171
    %p173 = scmp.eq.s32.totalorder %s21, 0
    %p174 = por %p172, %p173
    %s176 = sadd.s32 %s175, 1
    %p179 = scmp.eq.s32.totalorder %s15, 1
    %p180 = scmp.ne.s32.totalorder %s175, %s177
    %p181 = scmp.eq.s32.totalorder %s15, 0
    %p182 = por %p180, %p181
    %p183 = scmp.ne.s32.totalorder %s175, %s177
    %p184 = scmp.eq.s32.totalorder %s20, 1
    %p185 = por %p183, %p184
    %p186 = scmp.ne.s32.totalorder %s177, %s178
    %p187 = scmp.eq.s32.totalorder %s20, 0
    %p188 = por %p186, %p187
    %p189 = scmp.ne.s32.totalorder %s177, %s178
    %p190 = scmp.eq.s32.totalorder %s21, 1
    %p191 = por %p189, %p190
    %p193 = scmp.ne.s32.totalorder %s178, %s192
    %p194 = scmp.eq.s32.totalorder %s21, 0
    %p195 = por %p193, %p194
    %s197 = sadd.s32 %s196, 1
    %p200 = scmp.eq.s32.totalorder %s15, 1
    %p201 = scmp.ne.s32.totalorder %s196, %s198
    %p202 = scmp.eq.s32.totalorder %s15, 0
    %p203 = por %p201, %p202
    %p204 = scmp.ne.s32.totalorder %s196, %s198
    %p205 = scmp.eq.s32.totalorder %s20, 1
    %p206 = por %p204, %p205
    %p207 = scmp.ne.s32.totalorder %s198, %s199
    %p208 = scmp.eq.s32.totalorder %s20, 0
    %p209 = por %p207, %p208
    %p210 = scmp.ne.s32.totalorder %s198, %s199
    %p211 = scmp.eq.s32.totalorder %s21, 1
    %p212 = por %p210, %p211
    %p214 = scmp.ne.s32.totalorder %s199, %s213
    %p215 = scmp.eq.s32.totalorder %s21, 0
    %p216 = por %p214, %p215
    %s217 = ssub.s32 %s15, %s22
    %p218 = scmp.eq.s32.totalorder %s217, 0
    %s220 = sadd.s32 %s219, 1
    %s221 = scalar_select %p218, %s219, %s220
    %p224 = pneg %p218
    %p225 = scmp.eq.s32.totalorder %s15, 1
    %p226 = por %p224, %p225
    %p227 = scmp.ne.s32.totalorder %s219, %s222
    %p228 = scmp.eq.s32.totalorder %s15, 0
    %p229 = por %p227, %p228
    %p230 = scmp.ne.s32.totalorder %s219, %s222
    %p231 = scmp.eq.s32.totalorder %s20, 1
    %p232 = por %p230, %p231
    %p233 = scmp.ne.s32.totalorder %s222, %s223
    %p234 = scmp.eq.s32.totalorder %s20, 0
    %p235 = por %p233, %p234
    %p236 = scmp.ne.s32.totalorder %s222, %s223
    %p237 = scmp.eq.s32.totalorder %s21, 1
    %p238 = por %p236, %p237
    %p240 = scmp.ne.s32.totalorder %s223, %s239
    %p241 = scmp.eq.s32.totalorder %s21, 0
    %p242 = por %p240, %p241
    %p243 = scmp.le.s32.totalorder 1, %s15
    %p244 = scmp.lt.s32.totalorder %s15, 3
    %p245 = pnand %p243, %p244
    %p246 = pneg %p245
    // Predicated region
    $region9: #{tpu_custom_call.1} parent=5 // pred_check
      _
    $region10: #{tpu_custom_call.1} parent=5 // pred_check_branch
      %248 = sbr.rel (%p245) target = $region12
    $region11: #{tpu_custom_call.1} parent=5 // pred_region
      %s249 = ssub.s32 %s15, 1
      // Predicated region
      $region13: #{tpu_custom_call.1} parent=11 // pred_check
        %p250 = pneg %p62
      $region14: #{tpu_custom_call.1} parent=11 // pred_check_branch
        %252 = sbr.rel (%p250) target = $region16
      $region15: #{tpu_custom_call.1} parent=11 // pred_region
        _
      $region16: #{tpu_custom_call.1} parent=11 // pred_fallthru
        _
      // Predicated region
      $region17: #{tpu_custom_call.1} parent=11 // pred_check
        %p253 = pneg %p83
      $region18: #{tpu_custom_call.1} parent=11 // pred_check_branch
        %255 = sbr.rel (%p253) target = $region20
      $region19: #{tpu_custom_call.1} parent=11 // pred_region
        _
      $region20: #{tpu_custom_call.1} parent=11 // pred_fallthru
        _
      // Predicated region
      $region21: #{tpu_custom_call.1} parent=11 // pred_check
        %p256 = pneg %p104
      $region22: #{tpu_custom_call.1} parent=11 // pred_check_branch
        %258 = sbr.rel (%p256) target = $region24
      $region23: #{tpu_custom_call.1} parent=11 // pred_region
        _
      $region24: #{tpu_custom_call.1} parent=11 // pred_fallthru
        _
      // Predicated region
      $region25: #{tpu_custom_call.1} parent=11 // pred_check
        %p259 = pneg %p125
      $region26: #{tpu_custom_call.1} parent=11 // pred_check_branch
        %261 = sbr.rel (%p259) target = $region28
      $region27: #{tpu_custom_call.1} parent=11 // pred_region
        _
      $region28: #{tpu_custom_call.1} parent=11 // pred_fallthru
        _
      // Predicated region
      $region29: #{tpu_custom_call.1} parent=11 // pred_check
        %p262 = pneg %p146
      $region30: #{tpu_custom_call.1} parent=11 // pred_check_branch
        %264 = sbr.rel (%p262) target = $region32
      $region31: #{tpu_custom_call.1} parent=11 // pred_region
        _
      $region32: #{tpu_custom_call.1} parent=11 // pred_fallthru
        _
      // Predicated region
      $region33: #{tpu_custom_call.1} parent=11 // pred_check
        %p265 = pneg %p167
      $region34: #{tpu_custom_call.1} parent=11 // pred_check_branch
        %267 = sbr.rel (%p265) target = $region36
      $region35: #{tpu_custom_call.1} parent=11 // pred_region
        _
      $region36: #{tpu_custom_call.1} parent=11 // pred_fallthru
        _
      // Predicated region
      $region37: #{tpu_custom_call.1} parent=11 // pred_check
        %p268 = pneg %p188
      $region38: #{tpu_custom_call.1} parent=11 // pred_check_branch
        %270 = sbr.rel (%p268) target = $region40
      $region39: #{tpu_custom_call.1} parent=11 // pred_region
        _
      $region40: #{tpu_custom_call.1} parent=11 // pred_fallthru
        _
      // Predicated region
      $region41: #{tpu_custom_call.1} parent=11 // pred_check
        %p271 = pneg %p209
      $region42: #{tpu_custom_call.1} parent=11 // pred_check_branch
        %273 = sbr.rel (%p271) target = $region44
      $region43: #{tpu_custom_call.1} parent=11 // pred_region
        _
      $region44: #{tpu_custom_call.1} parent=11 // pred_fallthru
        _
    $region12: #{tpu_custom_call.1} parent=5 // pred_fallthru
      _
    %p274 = scmp.lt.s32.totalorder %s15, 2
    // Predicated region
    $region45: #{tpu_custom_call.1} parent=5 // pred_check
      %p275 = pneg %p274
    $region46: #{tpu_custom_call.1} parent=5 // pred_check_branch
      %277 = sbr.rel (%p275) target = $region48
    $region47: #{tpu_custom_call.1} parent=5 // pred_region
      // Predicated region
      $region49: #{tpu_custom_call.1} parent=47 // pred_check
        %p278 = pneg %p35
      $region50: #{tpu_custom_call.1} parent=47 // pred_check_branch
        %280 = sbr.rel (%p278) target = $region52
      $region51: #{tpu_custom_call.1} parent=47 // pred_region
        %p281 = scmp.lt.s32.totalorder %s15, 1
        %s282 = scalar_select %p281, %s15, 1
        %s283 = smul.addr %s282, 32
        %s284 = smul.addr %s283, 8
        %s285 = scalar_lea.vmem %s0, %s284
      $region52: #{tpu_custom_call.1} parent=47 // pred_fallthru
        _
    $region48: #{tpu_custom_call.1} parent=5 // pred_fallthru
      _
    %p286 = scmp.le.s32.totalorder 1, %s15
    %p287 = scmp.lt.s32.totalorder %s15, 3
    %p288 = pnand %p286, %p287
    %p289 = pneg %p288
    // Predicated region
    $region53: #{tpu_custom_call.1} parent=5 // pred_check
      _
    $region54: #{tpu_custom_call.1} parent=5 // pred_check_branch
      %291 = sbr.rel (%p288) target = $region56
    $region55: #{tpu_custom_call.1} parent=5 // pred_region
      %s292 = ssub.s32 %s15, 1
      %p293 = scmp.lt.s32.totalorder %s20, 1
      %s294 = scalar_select %p293, %s20, 1
      %s295 = smul.addr %s294, 32
      %s296 = smul.addr %s295, 8
      %s297 = scalar_lea.vmem %s0, %s296
      %p298 = pneg %p41
      %p299 = pneg %p38
      %p300 = pneg %p62
      %p301 = pneg %p59
      %p302 = pneg %p83
      %p303 = pneg %p80
      %p304 = pneg %p104
      %p305 = pneg %p101
      %p306 = pneg %p125
      %p307 = pneg %p122
      %p308 = pneg %p146
      %p309 = pneg %p143
      %p310 = pneg %p167
      %p311 = pneg %p164
      %p312 = pneg %p188
      %p313 = pneg %p185
      %p314 = pneg %p209
      %p315 = pneg %p206
      %p316 = pneg %p235
      %p317 = pneg %p232
      %s318 = smul.u32 8, %s20
      %p319 = scmp.lt.s32.totalorder %s318, 15
      %s320 = scalar_select %p319, %s318, 15
      %s321 = smul.addr %s320, 8
      %s322 = scalar_lea.vmem %s9, %s321
      %p323 = scmp.lt.s32.totalorder %s20, 1
      %s324 = scalar_select %p323, %s20, 1
      %s325 = smul.addr %s324, 32
      %s326 = smul.addr %s325, 8
      %s327 = scalar_lea.vmem %s0, %s326
      %s328 = smul.u32 8, %s20
      %p329 = scmp.lt.s32.totalorder %s328, 15
      %s330 = scalar_select %p329, %s328, 15
      %s331 = smul.addr %s330, 8
      %s332 = scalar_lea.vmem %s9, %s331
      %s333 = smul.u32 8, %s20
      %v335 = vld [vmem:[%s327] sm:$0xff]
      %v336 = vld [vmem:[%s327 + $0x8] sm:$0xff]
      %v337 = vld [vmem:[%s327 + $0x10] sm:$0xff]
      %v338 = vld [vmem:[%s327 + $0x18] sm:$0xff]
      %v339 = vld [vmem:[%s327 + $0x20] sm:$0xff]
      %v340 = vld [vmem:[%s327 + $0x28] sm:$0xff]
      %v341 = vld [vmem:[%s327 + $0x30] sm:$0xff]
      %v342 = vld [vmem:[%s327 + $0x38] sm:$0xff]
      %v343 = vld [vmem:[%s327 + $0x40] sm:$0xff]
      %v344 = vld [vmem:[%s327 + $0x48] sm:$0xff]
      %v345 = vld [vmem:[%s327 + $0x50] sm:$0xff]
      %v346 = vld [vmem:[%s327 + $0x58] sm:$0xff]
      %v347 = vld [vmem:[%s327 + $0x60] sm:$0xff]
      %v348 = vld [vmem:[%s327 + $0x68] sm:$0xff]
      %v349 = vld [vmem:[%s327 + $0x70] sm:$0xff]
      %v350 = vld [vmem:[%s327 + $0x78] sm:$0xff]
      %v351 = vld [vmem:[%s327 + $0x80] sm:$0xff]
      %v352 = vld [vmem:[%s327 + $0x88] sm:$0xff]
      %v353 = vld [vmem:[%s327 + $0x90] sm:$0xff]
      %v354 = vld [vmem:[%s327 + $0x98] sm:$0xff]
      %v355 = vld [vmem:[%s327 + $0xa0] sm:$0xff]
      %v356 = vld [vmem:[%s327 + $0xa8] sm:$0xff]
      %v357 = vld [vmem:[%s327 + $0xb0] sm:$0xff]
      %v358 = vld [vmem:[%s327 + $0xb8] sm:$0xff]
      %v359 = vld [vmem:[%s327 + $0xc0] sm:$0xff]
      %v360 = vld [vmem:[%s327 + $0xc8] sm:$0xff]
      %v361 = vld [vmem:[%s327 + $0xd0] sm:$0xff]
      %v362 = vld [vmem:[%s327 + $0xd8] sm:$0xff]
      %v363 = vld [vmem:[%s327 + $0xe0] sm:$0xff]
      %v364 = vld [vmem:[%s327 + $0xe8] sm:$0xff]
      %v365 = vld [vmem:[%s327 + $0xf0] sm:$0xff]
      %v366 = vld [vmem:[%s327 + $0xf8] sm:$0xff]
      %v367 = vld [vmem:[%s1] sm:$0x1]
      %v369 = vlaneseq
      %v370 = vshrl.u32 %v369, 7
      %v371 = vsub.s32 0, %v370
      %v372 = vrot.slane %v367, %v371
      %v374 = vmul.f32 %v335, %v372
      %v375 = vmul.f32 %v336, %v372
      %v376 = vmul.f32 %v337, %v372
      %v377 = vmul.f32 %v338, %v372
      %v378 = vmul.f32 %v339, %v372
      %v379 = vmul.f32 %v340, %v372
      %v380 = vmul.f32 %v341, %v372
      %v381 = vmul.f32 %v342, %v372
      %v382 = vmul.f32 %v343, %v372
      %v383 = vmul.f32 %v344, %v372
      %v384 = vmul.f32 %v345, %v372
      %v385 = vmul.f32 %v346, %v372
      %v386 = vmul.f32 %v347, %v372
      %v387 = vmul.f32 %v348, %v372
      %v388 = vmul.f32 %v349, %v372
      %v389 = vmul.f32 %v350, %v372
      %v390 = vmul.f32 %v351, %v372
      %v391 = vmul.f32 %v352, %v372
      %v392 = vmul.f32 %v353, %v372
      %v393 = vmul.f32 %v354, %v372
      %v394 = vmul.f32 %v355, %v372
      %v395 = vmul.f32 %v356, %v372
      %v396 = vmul.f32 %v357, %v372
      %v397 = vmul.f32 %v358, %v372
      %v398 = vmul.f32 %v359, %v372
      %v399 = vmul.f32 %v360, %v372
      %v400 = vmul.f32 %v361, %v372
      %v401 = vmul.f32 %v362, %v372
      %v402 = vmul.f32 %v363, %v372
      %v403 = vmul.f32 %v364, %v372
      %v404 = vmul.f32 %v365, %v372
      %v405 = vmul.f32 %v366, %v372
      %v406 = vld [vmem:[%s2] sm:$0x1]
      %v408 = vlaneseq
      %v409 = vshrl.u32 %v408, 7
      %v410 = vsub.s32 0, %v409
      %v411 = vrot.slane %v406, %v410
      %v413 = vadd.f32 %v374, %v411
      %v414 = vadd.f32 %v375, %v411
      %v415 = vadd.f32 %v376, %v411
      %v416 = vadd.f32 %v377, %v411
      %v417 = vadd.f32 %v378, %v411
      %v418 = vadd.f32 %v379, %v411
      %v419 = vadd.f32 %v380, %v411
      %v420 = vadd.f32 %v381, %v411
      %v421 = vadd.f32 %v382, %v411
      %v422 = vadd.f32 %v383, %v411
      %v423 = vadd.f32 %v384, %v411
      %v424 = vadd.f32 %v385, %v411
      %v425 = vadd.f32 %v386, %v411
      %v426 = vadd.f32 %v387, %v411
      %v427 = vadd.f32 %v388, %v411
      %v428 = vadd.f32 %v389, %v411
      %v429 = vadd.f32 %v390, %v411
      %v430 = vadd.f32 %v391, %v411
      %v431 = vadd.f32 %v392, %v411
      %v432 = vadd.f32 %v393, %v411
      %v433 = vadd.f32 %v394, %v411
      %v434 = vadd.f32 %v395, %v411
      %v435 = vadd.f32 %v396, %v411
      %v436 = vadd.f32 %v397, %v411
      %v437 = vadd.f32 %v398, %v411
      %v438 = vadd.f32 %v399, %v411
      %v439 = vadd.f32 %v400, %v411
      %v440 = vadd.f32 %v401, %v411
      %v441 = vadd.f32 %v402, %v411
      %v442 = vadd.f32 %v403, %v411
      %v443 = vadd.f32 %v404, %v411
      %v444 = vadd.f32 %v405, %v411
      %vm445 = vcmask 261120
      %446 = vst.msk [vmem:[#allocation2] sm:$0xff] %vm445, -1e+30
      %vm447 = vcmask 253952
      %448 = vst.msk [vmem:[#allocation2 + $0x8] sm:$0x1] %vm447, -1e+30
      %449 = vst.msk [vmem:[#allocation2 + $0x90] sm:$0xff] %vm445, -1e+30
      %450 = vst.msk [vmem:[#allocation2 + $0x98] sm:$0x1] %vm447, -1e+30
      %451 = vst.msk [vmem:[#allocation2 + $0x120] sm:$0xff] %vm445, -1e+30
      %452 = vst.msk [vmem:[#allocation2 + $0x128] sm:$0x1] %vm447, -1e+30
      %453 = vst.msk [vmem:[#allocation2 + $0x1b0] sm:$0xff] %vm445, -1e+30
      %454 = vst.msk [vmem:[#allocation2 + $0x1b8] sm:$0x1] %vm447, -1e+30
      %455 = vst.msk [vmem:[#allocation2] sm:$0x1] %vm447, -1e+30
      %456 = vst.msk [vmem:[#allocation2 + $0x10] sm:$0x1] %vm447, -1e+30
      %457 = vst.msk [vmem:[#allocation2 + $0x20] sm:$0x1] %vm447, -1e+30
      %458 = vst.msk [vmem:[#allocation2 + $0x30] sm:$0x1] %vm447, -1e+30
      %459 = vst.msk [vmem:[#allocation2 + $0x40] sm:$0x1] %vm447, -1e+30
      %460 = vst.msk [vmem:[#allocation2 + $0x50] sm:$0x1] %vm447, -1e+30
      %461 = vst.msk [vmem:[#allocation2 + $0x60] sm:$0x1] %vm447, -1e+30
      %462 = vst.msk [vmem:[#allocation2 + $0x70] sm:$0x1] %vm447, -1e+30
      %463 = vst.msk [vmem:[#allocation2 + $0x80] sm:$0x1] %vm447, -1e+30
      %464 = vst.msk [vmem:[#allocation2 + $0x90] sm:$0x1] %vm447, -1e+30
      %465 = vst.msk [vmem:[#allocation2 + $0xa0] sm:$0x1] %vm447, -1e+30
      %466 = vst.msk [vmem:[#allocation2 + $0xb0] sm:$0x1] %vm447, -1e+30
      %467 = vst.msk [vmem:[#allocation2 + $0xc0] sm:$0x1] %vm447, -1e+30
      %468 = vst.msk [vmem:[#allocation2 + $0xd0] sm:$0x1] %vm447, -1e+30
      %469 = vst.msk [vmem:[#allocation2 + $0xe0] sm:$0x1] %vm447, -1e+30
      %470 = vst.msk [vmem:[#allocation2 + $0xf0] sm:$0x1] %vm447, -1e+30
      %471 = vst.msk [vmem:[#allocation2 + $0x100] sm:$0x1] %vm447, -1e+30
      %472 = vst.msk [vmem:[#allocation2 + $0x110] sm:$0x1] %vm447, -1e+30
      %473 = vst.msk [vmem:[#allocation2 + $0x120] sm:$0x1] %vm447, -1e+30
      %474 = vst.msk [vmem:[#allocation2 + $0x130] sm:$0x1] %vm447, -1e+30
      %475 = vst.msk [vmem:[#allocation2 + $0x140] sm:$0x1] %vm447, -1e+30
      %476 = vst.msk [vmem:[#allocation2 + $0x150] sm:$0x1] %vm447, -1e+30
      %477 = vst.msk [vmem:[#allocation2 + $0x160] sm:$0x1] %vm447, -1e+30
      %478 = vst.msk [vmem:[#allocation2 + $0x170] sm:$0x1] %vm447, -1e+30
      %479 = vst.msk [vmem:[#allocation2 + $0x180] sm:$0x1] %vm447, -1e+30
      %480 = vst.msk [vmem:[#allocation2 + $0x190] sm:$0x1] %vm447, -1e+30
      %481 = vst.msk [vmem:[#allocation2 + $0x1a0] sm:$0x1] %vm447, -1e+30
      %482 = vst.msk [vmem:[#allocation2 + $0x1b0] sm:$0x1] %vm447, -1e+30
      %483 = vst.msk [vmem:[#allocation2 + $0x1c0] sm:$0x1] %vm447, -1e+30
      %484 = vst.msk [vmem:[#allocation2 + $0x1d0] sm:$0x1] %vm447, -1e+30
      %485 = vst.msk [vmem:[#allocation2 + $0x1e0] sm:$0x1] %vm447, -1e+30
      %486 = vst.msk [vmem:[#allocation2 + $0x1f0] sm:$0x1] %vm447, -1e+30
      %487 = vst.msk [vmem:[#allocation2 + $0x200] sm:$0x1] %vm447, -1e+30
      %488 = vst.msk [vmem:[#allocation2 + $0x210] sm:$0x1] %vm447, -1e+30
      %489 = vst.msk [vmem:[#allocation2 + $0x220] sm:$0x1] %vm447, -1e+30
      %490 = vst.msk [vmem:[#allocation2 + $0x230] sm:$0x1] %vm447, -1e+30
      %s491 = scalar_lea.vmem [#allocation2], 16
      %492 = vst.msk [vmem:[%s491 + $0x1] sm:$0xff] %vm445, %v413
      %493 = vst.msk [vmem:[%s491 + $0x11] sm:$0xff] %vm445, %v414
      %494 = vst.msk [vmem:[%s491 + $0x21] sm:$0xff] %vm445, %v415
      %495 = vst.msk [vmem:[%s491 + $0x31] sm:$0xff] %vm445, %v416
      %496 = vst.msk [vmem:[%s491 + $0x41] sm:$0xff] %vm445, %v417
      %497 = vst.msk [vmem:[%s491 + $0x51] sm:$0xff] %vm445, %v418
      %498 = vst.msk [vmem:[%s491 + $0x61] sm:$0xff] %vm445, %v419
      %499 = vst.msk [vmem:[%s491 + $0x71] sm:$0xff] %vm445, %v420
      %500 = vst.msk [vmem:[%s491 + $0x91] sm:$0xff] %vm445, %v421
      %501 = vst.msk [vmem:[%s491 + $0xa1] sm:$0xff] %vm445, %v422
      %502 = vst.msk [vmem:[%s491 + $0xb1] sm:$0xff] %vm445, %v423
      %503 = vst.msk [vmem:[%s491 + $0xc1] sm:$0xff] %vm445, %v424
      %504 = vst.msk [vmem:[%s491 + $0xd1] sm:$0xff] %vm445, %v425
      %505 = vst.msk [vmem:[%s491 + $0xe1] sm:$0xff] %vm445, %v426
      %506 = vst.msk [vmem:[%s491 + $0xf1] sm:$0xff] %vm445, %v427
      %507 = vst.msk [vmem:[%s491 + $0x101] sm:$0xff] %vm445, %v428
      %508 = vst.msk [vmem:[%s491 + $0x121] sm:$0xff] %vm445, %v429
      %509 = vst.msk [vmem:[%s491 + $0x131] sm:$0xff] %vm445, %v430
      %510 = vst.msk [vmem:[%s491 + $0x141] sm:$0xff] %vm445, %v431
      %511 = vst.msk [vmem:[%s491 + $0x151] sm:$0xff] %vm445, %v432
      %512 = vst.msk [vmem:[%s491 + $0x161] sm:$0xff] %vm445, %v433
      %513 = vst.msk [vmem:[%s491 + $0x171] sm:$0xff] %vm445, %v434
      %514 = vst.msk [vmem:[%s491 + $0x181] sm:$0xff] %vm445, %v435
      %515 = vst.msk [vmem:[%s491 + $0x191] sm:$0xff] %vm445, %v436
      %516 = vst.msk [vmem:[%s491 + $0x1b1] sm:$0xff] %vm445, %v437
      %517 = vst.msk [vmem:[%s491 + $0x1c1] sm:$0xff] %vm445, %v438
      %518 = vst.msk [vmem:[%s491 + $0x1d1] sm:$0xff] %vm445, %v439
      %519 = vst.msk [vmem:[%s491 + $0x1e1] sm:$0xff] %vm445, %v440
      %520 = vst.msk [vmem:[%s491 + $0x1f1] sm:$0xff] %vm445, %v441
      %521 = vst.msk [vmem:[%s491 + $0x201] sm:$0xff] %vm445, %v442
      %522 = vst.msk [vmem:[%s491 + $0x211] sm:$0xff] %vm445, %v443
      %523 = vst.msk [vmem:[%s491 + $0x221] sm:$0xff] %vm445, %v444
      %s524 = scalar_lea.vmem [#allocation2], 432
      %v525 = vld [vmem:[%s524] sm:$0xff]
      %v526 = vld [vmem:[%s524 + $0x10] sm:$0xff]
      %v527 = vld [vmem:[%s524 + $0x20] sm:$0xff]
      %v528 = vld [vmem:[%s524 + $0x30] sm:$0xff]
      %v529 = vld [vmem:[%s524 + $0x40] sm:$0xff]
      %v530 = vld [vmem:[%s524 + $0x50] sm:$0xff]
      %v531 = vld [vmem:[%s524 + $0x60] sm:$0xff]
      %v532 = vld [vmem:[%s524 + $0x70] sm:$0xff]
      %v533 = vmax.f32 %v525, 0.0
      %v534 = vmax.f32 %v526, 0.0
      %v535 = vmax.f32 %v527, 0.0
      %v536 = vmax.f32 %v528, 0.0
      %v537 = vmax.f32 %v529, 0.0
      %v538 = vmax.f32 %v530, 0.0
      %v539 = vmax.f32 %v531, 0.0
      %v540 = vmax.f32 %v532, 0.0
      %v541 = vpack.c.bf16 %v533, %v533
      %v542 = vpack.c.bf16 %v534, %v534
      %v543 = vpack.c.bf16 %v535, %v535
      %v544 = vpack.c.bf16 %v536, %v536
      %v545 = vpack.c.bf16 %v537, %v537
      %v546 = vpack.c.bf16 %v538, %v538
      %v547 = vpack.c.bf16 %v539, %v539
      %v548 = vpack.c.bf16 %v540, %v540
      %vm549 = vcmask 257024
      %550 = vst.msk [vmem:[#allocation3] sm:$0xf] %vm549, %v541
      %551 = vst.msk [vmem:[#allocation3 + $0xc] sm:$0xf] %vm549, %v542
      %552 = vst.msk [vmem:[#allocation3 + $0x18] sm:$0xf] %vm549, %v543
      %553 = vst.msk [vmem:[#allocation3 + $0x24] sm:$0xf] %vm549, %v544
      %554 = vst.msk [vmem:[#allocation3 + $0x30] sm:$0xf] %vm549, %v545
      %555 = vst.msk [vmem:[#allocation3 + $0x3c] sm:$0xf] %vm549, %v546
      %556 = vst.msk [vmem:[#allocation3 + $0x48] sm:$0xf] %vm549, %v547
      %557 = vst.msk [vmem:[#allocation3 + $0x54] sm:$0xf] %vm549, %v548
      %s558 = scalar_lea.vmem [#allocation2], 288
      %v559 = vld [vmem:[%s558 + $0x1] sm:$0xff]
      %v560 = vld [vmem:[%s558 + $0x11] sm:$0xff]
      %v561 = vld [vmem:[%s558 + $0x21] sm:$0xff]
      %v562 = vld [vmem:[%s558 + $0x31] sm:$0xff]
      %v563 = vld [vmem:[%s558 + $0x41] sm:$0xff]
      %v564 = vld [vmem:[%s558 + $0x51] sm:$0xff]
      %v565 = vld [vmem:[%s558 + $0x61] sm:$0xff]
      %v566 = vld [vmem:[%s558 + $0x71] sm:$0xff]
      %v567 = vmax.f32 %v559, 0.0
      %v568 = vmax.f32 %v560, 0.0
      %v569 = vmax.f32 %v561, 0.0
      %v570 = vmax.f32 %v562, 0.0
      %v571 = vmax.f32 %v563, 0.0
      %v572 = vmax.f32 %v564, 0.0
      %v573 = vmax.f32 %v565, 0.0
      %v574 = vmax.f32 %v566, 0.0
      %v575 = vpack.c.bf16 %v567, %v567
      %v576 = vpack.c.bf16 %v568, %v568
      %v577 = vpack.c.bf16 %v569, %v569
      %v578 = vpack.c.bf16 %v570, %v570
      %v579 = vpack.c.bf16 %v571, %v571
      %v580 = vpack.c.bf16 %v572, %v572
      %v581 = vpack.c.bf16 %v573, %v573
      %v582 = vpack.c.bf16 %v574, %v574
      %v591 = vunpack.c.l.b16 %v575
      %v592 = vunpack.c.l.b16 %v576
      %v593 = vunpack.c.l.b16 %v577
      %v594 = vunpack.c.l.b16 %v578
      %v595 = vunpack.c.l.b16 %v579
      %v596 = vunpack.c.l.b16 %v580
      %v597 = vunpack.c.l.b16 %v581
      %v598 = vunpack.c.l.b16 %v582
      %v599 = vpack.c.b16 %v591, %v591
      %v600 = vpack.c.b16 %v592, %v592
      %v601 = vpack.c.b16 %v593, %v593
      %v602 = vpack.c.b16 %v594, %v594
      %v603 = vpack.c.b16 %v595, %v595
      %v604 = vpack.c.b16 %v596, %v596
      %v605 = vpack.c.b16 %v597, %v597
      %v606 = vpack.c.b16 %v598, %v598
      %607 = vrot.lane.b32.xlu0 %v599, 32
      %v608 = vpop.permute.xlu0 %607
      %609 = vrot.lane.b32.xlu0 %v600, 32
      %v610 = vpop.permute.xlu0 %609
      %611 = vrot.lane.b32.xlu0 %v601, 32
      %v612 = vpop.permute.xlu0 %611
      %613 = vrot.lane.b32.xlu0 %v602, 32
      %v614 = vpop.permute.xlu0 %613
      %615 = vrot.lane.b32.xlu0 %v603, 32
      %v616 = vpop.permute.xlu0 %615
      %617 = vrot.lane.b32.xlu0 %v604, 32
      %v618 = vpop.permute.xlu0 %617
      %619 = vrot.lane.b32.xlu0 %v605, 32
      %v620 = vpop.permute.xlu0 %619
      %621 = vrot.lane.b32.xlu0 %v606, 32
      %v622 = vpop.permute.xlu0 %621
      %vm631 = vcmask 519424
      %632 = vst.msk [vmem:[#allocation3] sm:$0xf] %vm631, %v608
      %633 = vst.msk [vmem:[#allocation3 + $0xc] sm:$0xf] %vm631, %v610
      %634 = vst.msk [vmem:[#allocation3 + $0x18] sm:$0xf] %vm631, %v612
      %635 = vst.msk [vmem:[#allocation3 + $0x24] sm:$0xf] %vm631, %v614
      %636 = vst.msk [vmem:[#allocation3 + $0x30] sm:$0xf] %vm631, %v616
      %637 = vst.msk [vmem:[#allocation3 + $0x3c] sm:$0xf] %vm631, %v618
      %638 = vst.msk [vmem:[#allocation3 + $0x48] sm:$0xf] %vm631, %v620
      %639 = vst.msk [vmem:[#allocation3 + $0x54] sm:$0xf] %vm631, %v622
      %v640 = vmax.f32 %v525, %v559
      %v641 = vmax.f32 %v526, %v560
      %v642 = vmax.f32 %v527, %v561
      %v643 = vmax.f32 %v528, %v562
      %v644 = vmax.f32 %v529, %v563
      %v645 = vmax.f32 %v530, %v564
      %v646 = vmax.f32 %v531, %v565
      %v647 = vmax.f32 %v532, %v566
      %v648 = vld [vmem:[%s524 + $0x1] sm:$0xff]
      %v649 = vld [vmem:[%s524 + $0x11] sm:$0xff]
      %v650 = vld [vmem:[%s524 + $0x21] sm:$0xff]
      %v651 = vld [vmem:[%s524 + $0x31] sm:$0xff]
      %v652 = vld [vmem:[%s524 + $0x41] sm:$0xff]
      %v653 = vld [vmem:[%s524 + $0x51] sm:$0xff]
      %v654 = vld [vmem:[%s524 + $0x61] sm:$0xff]
      %v655 = vld [vmem:[%s524 + $0x71] sm:$0xff]
      %v656 = vmax.f32 %v648, 0.0
      %v657 = vmax.f32 %v649, 0.0
      %v658 = vmax.f32 %v650, 0.0
      %v659 = vmax.f32 %v651, 0.0
      %v660 = vmax.f32 %v652, 0.0
      %v661 = vmax.f32 %v653, 0.0
      %v662 = vmax.f32 %v654, 0.0
      %v663 = vmax.f32 %v655, 0.0
      %v664 = vpack.c.bf16 %v656, %v656
      %v665 = vpack.c.bf16 %v657, %v657
      %v666 = vpack.c.bf16 %v658, %v658
      %v667 = vpack.c.bf16 %v659, %v659
      %v668 = vpack.c.bf16 %v660, %v660
      %v669 = vpack.c.bf16 %v661, %v661
      %v670 = vpack.c.bf16 %v662, %v662
      %v671 = vpack.c.bf16 %v663, %v663
      %v680 = vunpack.c.l.b16 %v664
      %v681 = vunpack.c.l.b16 %v665
      %v682 = vunpack.c.l.b16 %v666
      %v683 = vunpack.c.l.b16 %v667
      %v684 = vunpack.c.l.b16 %v668
      %v685 = vunpack.c.l.b16 %v669
      %v686 = vunpack.c.l.b16 %v670
      %v687 = vunpack.c.l.b16 %v671
      %v688 = vpack.c.b16 %v680, %v680
      %v689 = vpack.c.b16 %v681, %v681
      %v690 = vpack.c.b16 %v682, %v682
      %v691 = vpack.c.b16 %v683, %v683
      %v692 = vpack.c.b16 %v684, %v684
      %v693 = vpack.c.b16 %v685, %v685
      %v694 = vpack.c.b16 %v686, %v686
      %v695 = vpack.c.b16 %v687, %v687
      %696 = vrot.lane.b32.xlu0 %v688, 64
      %v697 = vpop.permute.xlu0 %696
      %698 = vrot.lane.b32.xlu0 %v689, 64
      %v699 = vpop.permute.xlu0 %698
      %700 = vrot.lane.b32.xlu0 %v690, 64
      %v701 = vpop.permute.xlu0 %700
      %702 = vrot.lane.b32.xlu0 %v691, 64
      %v703 = vpop.permute.xlu0 %702
      %704 = vrot.lane.b32.xlu0 %v692, 64
      %v705 = vpop.permute.xlu0 %704
      %706 = vrot.lane.b32.xlu0 %v693, 64
      %v707 = vpop.permute.xlu0 %706
      %708 = vrot.lane.b32.xlu0 %v694, 64
      %v709 = vpop.permute.xlu0 %708
      %710 = vrot.lane.b32.xlu0 %v695, 64
      %v711 = vpop.permute.xlu0 %710
      %vm720 = vcmask 781824
      %721 = vst.msk [vmem:[#allocation3] sm:$0xf] %vm720, %v697
      %722 = vst.msk [vmem:[#allocation3 + $0xc] sm:$0xf] %vm720, %v699
      %723 = vst.msk [vmem:[#allocation3 + $0x18] sm:$0xf] %vm720, %v701
      %724 = vst.msk [vmem:[#allocation3 + $0x24] sm:$0xf] %vm720, %v703
      %725 = vst.msk [vmem:[#allocation3 + $0x30] sm:$0xf] %vm720, %v705
      %726 = vst.msk [vmem:[#allocation3 + $0x3c] sm:$0xf] %vm720, %v707
      %727 = vst.msk [vmem:[#allocation3 + $0x48] sm:$0xf] %vm720, %v709
      %728 = vst.msk [vmem:[#allocation3 + $0x54] sm:$0xf] %vm720, %v711
      %v729 = vmax.f32 %v640, %v648
      %v730 = vmax.f32 %v641, %v649
      %v731 = vmax.f32 %v642, %v650
      %v732 = vmax.f32 %v643, %v651
      %v733 = vmax.f32 %v644, %v652
      %v734 = vmax.f32 %v645, %v653
      %v735 = vmax.f32 %v646, %v654
      %v736 = vmax.f32 %v647, %v655
      %s737 = scalar_lea.vmem [#allocation2], 160
      %v738 = vld [vmem:[%s737] sm:$0xff]
      %v739 = vld [vmem:[%s737 + $0x10] sm:$0xff]
      %v740 = vld [vmem:[%s737 + $0x20] sm:$0xff]
      %v741 = vld [vmem:[%s737 + $0x30] sm:$0xff]
      %v742 = vld [vmem:[%s737 + $0x40] sm:$0xff]
      %v743 = vld [vmem:[%s737 + $0x50] sm:$0xff]
      %v744 = vld [vmem:[%s737 + $0x60] sm:$0xff]
      %v745 = vld [vmem:[%s737 + $0x70] sm:$0xff]
      %v746 = vmax.f32 %v738, 0.0
      %v747 = vmax.f32 %v739, 0.0
      %v748 = vmax.f32 %v740, 0.0
      %v749 = vmax.f32 %v741, 0.0
      %v750 = vmax.f32 %v742, 0.0
      %v751 = vmax.f32 %v743, 0.0
      %v752 = vmax.f32 %v744, 0.0
      %v753 = vmax.f32 %v745, 0.0
      %v754 = vpack.c.bf16 %v746, %v746
      %v755 = vpack.c.bf16 %v747, %v747
      %v756 = vpack.c.bf16 %v748, %v748
      %v757 = vpack.c.bf16 %v749, %v749
      %v758 = vpack.c.bf16 %v750, %v750
      %v759 = vpack.c.bf16 %v751, %v751
      %v760 = vpack.c.bf16 %v752, %v752
      %v761 = vpack.c.bf16 %v753, %v753
      %v770 = vunpack.c.l.b16 %v754
      %v771 = vunpack.c.l.b16 %v755
      %v772 = vunpack.c.l.b16 %v756
      %v773 = vunpack.c.l.b16 %v757
      %v774 = vunpack.c.l.b16 %v758
      %v775 = vunpack.c.l.b16 %v759
      %v776 = vunpack.c.l.b16 %v760
      %v777 = vunpack.c.l.b16 %v761
      %v778 = vpack.c.b16 %v770, %v770
      %v779 = vpack.c.b16 %v771, %v771
      %v780 = vpack.c.b16 %v772, %v772
      %v781 = vpack.c.b16 %v773, %v773
      %v782 = vpack.c.b16 %v774, %v774
      %v783 = vpack.c.b16 %v775, %v775
      %v784 = vpack.c.b16 %v776, %v776
      %v785 = vpack.c.b16 %v777, %v777
      %786 = vrot.lane.b32.xlu0 %v778, 96
      %v787 = vpop.permute.xlu0 %786
      %788 = vrot.lane.b32.xlu0 %v779, 96
      %v789 = vpop.permute.xlu0 %788
      %790 = vrot.lane.b32.xlu0 %v780, 96
      %v791 = vpop.permute.xlu0 %790
      %792 = vrot.lane.b32.xlu0 %v781, 96
      %v793 = vpop.permute.xlu0 %792
      %794 = vrot.lane.b32.xlu0 %v782, 96
      %v795 = vpop.permute.xlu0 %794
      %796 = vrot.lane.b32.xlu0 %v783, 96
      %v797 = vpop.permute.xlu0 %796
      %798 = vrot.lane.b32.xlu0 %v784, 96
      %v799 = vpop.permute.xlu0 %798
      %800 = vrot.lane.b32.xlu0 %v785, 96
      %v801 = vpop.permute.xlu0 %800
      %vm810 = vcmask 1044224
      %811 = vst.msk [vmem:[#allocation3] sm:$0xf] %vm810, %v787
      %812 = vst.msk [vmem:[#allocation3 + $0xc] sm:$0xf] %vm810, %v789
      %813 = vst.msk [vmem:[#allocation3 + $0x18] sm:$0xf] %vm810, %v791
      %814 = vst.msk [vmem:[#allocation3 + $0x24] sm:$0xf] %vm810, %v793
      %815 = vst.msk [vmem:[#allocation3 + $0x30] sm:$0xf] %vm810, %v795
      %816 = vst.msk [vmem:[#allocation3 + $0x3c] sm:$0xf] %vm810, %v797
      %817 = vst.msk [vmem:[#allocation3 + $0x48] sm:$0xf] %vm810, %v799
      %818 = vst.msk [vmem:[#allocation3 + $0x54] sm:$0xf] %vm810, %v801
      %v819 = vmax.f32 %v729, %v738
      %v820 = vmax.f32 %v730, %v739
      %v821 = vmax.f32 %v731, %v740
      %v822 = vmax.f32 %v732, %v741
      %v823 = vmax.f32 %v733, %v742
      %v824 = vmax.f32 %v734, %v743
      %v825 = vmax.f32 %v735, %v744
      %v826 = vmax.f32 %v736, %v745
      %v827 = vld [vmem:[%s491 + $0x1] sm:$0xff]
      %v828 = vld [vmem:[%s491 + $0x11] sm:$0xff]
      %v829 = vld [vmem:[%s491 + $0x21] sm:$0xff]
      %v830 = vld [vmem:[%s491 + $0x31] sm:$0xff]
      %v831 = vld [vmem:[%s491 + $0x41] sm:$0xff]
      %v832 = vld [vmem:[%s491 + $0x51] sm:$0xff]
      %v833 = vld [vmem:[%s491 + $0x61] sm:$0xff]
      %v834 = vld [vmem:[%s491 + $0x71] sm:$0xff]
      %v835 = vmax.f32 %v827, 0.0
      %v836 = vmax.f32 %v828, 0.0
      %v837 = vmax.f32 %v829, 0.0
      %v838 = vmax.f32 %v830, 0.0
      %v839 = vmax.f32 %v831, 0.0
      %v840 = vmax.f32 %v832, 0.0
      %v841 = vmax.f32 %v833, 0.0
      %v842 = vmax.f32 %v834, 0.0
      %v843 = vpack.c.bf16 %v835, %v835
      %v844 = vpack.c.bf16 %v836, %v836
      %v845 = vpack.c.bf16 %v837, %v837
      %v846 = vpack.c.bf16 %v838, %v838
      %v847 = vpack.c.bf16 %v839, %v839
      %v848 = vpack.c.bf16 %v840, %v840
      %v849 = vpack.c.bf16 %v841, %v841
      %v850 = vpack.c.bf16 %v842, %v842
      %851 = vst.msk [vmem:[#allocation3 + $0x4] sm:$0xf] %vm549, %v843
      %852 = vst.msk [vmem:[#allocation3 + $0x10] sm:$0xf] %vm549, %v844
      %853 = vst.msk [vmem:[#allocation3 + $0x1c] sm:$0xf] %vm549, %v845
      %854 = vst.msk [vmem:[#allocation3 + $0x28] sm:$0xf] %vm549, %v846
      %855 = vst.msk [vmem:[#allocation3 + $0x34] sm:$0xf] %vm549, %v847
      %856 = vst.msk [vmem:[#allocation3 + $0x40] sm:$0xf] %vm549, %v848
      %857 = vst.msk [vmem:[#allocation3 + $0x4c] sm:$0xf] %vm549, %v849
      %858 = vst.msk [vmem:[#allocation3 + $0x58] sm:$0xf] %vm549, %v850
      %v859 = vmax.f32 %v819, %v827
      %v860 = vmax.f32 %v820, %v828
      %v861 = vmax.f32 %v821, %v829
      %v862 = vmax.f32 %v822, %v830
      %v863 = vmax.f32 %v823, %v831
      %v864 = vmax.f32 %v824, %v832
      %v865 = vmax.f32 %v825, %v833
      %v866 = vmax.f32 %v826, %v834
      %v867 = vld [vmem:[%s737 + $0x1] sm:$0xff]
      %v868 = vld [vmem:[%s737 + $0x11] sm:$0xff]
      %v869 = vld [vmem:[%s737 + $0x21] sm:$0xff]
      %v870 = vld [vmem:[%s737 + $0x31] sm:$0xff]
      %v871 = vld [vmem:[%s737 + $0x41] sm:$0xff]
      %v872 = vld [vmem:[%s737 + $0x51] sm:$0xff]
      %v873 = vld [vmem:[%s737 + $0x61] sm:$0xff]
      %v874 = vld [vmem:[%s737 + $0x71] sm:$0xff]
      %v875 = vmax.f32 %v867, 0.0
      %v876 = vmax.f32 %v868, 0.0
      %v877 = vmax.f32 %v869, 0.0
      %v878 = vmax.f32 %v870, 0.0
      %v879 = vmax.f32 %v871, 0.0
      %v880 = vmax.f32 %v872, 0.0
      %v881 = vmax.f32 %v873, 0.0
      %v882 = vmax.f32 %v874, 0.0
      %v883 = vpack.c.bf16 %v875, %v875
      %v884 = vpack.c.bf16 %v876, %v876
      %v885 = vpack.c.bf16 %v877, %v877
      %v886 = vpack.c.bf16 %v878, %v878
      %v887 = vpack.c.bf16 %v879, %v879
      %v888 = vpack.c.bf16 %v880, %v880
      %v889 = vpack.c.bf16 %v881, %v881
      %v890 = vpack.c.bf16 %v882, %v882
      %v899 = vunpack.c.l.b16 %v883
      %v900 = vunpack.c.l.b16 %v884
      %v901 = vunpack.c.l.b16 %v885
      %v902 = vunpack.c.l.b16 %v886
      %v903 = vunpack.c.l.b16 %v887
      %v904 = vunpack.c.l.b16 %v888
      %v905 = vunpack.c.l.b16 %v889
      %v906 = vunpack.c.l.b16 %v890
      %v907 = vpack.c.b16 %v899, %v899
      %v908 = vpack.c.b16 %v900, %v900
      %v909 = vpack.c.b16 %v901, %v901
      %v910 = vpack.c.b16 %v902, %v902
      %v911 = vpack.c.b16 %v903, %v903
      %v912 = vpack.c.b16 %v904, %v904
      %v913 = vpack.c.b16 %v905, %v905
      %v914 = vpack.c.b16 %v906, %v906
      %915 = vrot.lane.b32.xlu0 %v907, 32
      %v916 = vpop.permute.xlu0 %915
      %917 = vrot.lane.b32.xlu0 %v908, 32
      %v918 = vpop.permute.xlu0 %917
      %919 = vrot.lane.b32.xlu0 %v909, 32
      %v920 = vpop.permute.xlu0 %919
      %921 = vrot.lane.b32.xlu0 %v910, 32
      %v922 = vpop.permute.xlu0 %921
      %923 = vrot.lane.b32.xlu0 %v911, 32
      %v924 = vpop.permute.xlu0 %923
      %925 = vrot.lane.b32.xlu0 %v912, 32
      %v926 = vpop.permute.xlu0 %925
      %927 = vrot.lane.b32.xlu0 %v913, 32
      %v928 = vpop.permute.xlu0 %927
      %929 = vrot.lane.b32.xlu0 %v914, 32
      %v930 = vpop.permute.xlu0 %929
      %939 = vst.msk [vmem:[#allocation3 + $0x4] sm:$0xf] %vm631, %v916
      %940 = vst.msk [vmem:[#allocation3 + $0x10] sm:$0xf] %vm631, %v918
      %941 = vst.msk [vmem:[#allocation3 + $0x1c] sm:$0xf] %vm631, %v920
      %942 = vst.msk [vmem:[#allocation3 + $0x28] sm:$0xf] %vm631, %v922
      %943 = vst.msk [vmem:[#allocation3 + $0x34] sm:$0xf] %vm631, %v924
      %944 = vst.msk [vmem:[#allocation3 + $0x40] sm:$0xf] %vm631, %v926
      %945 = vst.msk [vmem:[#allocation3 + $0x4c] sm:$0xf] %vm631, %v928
      %946 = vst.msk [vmem:[#allocation3 + $0x58] sm:$0xf] %vm631, %v930
      %v947 = vmax.f32 %v859, %v867
      %v948 = vmax.f32 %v860, %v868
      %v949 = vmax.f32 %v861, %v869
      %v950 = vmax.f32 %v862, %v870
      %v951 = vmax.f32 %v863, %v871
      %v952 = vmax.f32 %v864, %v872
      %v953 = vmax.f32 %v865, %v873
      %v954 = vmax.f32 %v866, %v874
      %s955 = scalar_lea.vmem [#allocation2], 448
      %v956 = vld [vmem:[%s955] sm:$0xff]
      %v957 = vld [vmem:[%s955 + $0x10] sm:$0xff]
      %v958 = vld [vmem:[%s955 + $0x20] sm:$0xff]
      %v959 = vld [vmem:[%s955 + $0x30] sm:$0xff]
      %v960 = vld [vmem:[%s955 + $0x40] sm:$0xff]
      %v961 = vld [vmem:[%s955 + $0x50] sm:$0xff]
      %v962 = vld [vmem:[%s955 + $0x60] sm:$0xff]
      %v963 = vld [vmem:[%s955 + $0x70] sm:$0xff]
      %v964 = vmax.f32 %v956, 0.0
      %v965 = vmax.f32 %v957, 0.0
      %v966 = vmax.f32 %v958, 0.0
      %v967 = vmax.f32 %v959, 0.0
      %v968 = vmax.f32 %v960, 0.0
      %v969 = vmax.f32 %v961, 0.0
      %v970 = vmax.f32 %v962, 0.0
      %v971 = vmax.f32 %v963, 0.0
      %v972 = vpack.c.bf16 %v964, %v964
      %v973 = vpack.c.bf16 %v965, %v965
      %v974 = vpack.c.bf16 %v966, %v966
      %v975 = vpack.c.bf16 %v967, %v967
      %v976 = vpack.c.bf16 %v968, %v968
      %v977 = vpack.c.bf16 %v969, %v969
      %v978 = vpack.c.bf16 %v970, %v970
      %v979 = vpack.c.bf16 %v971, %v971
      %v988 = vunpack.c.l.b16 %v972
      %v989 = vunpack.c.l.b16 %v973
      %v990 = vunpack.c.l.b16 %v974
      %v991 = vunpack.c.l.b16 %v975
      %v992 = vunpack.c.l.b16 %v976
      %v993 = vunpack.c.l.b16 %v977
      %v994 = vunpack.c.l.b16 %v978
      %v995 = vunpack.c.l.b16 %v979
      %v996 = vpack.c.b16 %v988, %v988
      %v997 = vpack.c.b16 %v989, %v989
      %v998 = vpack.c.b16 %v990, %v990
      %v999 = vpack.c.b16 %v991, %v991
      %v1000 = vpack.c.b16 %v992, %v992
      %v1001 = vpack.c.b16 %v993, %v993
      %v1002 = vpack.c.b16 %v994, %v994
      %v1003 = vpack.c.b16 %v995, %v995
      %1004 = vrot.lane.b32.xlu0 %v996, 64
      %v1005 = vpop.permute.xlu0 %1004
      %1006 = vrot.lane.b32.xlu0 %v997, 64
      %v1007 = vpop.permute.xlu0 %1006
      %1008 = vrot.lane.b32.xlu0 %v998, 64
      %v1009 = vpop.permute.xlu0 %1008
      %1010 = vrot.lane.b32.xlu0 %v999, 64
      %v1011 = vpop.permute.xlu0 %1010
      %1012 = vrot.lane.b32.xlu0 %v1000, 64
      %v1013 = vpop.permute.xlu0 %1012
      %1014 = vrot.lane.b32.xlu0 %v1001, 64
      %v1015 = vpop.permute.xlu0 %1014
      %1016 = vrot.lane.b32.xlu0 %v1002, 64
      %v1017 = vpop.permute.xlu0 %1016
      %1018 = vrot.lane.b32.xlu0 %v1003, 64
      %v1019 = vpop.permute.xlu0 %1018
      %1028 = vst.msk [vmem:[#allocation3 + $0x4] sm:$0xf] %vm720, %v1005
      %1029 = vst.msk [vmem:[#allocation3 + $0x10] sm:$0xf] %vm720, %v1007
      %1030 = vst.msk [vmem:[#allocation3 + $0x1c] sm:$0xf] %vm720, %v1009
      %1031 = vst.msk [vmem:[#allocation3 + $0x28] sm:$0xf] %vm720, %v1011
      %1032 = vst.msk [vmem:[#allocation3 + $0x34] sm:$0xf] %vm720, %v1013
      %1033 = vst.msk [vmem:[#allocation3 + $0x40] sm:$0xf] %vm720, %v1015
      %1034 = vst.msk [vmem:[#allocation3 + $0x4c] sm:$0xf] %vm720, %v1017
      %1035 = vst.msk [vmem:[#allocation3 + $0x58] sm:$0xf] %vm720, %v1019
      %v1036 = vmax.f32 %v947, %v956
      %v1037 = vmax.f32 %v948, %v957
      %v1038 = vmax.f32 %v949, %v958
      %v1039 = vmax.f32 %v950, %v959
      %v1040 = vmax.f32 %v951, %v960
      %v1041 = vmax.f32 %v952, %v961
      %v1042 = vmax.f32 %v953, %v962
      %v1043 = vmax.f32 %v954, %v963
      %s1044 = scalar_lea.vmem [#allocation2], 304
      %v1045 = vld [vmem:[%s1044 + $0x1] sm:$0xff]
      %v1046 = vld [vmem:[%s1044 + $0x11] sm:$0xff]
      %v1047 = vld [vmem:[%s1044 + $0x21] sm:$0xff]
      %v1048 = vld [vmem:[%s1044 + $0x31] sm:$0xff]
      %v1049 = vld [vmem:[%s1044 + $0x41] sm:$0xff]
      %v1050 = vld [vmem:[%s1044 + $0x51] sm:$0xff]
      %v1051 = vld [vmem:[%s1044 + $0x61] sm:$0xff]
      %v1052 = vld [vmem:[%s1044 + $0x71] sm:$0xff]
      %v1053 = vmax.f32 %v1045, 0.0
      %v1054 = vmax.f32 %v1046, 0.0
      %v1055 = vmax.f32 %v1047, 0.0
      %v1056 = vmax.f32 %v1048, 0.0
      %v1057 = vmax.f32 %v1049, 0.0
      %v1058 = vmax.f32 %v1050, 0.0
      %v1059 = vmax.f32 %v1051, 0.0
      %v1060 = vmax.f32 %v1052, 0.0
      %v1061 = vpack.c.bf16 %v1053, %v1053
      %v1062 = vpack.c.bf16 %v1054, %v1054
      %v1063 = vpack.c.bf16 %v1055, %v1055
      %v1064 = vpack.c.bf16 %v1056, %v1056
      %v1065 = vpack.c.bf16 %v1057, %v1057
      %v1066 = vpack.c.bf16 %v1058, %v1058
      %v1067 = vpack.c.bf16 %v1059, %v1059
      %v1068 = vpack.c.bf16 %v1060, %v1060
      %v1077 = vunpack.c.l.b16 %v1061
      %v1078 = vunpack.c.l.b16 %v1062
      %v1079 = vunpack.c.l.b16 %v1063
      %v1080 = vunpack.c.l.b16 %v1064
      %v1081 = vunpack.c.l.b16 %v1065
      %v1082 = vunpack.c.l.b16 %v1066
      %v1083 = vunpack.c.l.b16 %v1067
      %v1084 = vunpack.c.l.b16 %v1068
      %v1085 = vpack.c.b16 %v1077, %v1077
      %v1086 = vpack.c.b16 %v1078, %v1078
      %v1087 = vpack.c.b16 %v1079, %v1079
      %v1088 = vpack.c.b16 %v1080, %v1080
      %v1089 = vpack.c.b16 %v1081, %v1081
      %v1090 = vpack.c.b16 %v1082, %v1082
      %v1091 = vpack.c.b16 %v1083, %v1083
      %v1092 = vpack.c.b16 %v1084, %v1084
      %1093 = vrot.lane.b32.xlu0 %v1085, 96
      %v1094 = vpop.permute.xlu0 %1093
      %1095 = vrot.lane.b32.xlu0 %v1086, 96
      %v1096 = vpop.permute.xlu0 %1095
      %1097 = vrot.lane.b32.xlu0 %v1087, 96
      %v1098 = vpop.permute.xlu0 %1097
      %1099 = vrot.lane.b32.xlu0 %v1088, 96
      %v1100 = vpop.permute.xlu0 %1099
      %1101 = vrot.lane.b32.xlu0 %v1089, 96
      %v1102 = vpop.permute.xlu0 %1101
      %1103 = vrot.lane.b32.xlu0 %v1090, 96
      %v1104 = vpop.permute.xlu0 %1103
      %1105 = vrot.lane.b32.xlu0 %v1091, 96
      %v1106 = vpop.permute.xlu0 %1105
      %1107 = vrot.lane.b32.xlu0 %v1092, 96
      %v1108 = vpop.permute.xlu0 %1107
      %1117 = vst.msk [vmem:[#allocation3 + $0x4] sm:$0xf] %vm810, %v1094
      %1118 = vst.msk [vmem:[#allocation3 + $0x10] sm:$0xf] %vm810, %v1096
      %1119 = vst.msk [vmem:[#allocation3 + $0x1c] sm:$0xf] %vm810, %v1098
      %1120 = vst.msk [vmem:[#allocation3 + $0x28] sm:$0xf] %vm810, %v1100
      %1121 = vst.msk [vmem:[#allocation3 + $0x34] sm:$0xf] %vm810, %v1102
      %1122 = vst.msk [vmem:[#allocation3 + $0x40] sm:$0xf] %vm810, %v1104
      %1123 = vst.msk [vmem:[#allocation3 + $0x4c] sm:$0xf] %vm810, %v1106
      %1124 = vst.msk [vmem:[#allocation3 + $0x58] sm:$0xf] %vm810, %v1108
      %v1125 = vmax.f32 %v1036, %v1045
      %v1126 = vmax.f32 %v1037, %v1046
      %v1127 = vmax.f32 %v1038, %v1047
      %v1128 = vmax.f32 %v1039, %v1048
      %v1129 = vmax.f32 %v1040, %v1049
      %v1130 = vmax.f32 %v1041, %v1050
      %v1131 = vmax.f32 %v1042, %v1051
      %v1132 = vmax.f32 %v1043, %v1052
      %v1133 = vld [vmem:[%s955 + $0x1] sm:$0xff]
      %v1134 = vld [vmem:[%s955 + $0x11] sm:$0xff]
      %v1135 = vld [vmem:[%s955 + $0x21] sm:$0xff]
      %v1136 = vld [vmem:[%s955 + $0x31] sm:$0xff]
      %v1137 = vld [vmem:[%s955 + $0x41] sm:$0xff]
      %v1138 = vld [vmem:[%s955 + $0x51] sm:$0xff]
      %v1139 = vld [vmem:[%s955 + $0x61] sm:$0xff]
      %v1140 = vld [vmem:[%s955 + $0x71] sm:$0xff]
      %v1141 = vmax.f32 %v1133, 0.0
      %v1142 = vmax.f32 %v1134, 0.0
      %v1143 = vmax.f32 %v1135, 0.0
      %v1144 = vmax.f32 %v1136, 0.0
      %v1145 = vmax.f32 %v1137, 0.0
      %v1146 = vmax.f32 %v1138, 0.0
      %v1147 = vmax.f32 %v1139, 0.0
      %v1148 = vmax.f32 %v1140, 0.0
      %v1149 = vpack.c.bf16 %v1141, %v1141
      %v1150 = vpack.c.bf16 %v1142, %v1142
      %v1151 = vpack.c.bf16 %v1143, %v1143
      %v1152 = vpack.c.bf16 %v1144, %v1144
      %v1153 = vpack.c.bf16 %v1145, %v1145
      %v1154 = vpack.c.bf16 %v1146, %v1146
      %v1155 = vpack.c.bf16 %v1147, %v1147
      %v1156 = vpack.c.bf16 %v1148, %v1148
      %1157 = vst.msk [vmem:[#allocation3 + $0x8] sm:$0xf] %vm549, %v1149
      %1158 = vst.msk [vmem:[#allocation3 + $0x14] sm:$0xf] %vm549, %v1150
      %1159 = vst.msk [vmem:[#allocation3 + $0x20] sm:$0xf] %vm549, %v1151
      %1160 = vst.msk [vmem:[#allocation3 + $0x2c] sm:$0xf] %vm549, %v1152
      %1161 = vst.msk [vmem:[#allocation3 + $0x38] sm:$0xf] %vm549, %v1153
      %1162 = vst.msk [vmem:[#allocation3 + $0x44] sm:$0xf] %vm549, %v1154
      %1163 = vst.msk [vmem:[#allocation3 + $0x50] sm:$0xf] %vm549, %v1155
      %1164 = vst.msk [vmem:[#allocation3 + $0x5c] sm:$0xf] %vm549, %v1156
      %v1165 = vmax.f32 %v1125, %v1133
      %v1166 = vmax.f32 %v1126, %v1134
      %v1167 = vmax.f32 %v1127, %v1135
      %v1168 = vmax.f32 %v1128, %v1136
      %v1169 = vmax.f32 %v1129, %v1137
      %v1170 = vmax.f32 %v1130, %v1138
      %v1171 = vmax.f32 %v1131, %v1139
      %v1172 = vmax.f32 %v1132, %v1140
      %v1173 = vld [vmem:[#allocation3] sm:$0xff]
      %v1174 = vld [vmem:[#allocation3 + $0x8] sm:$0xf]
      %v1175 = vld [vmem:[#allocation3 + $0xc] sm:$0xff]
      %v1176 = vld [vmem:[#allocation3 + $0x14] sm:$0xf]
      %v1177 = vld [vmem:[#allocation3 + $0x18] sm:$0xff]
      %v1178 = vld [vmem:[#allocation3 + $0x20] sm:$0xf]
      %v1179 = vld [vmem:[#allocation3 + $0x24] sm:$0xff]
      %v1180 = vld [vmem:[#allocation3 + $0x2c] sm:$0xf]
      %v1181 = vld [vmem:[#allocation3 + $0x30] sm:$0xff]
      %v1182 = vld [vmem:[#allocation3 + $0x38] sm:$0xf]
      %v1183 = vld [vmem:[#allocation3 + $0x3c] sm:$0xff]
      %v1184 = vld [vmem:[#allocation3 + $0x44] sm:$0xf]
      %v1185 = vld [vmem:[#allocation3 + $0x48] sm:$0xff]
      %v1186 = vld [vmem:[#allocation3 + $0x50] sm:$0xf]
      %v1187 = vld [vmem:[#allocation3 + $0x54] sm:$0xff]
      %v1188 = vld [vmem:[#allocation3 + $0x5c] sm:$0xf]
      %v1189 = vld [vmem:[%s3] sm:$0xf]
      %v1190 = vld [vmem:[%s3 + $0x4] sm:$0xf]
      %v1191 = vld [vmem:[%s3 + $0x8] sm:$0xf]
      %v1192 = vld [vmem:[%s3 + $0xc] sm:$0xf]
      %v1193 = vld [vmem:[%s3 + $0x10] sm:$0xf]
      %v1194 = vld [vmem:[%s3 + $0x14] sm:$0xf]
      %v1195 = vld [vmem:[%s3 + $0x18] sm:$0xf]
      %v1196 = vld [vmem:[%s3 + $0x1c] sm:$0xf]
      %v1197 = vld [vmem:[%s3 + $0x20] sm:$0xf]
      %v1198 = vld [vmem:[%s3 + $0x24] sm:$0xf]
      %v1199 = vld [vmem:[%s3 + $0x28] sm:$0xf]
      %v1200 = vld [vmem:[%s3 + $0x2c] sm:$0xf]
      %v1201 = vld [vmem:[%s3 + $0x30] sm:$0xf]
      %v1202 = vld [vmem:[%s3 + $0x34] sm:$0xf]
      %v1203 = vld [vmem:[%s3 + $0x38] sm:$0xf]
      %v1204 = vld [vmem:[%s3 + $0x3c] sm:$0xf]
      %v1205 = vld [vmem:[%s3 + $0x40] sm:$0xf]
      %v1206 = vld [vmem:[%s3 + $0x44] sm:$0xf]
      %v1207 = vld [vmem:[%s3 + $0x48] sm:$0xf]
      %v1208 = vld [vmem:[%s3 + $0x4c] sm:$0xf]
      %v1209 = vld [vmem:[%s3 + $0x50] sm:$0xf]
      %v1210 = vld [vmem:[%s3 + $0x54] sm:$0xf]
      %v1211 = vld [vmem:[%s3 + $0x58] sm:$0xf]
      %v1212 = vld [vmem:[%s3 + $0x5c] sm:$0xf]
      %v1213 = vld [vmem:[%s3 + $0x60] sm:$0xf]
      %v1214 = vld [vmem:[%s3 + $0x64] sm:$0xf]
      %v1215 = vld [vmem:[%s3 + $0x68] sm:$0xf]
      %v1216 = vld [vmem:[%s3 + $0x6c] sm:$0xf]
      %v1217 = vld [vmem:[%s3 + $0x70] sm:$0xf]
      %v1218 = vld [vmem:[%s3 + $0x74] sm:$0xf]
      %v1219 = vld [vmem:[%s3 + $0x78] sm:$0xf]
      %v1220 = vld [vmem:[%s3 + $0x7c] sm:$0xf]
      %v1221 = vld [vmem:[%s3 + $0x80] sm:$0xf]
      %v1222 = vld [vmem:[%s3 + $0x84] sm:$0xf]
      %v1223 = vld [vmem:[%s3 + $0x88] sm:$0xf]
      %v1224 = vld [vmem:[%s3 + $0x8c] sm:$0xf]
      %v1225 = vld [vmem:[%s4] sm:$0x1]
      %v1227 = vlaneseq
      %v1228 = vshrl.u32 %v1227, 7
      %v1229 = vsub.s32 0, %v1228
      %v1230 = vrot.slane %v1225, %v1229
      %v1248 = vunpack.c.l.b16 %v1173
      %v1249 = vunpack.c.h.b16 %v1173
      %v1250 = vunpack.c.l.b16 %v1174
      %v1251 = vunpack.c.l.b16 %v1175
      %v1252 = vunpack.c.h.b16 %v1175
      %v1253 = vunpack.c.l.b16 %v1176
      %v1254 = vunpack.c.l.b16 %v1177
      %v1255 = vunpack.c.h.b16 %v1177
      %v1256 = vunpack.c.l.b16 %v1178
      %v1257 = vunpack.c.l.b16 %v1179
      %v1258 = vunpack.c.h.b16 %v1179
      %v1259 = vunpack.c.l.b16 %v1180
      %v1260 = vunpack.c.l.b16 %v1181
      %v1261 = vunpack.c.h.b16 %v1181
      %v1262 = vunpack.c.l.b16 %v1182
      %v1263 = vunpack.c.l.b16 %v1183
      %v1264 = vunpack.c.h.b16 %v1183
      %v1265 = vunpack.c.l.b16 %v1184
      %v1266 = vunpack.c.l.b16 %v1185
      %v1267 = vunpack.c.h.b16 %v1185
      %v1268 = vunpack.c.l.b16 %v1186
      %v1269 = vunpack.c.l.b16 %v1187
      %v1270 = vunpack.c.h.b16 %v1187
      %v1271 = vunpack.c.l.b16 %v1188
      %v1272 = vpack.c.b16 %v1251, %v1248
      %v1273 = vpack.c.b16 %v1252, %v1249
      %v1274 = vpack.c.b16 %v1253, %v1250
      %v1275 = vpack.c.b16 %v1257, %v1254
      %v1276 = vpack.c.b16 %v1258, %v1255
      %v1277 = vpack.c.b16 %v1259, %v1256
      %v1278 = vpack.c.b16 %v1263, %v1260
      %v1279 = vpack.c.b16 %v1264, %v1261
      %v1280 = vpack.c.b16 %v1265, %v1262
      %v1281 = vpack.c.b16 %v1269, %v1266
      %v1282 = vpack.c.b16 %v1270, %v1267
      %v1283 = vpack.c.b16 %v1271, %v1268
      %v1328 = vunpack.c.l.b16 %v1189
      %v1329 = vunpack.c.l.b16 %v1190
      %v1330 = vunpack.c.l.b16 %v1191
      %v1331 = vunpack.c.l.b16 %v1192
      %v1332 = vunpack.c.l.b16 %v1193
      %v1333 = vunpack.c.l.b16 %v1194
      %v1334 = vunpack.c.l.b16 %v1195
      %v1335 = vunpack.c.l.b16 %v1196
      %v1336 = vunpack.c.l.b16 %v1197
      %v1337 = vunpack.c.l.b16 %v1198
      %v1338 = vunpack.c.l.b16 %v1199
      %v1339 = vunpack.c.l.b16 %v1200
      %v1340 = vunpack.c.l.b16 %v1201
      %v1341 = vunpack.c.l.b16 %v1202
      %v1342 = vunpack.c.l.b16 %v1203
      %v1343 = vunpack.c.l.b16 %v1204
      %v1344 = vunpack.c.l.b16 %v1205
      %v1345 = vunpack.c.l.b16 %v1206
      %v1346 = vunpack.c.l.b16 %v1207
      %v1347 = vunpack.c.l.b16 %v1208
      %v1348 = vunpack.c.l.b16 %v1209
      %v1349 = vunpack.c.l.b16 %v1210
      %v1350 = vunpack.c.l.b16 %v1211
      %v1351 = vunpack.c.l.b16 %v1212
      %v1352 = vunpack.c.l.b16 %v1213
      %v1353 = vunpack.c.l.b16 %v1214
      %v1354 = vunpack.c.l.b16 %v1215
      %v1355 = vunpack.c.l.b16 %v1216
      %v1356 = vunpack.c.l.b16 %v1217
      %v1357 = vunpack.c.l.b16 %v1218
      %v1358 = vunpack.c.l.b16 %v1219
      %v1359 = vunpack.c.l.b16 %v1220
      %v1360 = vunpack.c.l.b16 %v1221
      %v1361 = vunpack.c.l.b16 %v1222
      %v1362 = vunpack.c.l.b16 %v1223
      %v1363 = vunpack.c.l.b16 %v1224
      %v1364 = vpack.c.b16 %v1329, %v1328
      %v1365 = vpack.c.b16 %v1331, %v1330
      %v1366 = vpack.c.b16 %v1333, %v1332
      %v1367 = vpack.c.b16 %v1335, %v1334
      %v1368 = vpack.c.b16 %v1337, %v1336
      %v1369 = vpack.c.b16 %v1339, %v1338
      %v1370 = vpack.c.b16 %v1341, %v1340
      %v1371 = vpack.c.b16 %v1343, %v1342
      %v1372 = vpack.c.b16 %v1345, %v1344
      %v1373 = vpack.c.b16 %v1347, %v1346
      %v1374 = vpack.c.b16 %v1349, %v1348
      %v1375 = vpack.c.b16 %v1351, %v1350
      %v1376 = vpack.c.b16 %v1353, %v1352
      %v1377 = vpack.c.b16 %v1355, %v1354
      %v1378 = vpack.c.b16 %v1357, %v1356
      %v1379 = vpack.c.b16 %v1359, %v1358
      %v1380 = vpack.c.b16 %v1361, %v1360
      %v1381 = vpack.c.b16 %v1363, %v1362
      %v1401 = vsel %vm445, %v1274, 0
      %v1404 = vsel %vm445, %v1277, 0
      %v1407 = vsel %vm445, %v1280, 0
      %v1410 = vsel %vm445, %v1283, 0
      %1412 = vmatprep.subr.bf16.mxu0 0
      %1413 = vmatpush1.bf16.msra.mxu0 %v1364
      %1414 = vmatprep.subr.bf16.mxu0 0
      %1415 = vmatpush1.bf16.msra.mxu0 %v1365
      %1416 = vmatprep.subr.bf16.mxu0 0
      %1417 = vmatpush1.bf16.msra.mxu0 %v1366
      %1418 = vmatprep.subr.bf16.mxu0 0
      %1419 = vmatpush1.bf16.msra.mxu0 %v1367
      %1420 = vmatprep.subr.bf16.mxu0 0
      %1421 = vmatpush1.bf16.msra.mxu0 %v1368
      %1422 = vmatprep.subr.bf16.mxu0 0
      %1423 = vmatpush1.bf16.msra.mxu0 %v1369
      %1424 = vmatprep.subr.bf16.mxu0 0
      %1425 = vmatpush1.bf16.msra.mxu0 %v1370
      %1426 = vmatprep.subr.bf16.mxu0 0
      %1427 = vmatpush1.bf16.msra.mxu0 %v1371
      %1428 = vmatprep.subr.bf16.mxu0 0
      %1429 = vmatpush1.bf16.msra.mxu0 %v1372
      %1430 = vmatprep.subr.bf16.mxu0 0
      %1431 = vmatpush1.bf16.msra.mxu0 %v1373
      %1432 = vmatprep.subr.bf16.mxu0 0
      %1433 = vmatpush1.bf16.msra.mxu0 %v1374
      %1434 = vmatprep.subr.bf16.mxu0 0
      %1435 = vmatpush1.bf16.msra.mxu0 %v1375
      %1436 = vmatprep.subr.bf16.mxu0 0
      %1437 = vmatpush1.bf16.msra.mxu0 %v1376
      %1438 = vmatprep.subr.bf16.mxu0 0
      %1439 = vmatpush1.bf16.msra.mxu0 %v1377
      %1440 = vmatprep.subr.bf16.mxu0 0
      %1441 = vmatpush1.bf16.msra.mxu0 %v1378
      %1442 = vmatprep.subr.bf16.mxu0 0
      %1443 = vmatpush1.bf16.msra.mxu0 %v1379
      %1444 = vmatprep.mubr.bf16.mxu0 %v1273
      %1445 = vmatmul.mubr.bf16.gmra.mrb[0].mxu0 %v1272
      %v1446 = vpop.f32.mrb[0].mxu0
      %v1447 = vadd.f32 %v1230, %v1446
      %v1448 = vpop.f32.mrb[0].mxu0
      %v1449 = vpop.f32.mrb[0].mxu0
      %v1450 = vadd.f32 %v1230, %v1449
      %v1451 = vpop.f32.mrb[0].mxu0
      %1452 = vmatprep.mubr.bf16.mxu0 %v1276
      %1453 = vmatmul.mubr.bf16.gmra.mrb[0].mxu0 %v1275
      %v1454 = vpop.f32.mrb[0].mxu0
      %v1455 = vadd.f32 %v1230, %v1454
      %v1456 = vpop.f32.mrb[0].mxu0
      %v1457 = vpop.f32.mrb[0].mxu0
      %v1458 = vadd.f32 %v1230, %v1457
      %v1459 = vpop.f32.mrb[0].mxu0
      %1460 = vmatprep.mubr.bf16.mxu0 %v1279
      %1461 = vmatmul.mubr.bf16.gmra.mrb[0].mxu0 %v1278
      %v1462 = vpop.f32.mrb[0].mxu0
      %v1463 = vadd.f32 %v1230, %v1462
      %v1464 = vpop.f32.mrb[0].mxu0
      %v1465 = vpop.f32.mrb[0].mxu0
      %v1466 = vadd.f32 %v1230, %v1465
      %v1467 = vpop.f32.mrb[0].mxu0
      %1468 = vmatprep.mubr.bf16.mxu0 %v1282
      %1469 = vmatmul.mubr.bf16.gmra.mrb[0].mxu0 %v1281
      %v1470 = vpop.f32.mrb[0].mxu0
      %v1471 = vadd.f32 %v1230, %v1470
      %v1472 = vpop.f32.mrb[0].mxu0
      %v1473 = vpop.f32.mrb[0].mxu0
      %v1474 = vadd.f32 %v1230, %v1473
      %v1475 = vpop.f32.mrb[0].mxu0
      %1476 = vdwg.mxu0
      %1477 = vmatprep.subr.bf16.mxu0 0
      %1478 = vmatpush1.bf16.msra.mxu0 %v1380
      %1479 = vmatprep.subr.bf16.mxu0 0
      %1480 = vmatpush1.bf16.msra.mxu0 %v1381
      %1481 = vmatprep.subr.bf16.mxu0 0
      %1482 = vmatpush1.bf16.msra.mxu0 0
      %1483 = vmatprep.subr.bf16.mxu0 0
      %1484 = vmatpush1.bf16.msra.mxu0 0
      %1485 = vmatprep.subr.bf16.mxu0 0
      %1486 = vmatpush1.bf16.msra.mxu0 0
      %1487 = vmatprep.subr.bf16.mxu0 0
      %1488 = vmatpush1.bf16.msra.mxu0 0
      %1489 = vmatprep.subr.bf16.mxu0 0
      %1490 = vmatpush1.bf16.msra.mxu0 0
      %1491 = vmatprep.subr.bf16.mxu0 0
      %1492 = vmatpush1.bf16.msra.mxu0 0
      %1493 = vmatprep.subr.bf16.mxu0 0
      %1494 = vmatpush1.bf16.msra.mxu0 0
      %1495 = vmatprep.subr.bf16.mxu0 0
      %1496 = vmatpush1.bf16.msra.mxu0 0
      %1497 = vmatprep.subr.bf16.mxu0 0
      %1498 = vmatpush1.bf16.msra.mxu0 0
      %1499 = vmatprep.subr.bf16.mxu0 0
      %1500 = vmatpush1.bf16.msra.mxu0 0
      %1501 = vmatprep.subr.bf16.mxu0 0
      %1502 = vmatpush1.bf16.msra.mxu0 0
      %1503 = vmatprep.subr.bf16.mxu0 0
      %1504 = vmatpush1.bf16.msra.mxu0 0
      %1505 = vmatprep.subr.bf16.mxu0 0
      %1506 = vmatpush1.bf16.msra.mxu0 0
      %1507 = vmatprep.subr.bf16.mxu0 0
      %1508 = vmatpush1.bf16.msra.mxu0 0
      %1509 = vmatprep.mubr.bf16.mxu0 0
      %1510 = vmatmul.mubr.bf16.gmra.mrb[0].mxu0 %v1401
      %v1511 = vpop.f32.mrb[0].mxu0
      %v1512 = vadd.f32 %v1447, %v1511
      %v1513 = vpop.f32.mrb[0].mxu0
      %v1514 = vpop.f32.mrb[0].mxu0
      %v1515 = vadd.f32 %v1450, %v1514
      %v1516 = vpop.f32.mrb[0].mxu0
      %1517 = vmatprep.mubr.bf16.mxu0 0
      %1518 = vmatmul.mubr.bf16.gmra.mrb[0].mxu0 %v1404
      %v1519 = vpop.f32.mrb[0].mxu0
      %v1520 = vadd.f32 %v1455, %v1519
      %v1521 = vpop.f32.mrb[0].mxu0
      %v1522 = vpop.f32.mrb[0].mxu0
      %v1523 = vadd.f32 %v1458, %v1522
      %v1524 = vpop.f32.mrb[0].mxu0
      %1525 = vmatprep.mubr.bf16.mxu0 0
      %1526 = vmatmul.mubr.bf16.gmra.mrb[0].mxu0 %v1407
      %v1527 = vpop.f32.mrb[0].mxu0
      %v1528 = vadd.f32 %v1463, %v1527
      %v1529 = vpop.f32.mrb[0].mxu0
      %v1530 = vpop.f32.mrb[0].mxu0
      %v1531 = vadd.f32 %v1466, %v1530
      %v1532 = vpop.f32.mrb[0].mxu0
      %1533 = vmatprep.mubr.bf16.mxu0 0
      %1534 = vmatmul.mubr.bf16.gmra.mrb[0].mxu0 %v1410
      %v1535 = vpop.f32.mrb[0].mxu0
      %v1536 = vadd.f32 %v1471, %v1535
      %v1537 = vpop.f32.mrb[0].mxu0
      %v1538 = vpop.f32.mrb[0].mxu0
      %v1539 = vadd.f32 %v1474, %v1538
      %v1540 = vpop.f32.mrb[0].mxu0
      %1541 = vdwg.mxu0
      %v1542 = vmax.f32 %v1512, 0.0
      %v1543 = vmax.f32 %v1515, 0.0
      %v1544 = vmax.f32 %v1520, 0.0
      %v1545 = vmax.f32 %v1523, 0.0
      %v1546 = vmax.f32 %v1528, 0.0
      %v1547 = vmax.f32 %v1531, 0.0
      %v1548 = vmax.f32 %v1536, 0.0
      %v1549 = vmax.f32 %v1539, 0.0
      %v1550 = vpack.c.bf16 %v1166, %v1165
      %v1551 = vpack.c.bf16 %v1168, %v1167
      %v1552 = vpack.c.bf16 %v1170, %v1169
      %v1553 = vpack.c.bf16 %v1172, %v1171
      %v1554 = vld [vmem:[%s8] sm:$0xf]
      %v1555 = vld [vmem:[%s8 + $0x4] sm:$0xf]
      %v1556 = vld [vmem:[%s8 + $0x8] sm:$0xf]
      %v1557 = vld [vmem:[%s8 + $0xc] sm:$0xf]
      %v1562 = vunpack.c.l.b16 %v1554
      %v1563 = vunpack.c.l.b16 %v1555
      %v1564 = vunpack.c.l.b16 %v1556
      %v1565 = vunpack.c.l.b16 %v1557
      %v1566 = vpack.c.b16 %v1563, %v1562
      %v1567 = vpack.c.b16 %v1565, %v1564
      %v1571 = vsel %vm445, %v1550, 0
      %v1574 = vsel %vm445, %v1551, 0
      %v1577 = vsel %vm445, %v1552, 0
      %v1580 = vsel %vm445, %v1553, 0
      %1582 = vmatprep.subr.bf16.mxu0 0
      %1583 = vmatpush1.bf16.msra.mxu0 %v1566
      %1584 = vmatprep.subr.bf16.mxu0 0
      %1585 = vmatpush1.bf16.msra.mxu0 %v1567
      %1586 = vmatprep.subr.bf16.mxu0 0
      %1587 = vmatpush1.bf16.msra.mxu0 0
      %1588 = vmatprep.subr.bf16.mxu0 0
      %1589 = vmatpush1.bf16.msra.mxu0 0
      %1590 = vmatprep.subr.bf16.mxu0 0
      %1591 = vmatpush1.bf16.msra.mxu0 0
      %1592 = vmatprep.subr.bf16.mxu0 0
      %1593 = vmatpush1.bf16.msra.mxu0 0
      %1594 = vmatprep.subr.bf16.mxu0 0
      %1595 = vmatpush1.bf16.msra.mxu0 0
      %1596 = vmatprep.subr.bf16.mxu0 0
      %1597 = vmatpush1.bf16.msra.mxu0 0
      %1598 = vmatprep.subr.bf16.mxu0 0
      %1599 = vmatpush1.bf16.msra.mxu0 0
      %1600 = vmatprep.subr.bf16.mxu0 0
      %1601 = vmatpush1.bf16.msra.mxu0 0
      %1602 = vmatprep.subr.bf16.mxu0 0
      %1603 = vmatpush1.bf16.msra.mxu0 0
      %1604 = vmatprep.subr.bf16.mxu0 0
      %1605 = vmatpush1.bf16.msra.mxu0 0
      %1606 = vmatprep.subr.bf16.mxu0 0
      %1607 = vmatpush1.bf16.msra.mxu0 0
      %1608 = vmatprep.subr.bf16.mxu0 0
      %1609 = vmatpush1.bf16.msra.mxu0 0
      %1610 = vmatprep.subr.bf16.mxu0 0
      %1611 = vmatpush1.bf16.msra.mxu0 0
      %1612 = vmatprep.subr.bf16.mxu0 0
      %1613 = vmatpush1.bf16.msra.mxu0 0
      %1614 = vmatprep.mubr.bf16.mxu0 0
      %1615 = vmatmul.mubr.bf16.gmra.mrb[0].mxu0 %v1571
      %v1616 = vpop.f32.mrb[0].mxu0
      %v1617 = vadd.f32 0.0, %v1616
      %v1618 = vpop.f32.mrb[0].mxu0
      %v1619 = vpop.f32.mrb[0].mxu0
      %v1620 = vadd.f32 0.0, %v1619
      %v1621 = vpop.f32.mrb[0].mxu0
      %1622 = vmatprep.mubr.bf16.mxu0 0
      %1623 = vmatmul.mubr.bf16.gmra.mrb[0].mxu0 %v1574
      %v1624 = vpop.f32.mrb[0].mxu0
      %v1625 = vadd.f32 0.0, %v1624
      %v1626 = vpop.f32.mrb[0].mxu0
      %v1627 = vpop.f32.mrb[0].mxu0
      %v1628 = vadd.f32 0.0, %v1627
      %v1629 = vpop.f32.mrb[0].mxu0
      %1630 = vmatprep.mubr.bf16.mxu0 0
      %1631 = vmatmul.mubr.bf16.gmra.mrb[0].mxu0 %v1577
      %v1632 = vpop.f32.mrb[0].mxu0
      %v1633 = vadd.f32 0.0, %v1632
      %v1634 = vpop.f32.mrb[0].mxu0
      %v1635 = vpop.f32.mrb[0].mxu0
      %v1636 = vadd.f32 0.0, %v1635
      %v1637 = vpop.f32.mrb[0].mxu0
      %1638 = vmatprep.mubr.bf16.mxu0 0
      %1639 = vmatmul.mubr.bf16.gmra.mrb[0].mxu0 %v1580
      %v1640 = vpop.f32.mrb[0].mxu0
      %v1641 = vadd.f32 0.0, %v1640
      %v1642 = vpop.f32.mrb[0].mxu0
      %v1643 = vpop.f32.mrb[0].mxu0
      %v1644 = vadd.f32 0.0, %v1643
      %v1645 = vpop.f32.mrb[0].mxu0
      %1646 = vdwg.mxu0
      %vm1647 = vcmask 523264
      %1648 = vst.msk [vmem:[#allocation4] sm:$0xff] %vm1647, 0.0
      %vm1649 = vcmask 517120
      %1650 = vst.msk [vmem:[#allocation4 + $0x8] sm:$0x3] %vm1649, 0.0
      %s1651 = scalar_lea.vmem [#allocation4], 144
      %1652 = vst.msk [vmem:[%s1651] sm:$0xff] %vm1647, 0.0
      %1653 = vst.msk [vmem:[%s1651 + $0x8] sm:$0x3] %vm1649, 0.0
      %vm1654 = vcmask 516096
      %1655 = vst.msk [vmem:[#allocation4] sm:$0x1] %vm1654, 0.0
      %1656 = vst.msk [vmem:[#allocation4 + $0x10] sm:$0x1] %vm1654, 0.0
      %1657 = vst.msk [vmem:[#allocation4 + $0x20] sm:$0x1] %vm1654, 0.0
      %1658 = vst.msk [vmem:[#allocation4 + $0x30] sm:$0x1] %vm1654, 0.0
      %1659 = vst.msk [vmem:[#allocation4 + $0x40] sm:$0x1] %vm1654, 0.0
      %1660 = vst.msk [vmem:[#allocation4 + $0x50] sm:$0x1] %vm1654, 0.0
      %1661 = vst.msk [vmem:[#allocation4 + $0x60] sm:$0x1] %vm1654, 0.0
      %1662 = vst.msk [vmem:[#allocation4 + $0x70] sm:$0x1] %vm1654, 0.0
      %1663 = vst.msk [vmem:[#allocation4 + $0x80] sm:$0x1] %vm1654, 0.0
      %1664 = vst.msk [vmem:[#allocation4 + $0x90] sm:$0x1] %vm1654, 0.0
      %1665 = vst.msk [vmem:[#allocation4 + $0x9] sm:$0x1] %vm1654, 0.0
      %1666 = vst.msk [vmem:[#allocation4 + $0x19] sm:$0x1] %vm1654, 0.0
      %1667 = vst.msk [vmem:[#allocation4 + $0x29] sm:$0x1] %vm1654, 0.0
      %1668 = vst.msk [vmem:[#allocation4 + $0x39] sm:$0x1] %vm1654, 0.0
      %1669 = vst.msk [vmem:[#allocation4 + $0x49] sm:$0x1] %vm1654, 0.0
      %1670 = vst.msk [vmem:[#allocation4 + $0x59] sm:$0x1] %vm1654, 0.0
      %1671 = vst.msk [vmem:[#allocation4 + $0x69] sm:$0x1] %vm1654, 0.0
      %1672 = vst.msk [vmem:[#allocation4 + $0x79] sm:$0x1] %vm1654, 0.0
      %1673 = vst.msk [vmem:[#allocation4 + $0x89] sm:$0x1] %vm1654, 0.0
      %1674 = vst.msk [vmem:[#allocation4 + $0x99] sm:$0x1] %vm1654, 0.0
      %s1675 = scalar_lea.vmem [#allocation4], 16
      %1676 = vst.msk [vmem:[%s1675 + $0x1] sm:$0xff] %vm1647, %v1542
      %1677 = vst.msk [vmem:[%s1675 + $0x11] sm:$0xff] %vm1647, %v1543
      %1678 = vst.msk [vmem:[%s1675 + $0x21] sm:$0xff] %vm1647, %v1544
      %1679 = vst.msk [vmem:[%s1675 + $0x31] sm:$0xff] %vm1647, %v1545
      %1680 = vst.msk [vmem:[%s1675 + $0x41] sm:$0xff] %vm1647, %v1546
      %1681 = vst.msk [vmem:[%s1675 + $0x51] sm:$0xff] %vm1647, %v1547
      %1682 = vst.msk [vmem:[%s1675 + $0x61] sm:$0xff] %vm1647, %v1548
      %1683 = vst.msk [vmem:[%s1675 + $0x71] sm:$0xff] %vm1647, %v1549
      %v1684 = vld [vmem:[#allocation4] sm:$0xff]
      %v1685 = vld [vmem:[#allocation4 + $0x10] sm:$0xff]
      %v1686 = vld [vmem:[#allocation4 + $0x20] sm:$0xff]
      %v1687 = vld [vmem:[#allocation4 + $0x30] sm:$0xff]
      %v1688 = vld [vmem:[#allocation4 + $0x40] sm:$0xff]
      %v1689 = vld [vmem:[#allocation4 + $0x50] sm:$0xff]
      %v1690 = vld [vmem:[#allocation4 + $0x60] sm:$0xff]
      %v1691 = vld [vmem:[#allocation4 + $0x70] sm:$0xff]
      %v1692 = vpack.c.bf16 %v1684, %v1684
      %v1693 = vpack.c.bf16 %v1685, %v1685
      %v1694 = vpack.c.bf16 %v1686, %v1686
      %v1695 = vpack.c.bf16 %v1687, %v1687
      %v1696 = vpack.c.bf16 %v1688, %v1688
      %v1697 = vpack.c.bf16 %v1689, %v1689
      %v1698 = vpack.c.bf16 %v1690, %v1690
      %v1699 = vpack.c.bf16 %v1691, %v1691
      %vm1700 = vcmask 519168
      %1701 = vst.msk [vmem:[#allocation5] sm:$0xf] %vm1700, %v1692
      %1702 = vst.msk [vmem:[#allocation5 + $0x14] sm:$0xf] %vm1700, %v1693
      %1703 = vst.msk [vmem:[#allocation5 + $0x28] sm:$0xf] %vm1700, %v1694
      %1704 = vst.msk [vmem:[#allocation5 + $0x3c] sm:$0xf] %vm1700, %v1695
      %1705 = vst.msk [vmem:[#allocation5 + $0x50] sm:$0xf] %vm1700, %v1696
      %1706 = vst.msk [vmem:[#allocation5 + $0x64] sm:$0xf] %vm1700, %v1697
      %1707 = vst.msk [vmem:[#allocation5 + $0x78] sm:$0xf] %vm1700, %v1698
      %1708 = vst.msk [vmem:[#allocation5 + $0x8c] sm:$0xf] %vm1700, %v1699
      %v1709 = vld [vmem:[#allocation4 + $0x1] sm:$0xff]
      %v1710 = vld [vmem:[#allocation4 + $0x11] sm:$0xff]
      %v1711 = vld [vmem:[#allocation4 + $0x21] sm:$0xff]
      %v1712 = vld [vmem:[#allocation4 + $0x31] sm:$0xff]
      %v1713 = vld [vmem:[#allocation4 + $0x41] sm:$0xff]
      %v1714 = vld [vmem:[#allocation4 + $0x51] sm:$0xff]
      %v1715 = vld [vmem:[#allocation4 + $0x61] sm:$0xff]
      %v1716 = vld [vmem:[#allocation4 + $0x71] sm:$0xff]
      %v1717 = vpack.c.bf16 %v1709, %v1709
      %v1718 = vpack.c.bf16 %v1710, %v1710
      %v1719 = vpack.c.bf16 %v1711, %v1711
      %v1720 = vpack.c.bf16 %v1712, %v1712
      %v1721 = vpack.c.bf16 %v1713, %v1713
      %v1722 = vpack.c.bf16 %v1714, %v1714
      %v1723 = vpack.c.bf16 %v1715, %v1715
      %v1724 = vpack.c.bf16 %v1716, %v1716
      %v1733 = vunpack.c.l.b16 %v1717
      %v1734 = vunpack.c.l.b16 %v1718
      %v1735 = vunpack.c.l.b16 %v1719
      %v1736 = vunpack.c.l.b16 %v1720
      %v1737 = vunpack.c.l.b16 %v1721
      %v1738 = vunpack.c.l.b16 %v1722
      %v1739 = vunpack.c.l.b16 %v1723
      %v1740 = vunpack.c.l.b16 %v1724
      %v1741 = vpack.c.b16 %v1733, %v1733
      %v1742 = vpack.c.b16 %v1734, %v1734
      %v1743 = vpack.c.b16 %v1735, %v1735
      %v1744 = vpack.c.b16 %v1736, %v1736
      %v1745 = vpack.c.b16 %v1737, %v1737
      %v1746 = vpack.c.b16 %v1738, %v1738
      %v1747 = vpack.c.b16 %v1739, %v1739
      %v1748 = vpack.c.b16 %v1740, %v1740
      %1749 = vrot.lane.b32.xlu0 %v1741, 64
      %v1750 = vpop.permute.xlu0 %1749
      %1751 = vrot.lane.b32.xlu0 %v1742, 64
      %v1752 = vpop.permute.xlu0 %1751
      %1753 = vrot.lane.b32.xlu0 %v1743, 64
      %v1754 = vpop.permute.xlu0 %1753
      %1755 = vrot.lane.b32.xlu0 %v1744, 64
      %v1756 = vpop.permute.xlu0 %1755
      %1757 = vrot.lane.b32.xlu0 %v1745, 64
      %v1758 = vpop.permute.xlu0 %1757
      %1759 = vrot.lane.b32.xlu0 %v1746, 64
      %v1760 = vpop.permute.xlu0 %1759
      %1761 = vrot.lane.b32.xlu0 %v1747, 64
      %v1762 = vpop.permute.xlu0 %1761
      %1763 = vrot.lane.b32.xlu0 %v1748, 64
      %v1764 = vpop.permute.xlu0 %1763
      %vm1773 = vcmask 1043968
      %1774 = vst.msk [vmem:[#allocation5] sm:$0xf] %vm1773, %v1750
      %1775 = vst.msk [vmem:[#allocation5 + $0x14] sm:$0xf] %vm1773, %v1752
      %1776 = vst.msk [vmem:[#allocation5 + $0x28] sm:$0xf] %vm1773, %v1754
      %1777 = vst.msk [vmem:[#allocation5 + $0x3c] sm:$0xf] %vm1773, %v1756
      %1778 = vst.msk [vmem:[#allocation5 + $0x50] sm:$0xf] %vm1773, %v1758
      %1779 = vst.msk [vmem:[#allocation5 + $0x64] sm:$0xf] %vm1773, %v1760
      %1780 = vst.msk [vmem:[#allocation5 + $0x78] sm:$0xf] %vm1773, %v1762
      %1781 = vst.msk [vmem:[#allocation5 + $0x8c] sm:$0xf] %vm1773, %v1764
      %v1782 = vld [vmem:[#allocation4 + $0x2] sm:$0xff]
      %v1783 = vld [vmem:[#allocation4 + $0x12] sm:$0xff]
      %v1784 = vld [vmem:[#allocation4 + $0x22] sm:$0xff]
      %v1785 = vld [vmem:[#allocation4 + $0x32] sm:$0xff]
      %v1786 = vld [vmem:[#allocation4 + $0x42] sm:$0xff]
      %v1787 = vld [vmem:[#allocation4 + $0x52] sm:$0xff]
      %v1788 = vld [vmem:[#allocation4 + $0x62] sm:$0xff]
      %v1789 = vld [vmem:[#allocation4 + $0x72] sm:$0xff]
      %v1790 = vpack.c.bf16 %v1782, %v1782
      %v1791 = vpack.c.bf16 %v1783, %v1783
      %v1792 = vpack.c.bf16 %v1784, %v1784
      %v1793 = vpack.c.bf16 %v1785, %v1785
      %v1794 = vpack.c.bf16 %v1786, %v1786
      %v1795 = vpack.c.bf16 %v1787, %v1787
      %v1796 = vpack.c.bf16 %v1788, %v1788
      %v1797 = vpack.c.bf16 %v1789, %v1789
      %1798 = vst.msk [vmem:[#allocation5 + $0x4] sm:$0xf] %vm1700, %v1790
      %1799 = vst.msk [vmem:[#allocation5 + $0x18] sm:$0xf] %vm1700, %v1791
      %1800 = vst.msk [vmem:[#allocation5 + $0x2c] sm:$0xf] %vm1700, %v1792
      %1801 = vst.msk [vmem:[#allocation5 + $0x40] sm:$0xf] %vm1700, %v1793
      %1802 = vst.msk [vmem:[#allocation5 + $0x54] sm:$0xf] %vm1700, %v1794
      %1803 = vst.msk [vmem:[#allocation5 + $0x68] sm:$0xf] %vm1700, %v1795
      %1804 = vst.msk [vmem:[#allocation5 + $0x7c] sm:$0xf] %vm1700, %v1796
      %1805 = vst.msk [vmem:[#allocation5 + $0x90] sm:$0xf] %vm1700, %v1797
      %v1806 = vld [vmem:[%s1675] sm:$0xff]
      %v1807 = vld [vmem:[%s1675 + $0x10] sm:$0xff]
      %v1808 = vld [vmem:[%s1675 + $0x20] sm:$0xff]
      %v1809 = vld [vmem:[%s1675 + $0x30] sm:$0xff]
      %v1810 = vld [vmem:[%s1675 + $0x40] sm:$0xff]
      %v1811 = vld [vmem:[%s1675 + $0x50] sm:$0xff]
      %v1812 = vld [vmem:[%s1675 + $0x60] sm:$0xff]
      %v1813 = vld [vmem:[%s1675 + $0x70] sm:$0xff]
      %v1814 = vpack.c.bf16 %v1806, %v1806
      %v1815 = vpack.c.bf16 %v1807, %v1807
      %v1816 = vpack.c.bf16 %v1808, %v1808
      %v1817 = vpack.c.bf16 %v1809, %v1809
      %v1818 = vpack.c.bf16 %v1810, %v1810
      %v1819 = vpack.c.bf16 %v1811, %v1811
      %v1820 = vpack.c.bf16 %v1812, %v1812
      %v1821 = vpack.c.bf16 %v1813, %v1813
      %v1830 = vunpack.c.l.b16 %v1814
      %v1831 = vunpack.c.l.b16 %v1815
      %v1832 = vunpack.c.l.b16 %v1816
      %v1833 = vunpack.c.l.b16 %v1817
      %v1834 = vunpack.c.l.b16 %v1818
      %v1835 = vunpack.c.l.b16 %v1819
      %v1836 = vunpack.c.l.b16 %v1820
      %v1837 = vunpack.c.l.b16 %v1821
      %v1838 = vpack.c.b16 %v1830, %v1830
      %v1839 = vpack.c.b16 %v1831, %v1831
      %v1840 = vpack.c.b16 %v1832, %v1832
      %v1841 = vpack.c.b16 %v1833, %v1833
      %v1842 = vpack.c.b16 %v1834, %v1834
      %v1843 = vpack.c.b16 %v1835, %v1835
      %v1844 = vpack.c.b16 %v1836, %v1836
      %v1845 = vpack.c.b16 %v1837, %v1837
      %1846 = vrot.lane.b32.xlu0 %v1838, 64
      %v1847 = vpop.permute.xlu0 %1846
      %1848 = vrot.lane.b32.xlu0 %v1839, 64
      %v1849 = vpop.permute.xlu0 %1848
      %1850 = vrot.lane.b32.xlu0 %v1840, 64
      %v1851 = vpop.permute.xlu0 %1850
      %1852 = vrot.lane.b32.xlu0 %v1841, 64
      %v1853 = vpop.permute.xlu0 %1852
      %1854 = vrot.lane.b32.xlu0 %v1842, 64
      %v1855 = vpop.permute.xlu0 %1854
      %1856 = vrot.lane.b32.xlu0 %v1843, 64
      %v1857 = vpop.permute.xlu0 %1856
      %1858 = vrot.lane.b32.xlu0 %v1844, 64
      %v1859 = vpop.permute.xlu0 %1858
      %1860 = vrot.lane.b32.xlu0 %v1845, 64
      %v1861 = vpop.permute.xlu0 %1860
      %1870 = vst.msk [vmem:[#allocation5 + $0x4] sm:$0xf] %vm1773, %v1847
      %1871 = vst.msk [vmem:[#allocation5 + $0x18] sm:$0xf] %vm1773, %v1849
      %1872 = vst.msk [vmem:[#allocation5 + $0x2c] sm:$0xf] %vm1773, %v1851
      %1873 = vst.msk [vmem:[#allocation5 + $0x40] sm:$0xf] %vm1773, %v1853
      %1874 = vst.msk [vmem:[#allocation5 + $0x54] sm:$0xf] %vm1773, %v1855
      %1875 = vst.msk [vmem:[#allocation5 + $0x68] sm:$0xf] %vm1773, %v1857
      %1876 = vst.msk [vmem:[#allocation5 + $0x7c] sm:$0xf] %vm1773, %v1859
      %1877 = vst.msk [vmem:[#allocation5 + $0x90] sm:$0xf] %vm1773, %v1861
      %v1878 = vld [vmem:[%s1675 + $0x1] sm:$0xff]
      %v1879 = vld [vmem:[%s1675 + $0x11] sm:$0xff]
      %v1880 = vld [vmem:[%s1675 + $0x21] sm:$0xff]
      %v1881 = vld [vmem:[%s1675 + $0x31] sm:$0xff]
      %v1882 = vld [vmem:[%s1675 + $0x41] sm:$0xff]
      %v1883 = vld [vmem:[%s1675 + $0x51] sm:$0xff]
      %v1884 = vld [vmem:[%s1675 + $0x61] sm:$0xff]
      %v1885 = vld [vmem:[%s1675 + $0x71] sm:$0xff]
      %v1886 = vpack.c.bf16 %v1878, %v1878
      %v1887 = vpack.c.bf16 %v1879, %v1879
      %v1888 = vpack.c.bf16 %v1880, %v1880
      %v1889 = vpack.c.bf16 %v1881, %v1881
      %v1890 = vpack.c.bf16 %v1882, %v1882
      %v1891 = vpack.c.bf16 %v1883, %v1883
      %v1892 = vpack.c.bf16 %v1884, %v1884
      %v1893 = vpack.c.bf16 %v1885, %v1885
      %1894 = vst.msk [vmem:[#allocation5 + $0x8] sm:$0xf] %vm1700, %v1886
      %1895 = vst.msk [vmem:[#allocation5 + $0x1c] sm:$0xf] %vm1700, %v1887
      %1896 = vst.msk [vmem:[#allocation5 + $0x30] sm:$0xf] %vm1700, %v1888
      %1897 = vst.msk [vmem:[#allocation5 + $0x44] sm:$0xf] %vm1700, %v1889
      %1898 = vst.msk [vmem:[#allocation5 + $0x58] sm:$0xf] %vm1700, %v1890
      %1899 = vst.msk [vmem:[#allocation5 + $0x6c] sm:$0xf] %vm1700, %v1891
      %1900 = vst.msk [vmem:[#allocation5 + $0x80] sm:$0xf] %vm1700, %v1892
      %1901 = vst.msk [vmem:[#allocation5 + $0x94] sm:$0xf] %vm1700, %v1893
      %v1902 = vld [vmem:[%s1675 + $0x2] sm:$0xff]
      %v1903 = vld [vmem:[%s1675 + $0x12] sm:$0xff]
      %v1904 = vld [vmem:[%s1675 + $0x22] sm:$0xff]
      %v1905 = vld [vmem:[%s1675 + $0x32] sm:$0xff]
      %v1906 = vld [vmem:[%s1675 + $0x42] sm:$0xff]
      %v1907 = vld [vmem:[%s1675 + $0x52] sm:$0xff]
      %v1908 = vld [vmem:[%s1675 + $0x62] sm:$0xff]
      %v1909 = vld [vmem:[%s1675 + $0x72] sm:$0xff]
      %v1910 = vpack.c.bf16 %v1902, %v1902
      %v1911 = vpack.c.bf16 %v1903, %v1903
      %v1912 = vpack.c.bf16 %v1904, %v1904
      %v1913 = vpack.c.bf16 %v1905, %v1905
      %v1914 = vpack.c.bf16 %v1906, %v1906
      %v1915 = vpack.c.bf16 %v1907, %v1907
      %v1916 = vpack.c.bf16 %v1908, %v1908
      %v1917 = vpack.c.bf16 %v1909, %v1909
      %v1926 = vunpack.c.l.b16 %v1910
      %v1927 = vunpack.c.l.b16 %v1911
      %v1928 = vunpack.c.l.b16 %v1912
      %v1929 = vunpack.c.l.b16 %v1913
      %v1930 = vunpack.c.l.b16 %v1914
      %v1931 = vunpack.c.l.b16 %v1915
      %v1932 = vunpack.c.l.b16 %v1916
      %v1933 = vunpack.c.l.b16 %v1917
      %v1934 = vpack.c.b16 %v1926, %v1926
      %v1935 = vpack.c.b16 %v1927, %v1927
      %v1936 = vpack.c.b16 %v1928, %v1928
      %v1937 = vpack.c.b16 %v1929, %v1929
      %v1938 = vpack.c.b16 %v1930, %v1930
      %v1939 = vpack.c.b16 %v1931, %v1931
      %v1940 = vpack.c.b16 %v1932, %v1932
      %v1941 = vpack.c.b16 %v1933, %v1933
      %1942 = vrot.lane.b32.xlu0 %v1934, 64
      %v1943 = vpop.permute.xlu0 %1942
      %1944 = vrot.lane.b32.xlu0 %v1935, 64
      %v1945 = vpop.permute.xlu0 %1944
      %1946 = vrot.lane.b32.xlu0 %v1936, 64
      %v1947 = vpop.permute.xlu0 %1946
      %1948 = vrot.lane.b32.xlu0 %v1937, 64
      %v1949 = vpop.permute.xlu0 %1948
      %1950 = vrot.lane.b32.xlu0 %v1938, 64
      %v1951 = vpop.permute.xlu0 %1950
      %1952 = vrot.lane.b32.xlu0 %v1939, 64
      %v1953 = vpop.permute.xlu0 %1952
      %1954 = vrot.lane.b32.xlu0 %v1940, 64
      %v1955 = vpop.permute.xlu0 %1954
      %1956 = vrot.lane.b32.xlu0 %v1941, 64
      %v1957 = vpop.permute.xlu0 %1956
      %1966 = vst.msk [vmem:[#allocation5 + $0x8] sm:$0xf] %vm1773, %v1943
      %1967 = vst.msk [vmem:[#allocation5 + $0x1c] sm:$0xf] %vm1773, %v1945
      %1968 = vst.msk [vmem:[#allocation5 + $0x30] sm:$0xf] %vm1773, %v1947
      %1969 = vst.msk [vmem:[#allocation5 + $0x44] sm:$0xf] %vm1773, %v1949
      %1970 = vst.msk [vmem:[#allocation5 + $0x58] sm:$0xf] %vm1773, %v1951
      %1971 = vst.msk [vmem:[#allocation5 + $0x6c] sm:$0xf] %vm1773, %v1953
      %1972 = vst.msk [vmem:[#allocation5 + $0x80] sm:$0xf] %vm1773, %v1955
      %1973 = vst.msk [vmem:[#allocation5 + $0x94] sm:$0xf] %vm1773, %v1957
      %s1974 = scalar_lea.vmem [#allocation4], 32
      %v1975 = vld [vmem:[%s1974] sm:$0xff]
      %v1976 = vld [vmem:[%s1974 + $0x10] sm:$0xff]
      %v1977 = vld [vmem:[%s1974 + $0x20] sm:$0xff]
      %v1978 = vld [vmem:[%s1974 + $0x30] sm:$0xff]
      %v1979 = vld [vmem:[%s1974 + $0x40] sm:$0xff]
      %v1980 = vld [vmem:[%s1974 + $0x50] sm:$0xff]
      %v1981 = vld [vmem:[%s1974 + $0x60] sm:$0xff]
      %v1982 = vld [vmem:[%s1974 + $0x70] sm:$0xff]
      %v1983 = vpack.c.bf16 %v1975, %v1975
      %v1984 = vpack.c.bf16 %v1976, %v1976
      %v1985 = vpack.c.bf16 %v1977, %v1977
      %v1986 = vpack.c.bf16 %v1978, %v1978
      %v1987 = vpack.c.bf16 %v1979, %v1979
      %v1988 = vpack.c.bf16 %v1980, %v1980
      %v1989 = vpack.c.bf16 %v1981, %v1981
      %v1990 = vpack.c.bf16 %v1982, %v1982
      %1991 = vst.msk [vmem:[#allocation5 + $0xc] sm:$0xf] %vm1700, %v1983
      %1992 = vst.msk [vmem:[#allocation5 + $0x20] sm:$0xf] %vm1700, %v1984
      %1993 = vst.msk [vmem:[#allocation5 + $0x34] sm:$0xf] %vm1700, %v1985
      %1994 = vst.msk [vmem:[#allocation5 + $0x48] sm:$0xf] %vm1700, %v1986
      %1995 = vst.msk [vmem:[#allocation5 + $0x5c] sm:$0xf] %vm1700, %v1987
      %1996 = vst.msk [vmem:[#allocation5 + $0x70] sm:$0xf] %vm1700, %v1988
      %1997 = vst.msk [vmem:[#allocation5 + $0x84] sm:$0xf] %vm1700, %v1989
      %1998 = vst.msk [vmem:[#allocation5 + $0x98] sm:$0xf] %vm1700, %v1990
      %v1999 = vld [vmem:[%s1974 + $0x1] sm:$0xff]
      %v2000 = vld [vmem:[%s1974 + $0x11] sm:$0xff]
      %v2001 = vld [vmem:[%s1974 + $0x21] sm:$0xff]
      %v2002 = vld [vmem:[%s1974 + $0x31] sm:$0xff]
      %v2003 = vld [vmem:[%s1974 + $0x41] sm:$0xff]
      %v2004 = vld [vmem:[%s1974 + $0x51] sm:$0xff]
      %v2005 = vld [vmem:[%s1974 + $0x61] sm:$0xff]
      %v2006 = vld [vmem:[%s1974 + $0x71] sm:$0xff]
      %v2007 = vpack.c.bf16 %v1999, %v1999
      %v2008 = vpack.c.bf16 %v2000, %v2000
      %v2009 = vpack.c.bf16 %v2001, %v2001
      %v2010 = vpack.c.bf16 %v2002, %v2002
      %v2011 = vpack.c.bf16 %v2003, %v2003
      %v2012 = vpack.c.bf16 %v2004, %v2004
      %v2013 = vpack.c.bf16 %v2005, %v2005
      %v2014 = vpack.c.bf16 %v2006, %v2006
      %v2023 = vunpack.c.l.b16 %v2007
      %v2024 = vunpack.c.l.b16 %v2008
      %v2025 = vunpack.c.l.b16 %v2009
      %v2026 = vunpack.c.l.b16 %v2010
      %v2027 = vunpack.c.l.b16 %v2011
      %v2028 = vunpack.c.l.b16 %v2012
      %v2029 = vunpack.c.l.b16 %v2013
      %v2030 = vunpack.c.l.b16 %v2014
      %v2031 = vpack.c.b16 %v2023, %v2023
      %v2032 = vpack.c.b16 %v2024, %v2024
      %v2033 = vpack.c.b16 %v2025, %v2025
      %v2034 = vpack.c.b16 %v2026, %v2026
      %v2035 = vpack.c.b16 %v2027, %v2027
      %v2036 = vpack.c.b16 %v2028, %v2028
      %v2037 = vpack.c.b16 %v2029, %v2029
      %v2038 = vpack.c.b16 %v2030, %v2030
      %2039 = vrot.lane.b32.xlu0 %v2031, 64
      %v2040 = vpop.permute.xlu0 %2039
      %2041 = vrot.lane.b32.xlu0 %v2032, 64
      %v2042 = vpop.permute.xlu0 %2041
      %2043 = vrot.lane.b32.xlu0 %v2033, 64
      %v2044 = vpop.permute.xlu0 %2043
      %2045 = vrot.lane.b32.xlu0 %v2034, 64
      %v2046 = vpop.permute.xlu0 %2045
      %2047 = vrot.lane.b32.xlu0 %v2035, 64
      %v2048 = vpop.permute.xlu0 %2047
      %2049 = vrot.lane.b32.xlu0 %v2036, 64
      %v2050 = vpop.permute.xlu0 %2049
      %2051 = vrot.lane.b32.xlu0 %v2037, 64
      %v2052 = vpop.permute.xlu0 %2051
      %2053 = vrot.lane.b32.xlu0 %v2038, 64
      %v2054 = vpop.permute.xlu0 %2053
      %2063 = vst.msk [vmem:[#allocation5 + $0xc] sm:$0xf] %vm1773, %v2040
      %2064 = vst.msk [vmem:[#allocation5 + $0x20] sm:$0xf] %vm1773, %v2042
      %2065 = vst.msk [vmem:[#allocation5 + $0x34] sm:$0xf] %vm1773, %v2044
      %2066 = vst.msk [vmem:[#allocation5 + $0x48] sm:$0xf] %vm1773, %v2046
      %2067 = vst.msk [vmem:[#allocation5 + $0x5c] sm:$0xf] %vm1773, %v2048
      %2068 = vst.msk [vmem:[#allocation5 + $0x70] sm:$0xf] %vm1773, %v2050
      %2069 = vst.msk [vmem:[#allocation5 + $0x84] sm:$0xf] %vm1773, %v2052
      %2070 = vst.msk [vmem:[#allocation5 + $0x98] sm:$0xf] %vm1773, %v2054
      %v2071 = vld [vmem:[%s1974 + $0x2] sm:$0xff]
      %v2072 = vld [vmem:[%s1974 + $0x12] sm:$0xff]
      %v2073 = vld [vmem:[%s1974 + $0x22] sm:$0xff]
      %v2074 = vld [vmem:[%s1974 + $0x32] sm:$0xff]
      %v2075 = vld [vmem:[%s1974 + $0x42] sm:$0xff]
      %v2076 = vld [vmem:[%s1974 + $0x52] sm:$0xff]
      %v2077 = vld [vmem:[%s1974 + $0x62] sm:$0xff]
      %v2078 = vld [vmem:[%s1974 + $0x72] sm:$0xff]
      %v2079 = vpack.c.bf16 %v2071, %v2071
      %v2080 = vpack.c.bf16 %v2072, %v2072
      %v2081 = vpack.c.bf16 %v2073, %v2073
      %v2082 = vpack.c.bf16 %v2074, %v2074
      %v2083 = vpack.c.bf16 %v2075, %v2075
      %v2084 = vpack.c.bf16 %v2076, %v2076
      %v2085 = vpack.c.bf16 %v2077, %v2077
      %v2086 = vpack.c.bf16 %v2078, %v2078
      %2087 = vst.msk [vmem:[#allocation5 + $0x10] sm:$0xf] %vm1700, %v2079
      %2088 = vst.msk [vmem:[#allocation5 + $0x24] sm:$0xf] %vm1700, %v2080
      %2089 = vst.msk [vmem:[#allocation5 + $0x38] sm:$0xf] %vm1700, %v2081
      %2090 = vst.msk [vmem:[#allocation5 + $0x4c] sm:$0xf] %vm1700, %v2082
      %2091 = vst.msk [vmem:[#allocation5 + $0x60] sm:$0xf] %vm1700, %v2083
      %2092 = vst.msk [vmem:[#allocation5 + $0x74] sm:$0xf] %vm1700, %v2084
      %2093 = vst.msk [vmem:[#allocation5 + $0x88] sm:$0xf] %vm1700, %v2085
      %2094 = vst.msk [vmem:[#allocation5 + $0x9c] sm:$0xf] %vm1700, %v2086
      %v2095 = vld [vmem:[#allocation5] sm:$0xff]
      %v2096 = vld [vmem:[#allocation5 + $0x8] sm:$0xff]
      %v2097 = vld [vmem:[#allocation5 + $0x10] sm:$0xf]
      %v2098 = vld [vmem:[#allocation5 + $0x14] sm:$0xff]
      %v2099 = vld [vmem:[#allocation5 + $0x1c] sm:$0xff]
      %v2100 = vld [vmem:[#allocation5 + $0x24] sm:$0xf]
      %v2101 = vld [vmem:[#allocation5 + $0x28] sm:$0xff]
      %v2102 = vld [vmem:[#allocation5 + $0x30] sm:$0xff]
      %v2103 = vld [vmem:[#allocation5 + $0x38] sm:$0xf]
      %v2104 = vld [vmem:[#allocation5 + $0x3c] sm:$0xff]
      %v2105 = vld [vmem:[#allocation5 + $0x44] sm:$0xff]
      %v2106 = vld [vmem:[#allocation5 + $0x4c] sm:$0xf]
      %v2107 = vld [vmem:[#allocation5 + $0x50] sm:$0xff]
      %v2108 = vld [vmem:[#allocation5 + $0x58] sm:$0xff]
      %v2109 = vld [vmem:[#allocation5 + $0x60] sm:$0xf]
      %v2110 = vld [vmem:[#allocation5 + $0x64] sm:$0xff]
      %v2111 = vld [vmem:[#allocation5 + $0x6c] sm:$0xff]
      %v2112 = vld [vmem:[#allocation5 + $0x74] sm:$0xf]
      %v2113 = vld [vmem:[#allocation5 + $0x78] sm:$0xff]
      %v2114 = vld [vmem:[#allocation5 + $0x80] sm:$0xff]
      %v2115 = vld [vmem:[#allocation5 + $0x88] sm:$0xf]
      %v2116 = vld [vmem:[#allocation5 + $0x8c] sm:$0xff]
      %v2117 = vld [vmem:[#allocation5 + $0x94] sm:$0xff]
      %v2118 = vld [vmem:[#allocation5 + $0x9c] sm:$0xf]
      %v2119 = vld [vmem:[%s5] sm:$0xf]
      %v2120 = vld [vmem:[%s5 + $0x4] sm:$0xf]
      %v2121 = vld [vmem:[%s5 + $0x8] sm:$0xf]
      %v2122 = vld [vmem:[%s5 + $0xc] sm:$0xf]
      %v2123 = vld [vmem:[%s5 + $0x10] sm:$0xf]
      %v2124 = vld [vmem:[%s5 + $0x14] sm:$0xf]
      %v2125 = vld [vmem:[%s5 + $0x18] sm:$0xf]
      %v2126 = vld [vmem:[%s5 + $0x1c] sm:$0xf]
      %v2127 = vld [vmem:[%s5 + $0x20] sm:$0xf]
      %v2128 = vld [vmem:[%s5 + $0x24] sm:$0xf]
      %v2129 = vld [vmem:[%s5 + $0x28] sm:$0xf]
      %v2130 = vld [vmem:[%s5 + $0x2c] sm:$0xf]
      %v2131 = vld [vmem:[%s5 + $0x30] sm:$0xf]
      %v2132 = vld [vmem:[%s5 + $0x34] sm:$0xf]
      %v2133 = vld [vmem:[%s5 + $0x38] sm:$0xf]
      %v2134 = vld [vmem:[%s5 + $0x3c] sm:$0xf]
      %v2135 = vld [vmem:[%s5 + $0x40] sm:$0xf]
      %v2136 = vld [vmem:[%s5 + $0x44] sm:$0xf]
      %v2137 = vld [vmem:[%s5 + $0x48] sm:$0xf]
      %v2138 = vld [vmem:[%s5 + $0x4c] sm:$0xf]
      %v2139 = vld [vmem:[%s5 + $0x50] sm:$0xf]
      %v2140 = vld [vmem:[%s5 + $0x54] sm:$0xf]
      %v2141 = vld [vmem:[%s5 + $0x58] sm:$0xf]
      %v2142 = vld [vmem:[%s5 + $0x5c] sm:$0xf]
      %v2143 = vld [vmem:[%s5 + $0x60] sm:$0xf]
      %v2144 = vld [vmem:[%s5 + $0x64] sm:$0xf]
      %v2145 = vld [vmem:[%s5 + $0x68] sm:$0xf]
      %v2146 = vld [vmem:[%s5 + $0x6c] sm:$0xf]
      %v2147 = vld [vmem:[%s5 + $0x70] sm:$0xf]
      %v2148 = vld [vmem:[%s5 + $0x74] sm:$0xf]
      %v2149 = vld [vmem:[%s5 + $0x78] sm:$0xf]
      %v2150 = vld [vmem:[%s5 + $0x7c] sm:$0xf]
      %v2151 = vld [vmem:[%s5 + $0x80] sm:$0xf]
      %v2152 = vld [vmem:[%s5 + $0x84] sm:$0xf]
      %v2153 = vld [vmem:[%s5 + $0x88] sm:$0xf]
      %v2154 = vld [vmem:[%s5 + $0x8c] sm:$0xf]
      %v2155 = vld [vmem:[%s5 + $0x90] sm:$0xf]
      %v2156 = vld [vmem:[%s5 + $0x94] sm:$0xf]
      %v2157 = vld [vmem:[%s5 + $0x98] sm:$0xf]
      %v2158 = vld [vmem:[%s5 + $0x9c] sm:$0xf]
      %v2159 = vld [vmem:[%s5 + $0xa0] sm:$0xf]
      %v2160 = vld [vmem:[%s5 + $0xa4] sm:$0xf]
      %v2161 = vld [vmem:[%s5 + $0xa8] sm:$0xf]
      %v2162 = vld [vmem:[%s5 + $0xac] sm:$0xf]
      %v2163 = vld [vmem:[%s5 + $0xb0] sm:$0xf]
      %v2164 = vld [vmem:[%s5 + $0xb4] sm:$0xf]
      %v2165 = vld [vmem:[%s5 + $0xb8] sm:$0xf]
      %v2166 = vld [vmem:[%s5 + $0xbc] sm:$0xf]
      %v2167 = vld [vmem:[%s5 + $0xc0] sm:$0xf]
      %v2168 = vld [vmem:[%s5 + $0xc4] sm:$0xf]
      %v2169 = vld [vmem:[%s5 + $0xc8] sm:$0xf]
      %v2170 = vld [vmem:[%s5 + $0xcc] sm:$0xf]
      %v2171 = vld [vmem:[%s5 + $0xd0] sm:$0xf]
      %v2172 = vld [vmem:[%s5 + $0xd4] sm:$0xf]
      %v2173 = vld [vmem:[%s5 + $0xd8] sm:$0xf]
      %v2174 = vld [vmem:[%s5 + $0xdc] sm:$0xf]
      %v2175 = vld [vmem:[%s5 + $0xe0] sm:$0xf]
      %v2176 = vld [vmem:[%s5 + $0xe4] sm:$0xf]
      %v2177 = vld [vmem:[%s5 + $0xe8] sm:$0xf]
      %v2178 = vld [vmem:[%s5 + $0xec] sm:$0xf]
      %v2179 = vld [vmem:[%s5 + $0xf0] sm:$0xf]
      %v2180 = vld [vmem:[%s5 + $0xf4] sm:$0xf]
      %v2181 = vld [vmem:[%s5 + $0xf8] sm:$0xf]
      %v2182 = vld [vmem:[%s5 + $0xfc] sm:$0xf]
      %v2183 = vld [vmem:[%s5 + $0x100] sm:$0xf]
      %v2184 = vld [vmem:[%s5 + $0x104] sm:$0xf]
      %v2185 = vld [vmem:[%s5 + $0x108] sm:$0xf]
      %v2186 = vld [vmem:[%s5 + $0x10c] sm:$0xf]
      %v2187 = vld [vmem:[%s5 + $0x110] sm:$0xf]
      %v2188 = vld [vmem:[%s5 + $0x114] sm:$0xf]
      %v2189 = vld [vmem:[%s5 + $0x118] sm:$0xf]
      %v2190 = vld [vmem:[%s5 + $0x11c] sm:$0xf]
      %v2215 = vunpack.c.l.b16 %v2095
      %v2216 = vunpack.c.h.b16 %v2095
      %v2217 = vunpack.c.l.b16 %v2096
      %v2218 = vunpack.c.h.b16 %v2096
      %v2219 = vunpack.c.l.b16 %v2097
      %v2220 = vunpack.c.l.b16 %v2098
      %v2221 = vunpack.c.h.b16 %v2098
      %v2222 = vunpack.c.l.b16 %v2099
      %v2223 = vunpack.c.h.b16 %v2099
      %v2224 = vunpack.c.l.b16 %v2100
      %v2225 = vunpack.c.l.b16 %v2101
      %v2226 = vunpack.c.h.b16 %v2101
      %v2227 = vunpack.c.l.b16 %v2102
      %v2228 = vunpack.c.h.b16 %v2102
      %v2229 = vunpack.c.l.b16 %v2103
      %v2230 = vunpack.c.l.b16 %v2104
      %v2231 = vunpack.c.h.b16 %v2104
      %v2232 = vunpack.c.l.b16 %v2105
      %v2233 = vunpack.c.h.b16 %v2105
      %v2234 = vunpack.c.l.b16 %v2106
      %v2235 = vunpack.c.l.b16 %v2107
      %v2236 = vunpack.c.h.b16 %v2107
      %v2237 = vunpack.c.l.b16 %v2108
      %v2238 = vunpack.c.h.b16 %v2108
      %v2239 = vunpack.c.l.b16 %v2109
      %v2240 = vunpack.c.l.b16 %v2110
      %v2241 = vunpack.c.h.b16 %v2110
      %v2242 = vunpack.c.l.b16 %v2111
      %v2243 = vunpack.c.h.b16 %v2111
      %v2244 = vunpack.c.l.b16 %v2112
      %v2245 = vunpack.c.l.b16 %v2113
      %v2246 = vunpack.c.h.b16 %v2113
      %v2247 = vunpack.c.l.b16 %v2114
      %v2248 = vunpack.c.h.b16 %v2114
      %v2249 = vunpack.c.l.b16 %v2115
      %v2250 = vunpack.c.l.b16 %v2116
      %v2251 = vunpack.c.h.b16 %v2116
      %v2252 = vunpack.c.l.b16 %v2117
      %v2253 = vunpack.c.h.b16 %v2117
      %v2254 = vunpack.c.l.b16 %v2118
      %v2255 = vpack.c.b16 %v2220, %v2215
      %v2256 = vpack.c.b16 %v2221, %v2216
      %v2257 = vpack.c.b16 %v2222, %v2217
      %v2258 = vpack.c.b16 %v2223, %v2218
      %v2259 = vpack.c.b16 %v2224, %v2219
      %v2260 = vpack.c.b16 %v2230, %v2225
      %v2261 = vpack.c.b16 %v2231, %v2226
      %v2262 = vpack.c.b16 %v2232, %v2227
      %v2263 = vpack.c.b16 %v2233, %v2228
      %v2264 = vpack.c.b16 %v2234, %v2229
      %v2265 = vpack.c.b16 %v2240, %v2235
      %v2266 = vpack.c.b16 %v2241, %v2236
      %v2267 = vpack.c.b16 %v2242, %v2237
      %v2268 = vpack.c.b16 %v2243, %v2238
      %v2269 = vpack.c.b16 %v2244, %v2239
      %v2270 = vpack.c.b16 %v2250, %v2245
      %v2271 = vpack.c.b16 %v2251, %v2246
      %v2272 = vpack.c.b16 %v2252, %v2247
      %v2273 = vpack.c.b16 %v2253, %v2248
      %v2274 = vpack.c.b16 %v2254, %v2249
      %v2363 = vunpack.c.l.b16 %v2119
      %v2364 = vunpack.c.l.b16 %v2120
      %v2365 = vunpack.c.l.b16 %v2121
      %v2366 = vunpack.c.l.b16 %v2122
      %v2367 = vunpack.c.l.b16 %v2123
      %v2368 = vunpack.c.l.b16 %v2124
      %v2369 = vunpack.c.l.b16 %v2125
      %v2370 = vunpack.c.l.b16 %v2126
      %v2371 = vunpack.c.l.b16 %v2127
      %v2372 = vunpack.c.l.b16 %v2128
      %v2373 = vunpack.c.l.b16 %v2129
      %v2374 = vunpack.c.l.b16 %v2130
      %v2375 = vunpack.c.l.b16 %v2131
      %v2376 = vunpack.c.l.b16 %v2132
      %v2377 = vunpack.c.l.b16 %v2133
      %v2378 = vunpack.c.l.b16 %v2134
      %v2379 = vunpack.c.l.b16 %v2135
      %v2380 = vunpack.c.l.b16 %v2136
      %v2381 = vunpack.c.l.b16 %v2137
      %v2382 = vunpack.c.l.b16 %v2138
      %v2383 = vunpack.c.l.b16 %v2139
      %v2384 = vunpack.c.l.b16 %v2140
      %v2385 = vunpack.c.l.b16 %v2141
      %v2386 = vunpack.c.l.b16 %v2142
      %v2387 = vunpack.c.l.b16 %v2143
      %v2388 = vunpack.c.l.b16 %v2144
      %v2389 = vunpack.c.l.b16 %v2145
      %v2390 = vunpack.c.l.b16 %v2146
      %v2391 = vunpack.c.l.b16 %v2147
      %v2392 = vunpack.c.l.b16 %v2148
      %v2393 = vunpack.c.l.b16 %v2149
      %v2394 = vunpack.c.l.b16 %v2150
      %v2395 = vunpack.c.l.b16 %v2151
      %v2396 = vunpack.c.l.b16 %v2152
      %v2397 = vunpack.c.l.b16 %v2153
      %v2398 = vunpack.c.l.b16 %v2154
      %v2399 = vunpack.c.l.b16 %v2155
      %v2400 = vunpack.c.l.b16 %v2156
      %v2401 = vunpack.c.l.b16 %v2157
      %v2402 = vunpack.c.l.b16 %v2158
      %v2403 = vunpack.c.l.b16 %v2159
      %v2404 = vunpack.c.l.b16 %v2160
      %v2405 = vunpack.c.l.b16 %v2161
      %v2406 = vunpack.c.l.b16 %v2162
      %v2407 = vunpack.c.l.b16 %v2163
      %v2408 = vunpack.c.l.b16 %v2164
      %v2409 = vunpack.c.l.b16 %v2165
      %v2410 = vunpack.c.l.b16 %v2166
      %v2411 = vunpack.c.l.b16 %v2167
      %v2412 = vunpack.c.l.b16 %v2168
      %v2413 = vunpack.c.l.b16 %v2169
      %v2414 = vunpack.c.l.b16 %v2170
      %v2415 = vunpack.c.l.b16 %v2171
      %v2416 = vunpack.c.l.b16 %v2172
      %v2417 = vunpack.c.l.b16 %v2173
      %v2418 = vunpack.c.l.b16 %v2174
      %v2419 = vunpack.c.l.b16 %v2175
      %v2420 = vunpack.c.l.b16 %v2176
      %v2421 = vunpack.c.l.b16 %v2177
      %v2422 = vunpack.c.l.b16 %v2178
      %v2423 = vunpack.c.l.b16 %v2179
      %v2424 = vunpack.c.l.b16 %v2180
      %v2425 = vunpack.c.l.b16 %v2181
      %v2426 = vunpack.c.l.b16 %v2182
      %v2427 = vunpack.c.l.b16 %v2183
      %v2428 = vunpack.c.l.b16 %v2184
      %v2429 = vunpack.c.l.b16 %v2185
      %v2430 = vunpack.c.l.b16 %v2186
      %v2431 = vunpack.c.l.b16 %v2187
      %v2432 = vunpack.c.l.b16 %v2188
      %v2433 = vunpack.c.l.b16 %v2189
      %v2434 = vunpack.c.l.b16 %v2190
      %v2435 = vpack.c.b16 %v2364, %v2363
      %v2436 = vpack.c.b16 %v2366, %v2365
      %v2437 = vpack.c.b16 %v2368, %v2367
      %v2438 = vpack.c.b16 %v2370, %v2369
      %v2439 = vpack.c.b16 %v2372, %v2371
      %v2440 = vpack.c.b16 %v2374, %v2373
      %v2441 = vpack.c.b16 %v2376, %v2375
      %v2442 = vpack.c.b16 %v2378, %v2377
      %v2443 = vpack.c.b16 %v2380, %v2379
      %v2444 = vpack.c.b16 %v2382, %v2381
      %v2445 = vpack.c.b16 %v2384, %v2383
      %v2446 = vpack.c.b16 %v2386, %v2385
      %v2447 = vpack.c.b16 %v2388, %v2387
      %v2448 = vpack.c.b16 %v2390, %v2389
      %v2449 = vpack.c.b16 %v2392, %v2391
      %v2450 = vpack.c.b16 %v2394, %v2393
      %v2451 = vpack.c.b16 %v2396, %v2395
      %v2452 = vpack.c.b16 %v2398, %v2397
      %v2453 = vpack.c.b16 %v2400, %v2399
      %v2454 = vpack.c.b16 %v2402, %v2401
      %v2455 = vpack.c.b16 %v2404, %v2403
      %v2456 = vpack.c.b16 %v2406, %v2405
      %v2457 = vpack.c.b16 %v2408, %v2407
      %v2458 = vpack.c.b16 %v2410, %v2409
      %v2459 = vpack.c.b16 %v2412, %v2411
      %v2460 = vpack.c.b16 %v2414, %v2413
      %v2461 = vpack.c.b16 %v2416, %v2415
      %v2462 = vpack.c.b16 %v2418, %v2417
      %v2463 = vpack.c.b16 %v2420, %v2419
      %v2464 = vpack.c.b16 %v2422, %v2421
      %v2465 = vpack.c.b16 %v2424, %v2423
      %v2466 = vpack.c.b16 %v2426, %v2425
      %v2467 = vpack.c.b16 %v2428, %v2427
      %v2468 = vpack.c.b16 %v2430, %v2429
      %v2469 = vpack.c.b16 %v2432, %v2431
      %v2470 = vpack.c.b16 %v2434, %v2433
      %v2508 = vsel %vm1647, %v2259, 0
      %v2511 = vsel %vm1647, %v2264, 0
      %v2514 = vsel %vm1647, %v2269, 0
      %v2517 = vsel %vm1647, %v2274, 0
      %2519 = vmatprep.subr.bf16.mxu0 0
      %2520 = vmatpush1.bf16.msra.mxu0 %v2435
      %2521 = vmatprep.subr.bf16.mxu0 0
      %2522 = vmatpush1.bf16.msra.mxu0 %v2436
      %2523 = vmatprep.subr.bf16.mxu0 0
      %2524 = vmatpush1.bf16.msra.mxu0 %v2437
      %2525 = vmatprep.subr.bf16.mxu0 0
      %2526 = vmatpush1.bf16.msra.mxu0 %v2438
      %2527 = vmatprep.subr.bf16.mxu0 0
      %2528 = vmatpush1.bf16.msra.mxu0 %v2439
      %2529 = vmatprep.subr.bf16.mxu0 0
      %2530 = vmatpush1.bf16.msra.mxu0 %v2440
      %2531 = vmatprep.subr.bf16.mxu0 0
      %2532 = vmatpush1.bf16.msra.mxu0 %v2441
      %2533 = vmatprep.subr.bf16.mxu0 0
      %2534 = vmatpush1.bf16.msra.mxu0 %v2442
      %2535 = vmatprep.subr.bf16.mxu0 0
      %2536 = vmatpush1.bf16.msra.mxu0 %v2443
      %2537 = vmatprep.subr.bf16.mxu0 0
      %2538 = vmatpush1.bf16.msra.mxu0 %v2444
      %2539 = vmatprep.subr.bf16.mxu0 0
      %2540 = vmatpush1.bf16.msra.mxu0 %v2445
      %2541 = vmatprep.subr.bf16.mxu0 0
      %2542 = vmatpush1.bf16.msra.mxu0 %v2446
      %2543 = vmatprep.subr.bf16.mxu0 0
      %2544 = vmatpush1.bf16.msra.mxu0 %v2447
      %2545 = vmatprep.subr.bf16.mxu0 0
      %2546 = vmatpush1.bf16.msra.mxu0 %v2448
      %2547 = vmatprep.subr.bf16.mxu0 0
      %2548 = vmatpush1.bf16.msra.mxu0 %v2449
      %2549 = vmatprep.subr.bf16.mxu0 0
      %2550 = vmatpush1.bf16.msra.mxu0 %v2450
      %2551 = vmatprep.mubr.bf16.mxu0 %v2256
      %2552 = vmatmul.mubr.bf16.gmra.mrb[0].mxu0 %v2255
      %v2553 = vpop.f32.mrb[0].mxu0
      %v2554 = vadd.f32 0.0, %v2553
      %v2555 = vpop.f32.mrb[0].mxu0
      %v2556 = vpop.f32.mrb[0].mxu0
      %v2557 = vadd.f32 0.0, %v2556
      %v2558 = vpop.f32.mrb[0].mxu0
      %2559 = vmatprep.mubr.bf16.mxu0 %v2261
      %2560 = vmatmul.mubr.bf16.gmra.mrb[0].mxu0 %v2260
      %v2561 = vpop.f32.mrb[0].mxu0
      %v2562 = vadd.f32 0.0, %v2561
      %v2563 = vpop.f32.mrb[0].mxu0
      %v2564 = vpop.f32.mrb[0].mxu0
      %v2565 = vadd.f32 0.0, %v2564
      %v2566 = vpop.f32.mrb[0].mxu0
      %2567 = vmatprep.mubr.bf16.mxu0 %v2266
      %2568 = vmatmul.mubr.bf16.gmra.mrb[0].mxu0 %v2265
      %v2569 = vpop.f32.mrb[0].mxu0
      %v2570 = vadd.f32 0.0, %v2569
      %v2571 = vpop.f32.mrb[0].mxu0
      %v2572 = vpop.f32.mrb[0].mxu0
      %v2573 = vadd.f32 0.0, %v2572
      %v2574 = vpop.f32.mrb[0].mxu0
      %2575 = vmatprep.mubr.bf16.mxu0 %v2271
      %2576 = vmatmul.mubr.bf16.gmra.mrb[0].mxu0 %v2270
      %v2577 = vpop.f32.mrb[0].mxu0
      %v2578 = vadd.f32 0.0, %v2577
      %v2579 = vpop.f32.mrb[0].mxu0
      %v2580 = vpop.f32.mrb[0].mxu0
      %v2581 = vadd.f32 0.0, %v2580
      %v2582 = vpop.f32.mrb[0].mxu0
      %2583 = vdwg.mxu0
      %2584 = vmatprep.subr.bf16.mxu0 0
      %2585 = vmatpush1.bf16.msra.mxu0 %v2451
      %2586 = vmatprep.subr.bf16.mxu0 0
      %2587 = vmatpush1.bf16.msra.mxu0 %v2452
      %2588 = vmatprep.subr.bf16.mxu0 0
      %2589 = vmatpush1.bf16.msra.mxu0 %v2453
      %2590 = vmatprep.subr.bf16.mxu0 0
      %2591 = vmatpush1.bf16.msra.mxu0 %v2454
      %2592 = vmatprep.subr.bf16.mxu0 0
      %2593 = vmatpush1.bf16.msra.mxu0 %v2455
      %2594 = vmatprep.subr.bf16.mxu0 0
      %2595 = vmatpush1.bf16.msra.mxu0 %v2456
      %2596 = vmatprep.subr.bf16.mxu0 0
      %2597 = vmatpush1.bf16.msra.mxu0 %v2457
      %2598 = vmatprep.subr.bf16.mxu0 0
      %2599 = vmatpush1.bf16.msra.mxu0 %v2458
      %2600 = vmatprep.subr.bf16.mxu0 0
      %2601 = vmatpush1.bf16.msra.mxu0 %v2459
      %2602 = vmatprep.subr.bf16.mxu0 0
      %2603 = vmatpush1.bf16.msra.mxu0 %v2460
      %2604 = vmatprep.subr.bf16.mxu0 0
      %2605 = vmatpush1.bf16.msra.mxu0 %v2461
      %2606 = vmatprep.subr.bf16.mxu0 0
      %2607 = vmatpush1.bf16.msra.mxu0 %v2462
      %2608 = vmatprep.subr.bf16.mxu0 0
      %2609 = vmatpush1.bf16.msra.mxu0 %v2463
      %2610 = vmatprep.subr.bf16.mxu0 0
      %2611 = vmatpush1.bf16.msra.mxu0 %v2464
      %2612 = vmatprep.subr.bf16.mxu0 0
      %2613 = vmatpush1.bf16.msra.mxu0 %v2465
      %2614 = vmatprep.subr.bf16.mxu0 0
      %2615 = vmatpush1.bf16.msra.mxu0 %v2466
      %2616 = vmatprep.mubr.bf16.mxu0 %v2258
      %2617 = vmatmul.mubr.bf16.gmra.mrb[0].mxu0 %v2257
      %v2618 = vpop.f32.mrb[0].mxu0
      %v2619 = vadd.f32 %v2554, %v2618
      %v2620 = vpop.f32.mrb[0].mxu0
      %v2621 = vpop.f32.mrb[0].mxu0
      %v2622 = vadd.f32 %v2557, %v2621
      %v2623 = vpop.f32.mrb[0].mxu0
      %2624 = vmatprep.mubr.bf16.mxu0 %v2263
      %2625 = vmatmul.mubr.bf16.gmra.mrb[0].mxu0 %v2262
      %v2626 = vpop.f32.mrb[0].mxu0
      %v2627 = vadd.f32 %v2562, %v2626
      %v2628 = vpop.f32.mrb[0].mxu0
      %v2629 = vpop.f32.mrb[0].mxu0
      %v2630 = vadd.f32 %v2565, %v2629
      %v2631 = vpop.f32.mrb[0].mxu0
      %2632 = vmatprep.mubr.bf16.mxu0 %v2268
      %2633 = vmatmul.mubr.bf16.gmra.mrb[0].mxu0 %v2267
      %v2634 = vpop.f32.mrb[0].mxu0
      %v2635 = vadd.f32 %v2570, %v2634
      %v2636 = vpop.f32.mrb[0].mxu0
      %v2637 = vpop.f32.mrb[0].mxu0
      %v2638 = vadd.f32 %v2573, %v2637
      %v2639 = vpop.f32.mrb[0].mxu0
      %2640 = vmatprep.mubr.bf16.mxu0 %v2273
      %2641 = vmatmul.mubr.bf16.gmra.mrb[0].mxu0 %v2272
      %v2642 = vpop.f32.mrb[0].mxu0
      %v2643 = vadd.f32 %v2578, %v2642
      %v2644 = vpop.f32.mrb[0].mxu0
      %v2645 = vpop.f32.mrb[0].mxu0
      %v2646 = vadd.f32 %v2581, %v2645
      %v2647 = vpop.f32.mrb[0].mxu0
      %2648 = vdwg.mxu0
      %2649 = vmatprep.subr.bf16.mxu0 0
      %2650 = vmatpush1.bf16.msra.mxu0 %v2467
      %2651 = vmatprep.subr.bf16.mxu0 0
      %2652 = vmatpush1.bf16.msra.mxu0 %v2468
      %2653 = vmatprep.subr.bf16.mxu0 0
      %2654 = vmatpush1.bf16.msra.mxu0 %v2469
      %2655 = vmatprep.subr.bf16.mxu0 0
      %2656 = vmatpush1.bf16.msra.mxu0 %v2470
      %2657 = vmatprep.subr.bf16.mxu0 0
      %2658 = vmatpush1.bf16.msra.mxu0 0
      %2659 = vmatprep.subr.bf16.mxu0 0
      %2660 = vmatpush1.bf16.msra.mxu0 0
      %2661 = vmatprep.subr.bf16.mxu0 0
      %2662 = vmatpush1.bf16.msra.mxu0 0
      %2663 = vmatprep.subr.bf16.mxu0 0
      %2664 = vmatpush1.bf16.msra.mxu0 0
      %2665 = vmatprep.subr.bf16.mxu0 0
      %2666 = vmatpush1.bf16.msra.mxu0 0
      %2667 = vmatprep.subr.bf16.mxu0 0
      %2668 = vmatpush1.bf16.msra.mxu0 0
      %2669 = vmatprep.subr.bf16.mxu0 0
      %2670 = vmatpush1.bf16.msra.mxu0 0
      %2671 = vmatprep.subr.bf16.mxu0 0
      %2672 = vmatpush1.bf16.msra.mxu0 0
      %2673 = vmatprep.subr.bf16.mxu0 0
      %2674 = vmatpush1.bf16.msra.mxu0 0
      %2675 = vmatprep.subr.bf16.mxu0 0
      %2676 = vmatpush1.bf16.msra.mxu0 0
      %2677 = vmatprep.subr.bf16.mxu0 0
      %2678 = vmatpush1.bf16.msra.mxu0 0
      %2679 = vmatprep.subr.bf16.mxu0 0
      %2680 = vmatpush1.bf16.msra.mxu0 0
      %2681 = vmatprep.mubr.bf16.mxu0 0
      %2682 = vmatmul.mubr.bf16.gmra.mrb[0].mxu0 %v2508
      %v2683 = vpop.f32.mrb[0].mxu0
      %v2684 = vadd.f32 %v2619, %v2683
      %v2685 = vpop.f32.mrb[0].mxu0
      %v2686 = vpop.f32.mrb[0].mxu0
      %v2687 = vadd.f32 %v2622, %v2686
      %v2688 = vpop.f32.mrb[0].mxu0
      %2689 = vmatprep.mubr.bf16.mxu0 0
      %2690 = vmatmul.mubr.bf16.gmra.mrb[0].mxu0 %v2511
      %v2691 = vpop.f32.mrb[0].mxu0
      %v2692 = vadd.f32 %v2627, %v2691
      %v2693 = vpop.f32.mrb[0].mxu0
      %v2694 = vpop.f32.mrb[0].mxu0
      %v2695 = vadd.f32 %v2630, %v2694
      %v2696 = vpop.f32.mrb[0].mxu0
      %2697 = vmatprep.mubr.bf16.mxu0 0
      %2698 = vmatmul.mubr.bf16.gmra.mrb[0].mxu0 %v2514
      %v2699 = vpop.f32.mrb[0].mxu0
      %v2700 = vadd.f32 %v2635, %v2699
      %v2701 = vpop.f32.mrb[0].mxu0
      %v2702 = vpop.f32.mrb[0].mxu0
      %v2703 = vadd.f32 %v2638, %v2702
      %v2704 = vpop.f32.mrb[0].mxu0
      %2705 = vmatprep.mubr.bf16.mxu0 0
      %2706 = vmatmul.mubr.bf16.gmra.mrb[0].mxu0 %v2517
      %v2707 = vpop.f32.mrb[0].mxu0
      %v2708 = vadd.f32 %v2643, %v2707
      %v2709 = vpop.f32.mrb[0].mxu0
      %v2710 = vpop.f32.mrb[0].mxu0
      %v2711 = vadd.f32 %v2646, %v2710
      %v2712 = vpop.f32.mrb[0].mxu0
      %2713 = vdwg.mxu0
      %v2714 = vsel %vm1647, %v2684, 0.0
      %v2715 = vsel %vm1647, %v2687, 0.0
      %v2716 = vadd.f32 %v2714, %v2715
      %v2717 = vsel %vm1647, %v2692, 0.0
      %v2718 = vadd.f32 %v2716, %v2717
      %v2719 = vsel %vm1647, %v2695, 0.0
      %v2720 = vadd.f32 %v2718, %v2719
      %v2721 = vsel %vm1647, %v2700, 0.0
      %v2722 = vadd.f32 %v2720, %v2721
      %v2723 = vsel %vm1647, %v2703, 0.0
      %v2724 = vadd.f32 %v2722, %v2723
      %v2725 = vsel %vm1647, %v2708, 0.0
      %v2726 = vadd.f32 %v2724, %v2725
      %v2727 = vsel %vm1647, %v2711, 0.0
      %v2728 = vadd.f32 %v2726, %v2727
      %v2729 = vrot.slane %v2728, 4
      %v2730 = vadd.f32 %v2728, %v2729
      %v2731 = vrot.slane %v2730, 2
      %v2732 = vadd.f32 %v2730, %v2731
      %v2733 = vrot.slane %v2732, 1
      %v2734 = vadd.f32 %v2732, %v2733
      %v2735 = vrcp.pop 64.0
      %v2736 = vmul.f32 %v2734, %v2735
      %v2737 = vld [vmem:[%s6] sm:$0xff]
      %v2738 = vld [vmem:[%s6 + $0x8] sm:$0xff]
      %v2739 = vld [vmem:[%s6 + $0x10] sm:$0xff]
      %v2740 = vld [vmem:[%s6 + $0x18] sm:$0xff]
      %v2741 = vld [vmem:[%s6 + $0x20] sm:$0xff]
      %v2742 = vld [vmem:[%s6 + $0x28] sm:$0xff]
      %v2743 = vld [vmem:[%s6 + $0x30] sm:$0xff]
      %v2744 = vld [vmem:[%s6 + $0x38] sm:$0xff]
      %v2746 = vsel %vm1647, %v2736, 0
      %2748 = vmatprep.subr.mxu0 0.0
      %2749 = vmatpush1.msra.mxu0 %v2737
      %2750 = vmatprep.subr.mxu0 0.0
      %2751 = vmatpush1.msra.mxu0 %v2738
      %2752 = vmatprep.subr.mxu0 0.0
      %2753 = vmatpush1.msra.mxu0 %v2739
      %2754 = vmatprep.subr.mxu0 0.0
      %2755 = vmatpush1.msra.mxu0 %v2740
      %2756 = vmatprep.subr.mxu0 0.0
      %2757 = vmatpush1.msra.mxu0 %v2741
      %2758 = vmatprep.subr.mxu0 0.0
      %2759 = vmatpush1.msra.mxu0 %v2742
      %2760 = vmatprep.subr.mxu0 0.0
      %2761 = vmatpush1.msra.mxu0 %v2743
      %2762 = vmatprep.subr.mxu0 0.0
      %2763 = vmatpush1.msra.mxu0 %v2744
      %2764 = vmatprep.subr.mxu0 0.0
      %2765 = vmatpush1.msra.mxu0 0.0
      %2766 = vmatprep.subr.mxu0 0.0
      %2767 = vmatpush1.msra.mxu0 0.0
      %2768 = vmatprep.subr.mxu0 0.0
      %2769 = vmatpush1.msra.mxu0 0.0
      %2770 = vmatprep.subr.mxu0 0.0
      %2771 = vmatpush1.msra.mxu0 0.0
      %2772 = vmatprep.subr.mxu0 0.0
      %2773 = vmatpush1.msra.mxu0 0.0
      %2774 = vmatprep.subr.mxu0 0.0
      %2775 = vmatpush1.msra.mxu0 0.0
      %2776 = vmatprep.subr.mxu0 0.0
      %2777 = vmatpush1.msra.mxu0 0.0
      %2778 = vmatprep.subr.mxu0 0.0
      %2779 = vmatpush1.msra.mxu0 0.0
      %2780 = vmatprep.subr.mxu0 0.0
      %2781 = vmatpush1.msra.mxu0 0.0
      %2782 = vmatprep.subr.mxu0 0.0
      %2783 = vmatpush1.msra.mxu0 0.0
      %2784 = vmatprep.subr.mxu0 0.0
      %2785 = vmatpush1.msra.mxu0 0.0
      %2786 = vmatprep.subr.mxu0 0.0
      %2787 = vmatpush1.msra.mxu0 0.0
      %2788 = vmatprep.subr.mxu0 0.0
      %2789 = vmatpush1.msra.mxu0 0.0
      %2790 = vmatprep.subr.mxu0 0.0
      %2791 = vmatpush1.msra.mxu0 0.0
      %2792 = vmatprep.subr.mxu0 0.0
      %2793 = vmatpush1.msra.mxu0 0.0
      %2794 = vmatprep.subr.mxu0 0.0
      %2795 = vmatpush1.msra.mxu0 0.0
      %2796 = vmatprep.subr.mxu0 0.0
      %2797 = vmatpush1.msra.mxu0 0.0
      %2798 = vmatprep.subr.mxu0 0.0
      %2799 = vmatpush1.msra.mxu0 0.0
      %2800 = vmatprep.subr.mxu0 0.0
      %2801 = vmatpush1.msra.mxu0 0.0
      %2802 = vmatprep.subr.mxu0 0.0
      %2803 = vmatpush1.msra.mxu0 0.0
      %2804 = vmatprep.subr.mxu0 0.0
      %2805 = vmatpush1.msra.mxu0 0.0
      %2806 = vmatprep.subr.mxu0 0.0
      %2807 = vmatpush1.msra.mxu0 0.0
      %2808 = vmatprep.subr.mxu0 0.0
      %2809 = vmatpush1.msra.mxu0 0.0
      %2810 = vmatprep.subr.mxu0 0.0
      %2811 = vmatpush1.msra.mxu0 0.0
      %2812 = vmatprep.mubr.f32.mxu0 0.0
      %2813 = vmatmul.mubr.f32.gmra.mrb[0].mxu0 %v2746
      %v2814 = vpop.f32.mrb[0].mxu0
      %v2815 = vadd.f32 0.0, %v2814
      %v2816 = vpop.f32.mrb[0].mxu0
      %2817 = vdwg.mxu0
      %v2818 = vmax.f32 %v2815, 0.0
      %v2819 = vld [vmem:[%s7] sm:$0xf]
      %vm2820 = vcmask 31744
      %v2822 = vsel %vm2820, %v2818, 0
      %vm2824 = vcmask 1043456
      %v2826 = vsel %vm2824, %v2819, 0
      %2828 = vmatprep.subr.mxu0 0.0
      %2829 = vmatpush1.msra.mxu0 %v2826
      %2830 = vmatprep.subr.mxu0 0.0
      %2831 = vmatpush1.msra.mxu0 0.0
      %2832 = vmatprep.subr.mxu0 0.0
      %2833 = vmatpush1.msra.mxu0 0.0
      %2834 = vmatprep.subr.mxu0 0.0
      %2835 = vmatpush1.msra.mxu0 0.0
      %2836 = vmatprep.subr.mxu0 0.0
      %2837 = vmatpush1.msra.mxu0 0.0
      %2838 = vmatprep.subr.mxu0 0.0
      %2839 = vmatpush1.msra.mxu0 0.0
      %2840 = vmatprep.subr.mxu0 0.0
      %2841 = vmatpush1.msra.mxu0 0.0
      %2842 = vmatprep.subr.mxu0 0.0
      %2843 = vmatpush1.msra.mxu0 0.0
      %2844 = vmatprep.subr.mxu0 0.0
      %2845 = vmatpush1.msra.mxu0 0.0
      %2846 = vmatprep.subr.mxu0 0.0
      %2847 = vmatpush1.msra.mxu0 0.0
      %2848 = vmatprep.subr.mxu0 0.0
      %2849 = vmatpush1.msra.mxu0 0.0
      %2850 = vmatprep.subr.mxu0 0.0
      %2851 = vmatpush1.msra.mxu0 0.0
      %2852 = vmatprep.subr.mxu0 0.0
      %2853 = vmatpush1.msra.mxu0 0.0
      %2854 = vmatprep.subr.mxu0 0.0
      %2855 = vmatpush1.msra.mxu0 0.0
      %2856 = vmatprep.subr.mxu0 0.0
      %2857 = vmatpush1.msra.mxu0 0.0
      %2858 = vmatprep.subr.mxu0 0.0
      %2859 = vmatpush1.msra.mxu0 0.0
      %2860 = vmatprep.subr.mxu0 0.0
      %2861 = vmatpush1.msra.mxu0 0.0
      %2862 = vmatprep.subr.mxu0 0.0
      %2863 = vmatpush1.msra.mxu0 0.0
      %2864 = vmatprep.subr.mxu0 0.0
      %2865 = vmatpush1.msra.mxu0 0.0
      %2866 = vmatprep.subr.mxu0 0.0
      %2867 = vmatpush1.msra.mxu0 0.0
      %2868 = vmatprep.subr.mxu0 0.0
      %2869 = vmatpush1.msra.mxu0 0.0
      %2870 = vmatprep.subr.mxu0 0.0
      %2871 = vmatpush1.msra.mxu0 0.0
      %2872 = vmatprep.subr.mxu0 0.0
      %2873 = vmatpush1.msra.mxu0 0.0
      %2874 = vmatprep.subr.mxu0 0.0
      %2875 = vmatpush1.msra.mxu0 0.0
      %2876 = vmatprep.subr.mxu0 0.0
      %2877 = vmatpush1.msra.mxu0 0.0
      %2878 = vmatprep.subr.mxu0 0.0
      %2879 = vmatpush1.msra.mxu0 0.0
      %2880 = vmatprep.subr.mxu0 0.0
      %2881 = vmatpush1.msra.mxu0 0.0
      %2882 = vmatprep.subr.mxu0 0.0
      %2883 = vmatpush1.msra.mxu0 0.0
      %2884 = vmatprep.subr.mxu0 0.0
      %2885 = vmatpush1.msra.mxu0 0.0
      %2886 = vmatprep.subr.mxu0 0.0
      %2887 = vmatpush1.msra.mxu0 0.0
      %2888 = vmatprep.subr.mxu0 0.0
      %2889 = vmatpush1.msra.mxu0 0.0
      %2890 = vmatprep.subr.mxu0 0.0
      %2891 = vmatpush1.msra.mxu0 0.0
      %2892 = vmatprep.mubr.f32.mxu0 0.0
      %2893 = vmatmul.mubr.f32.gmra.mrb[0].mxu0 %v2822
      %v2894 = vpop.f32.mrb[0].mxu0
      %v2895 = vadd.f32 0.0, %v2894
      %v2896 = vpop.f32.mrb[0].mxu0
      %2897 = vdwg.mxu0
      %v2898 = vxor.u32 %v2895, 2147483648
      %v2899 = vmul.f32 %v2898, 1.442695
      %v2900 = vpow.pop %v2899
      %v2901 = vadd.f32 %v2900, 1.0
      %v2902 = vrcp.pop %v2901
      %v2903 = vmul.f32 1.0, %v2902
      %v2904 = vlaneseq
      %v2905 = vshrl.u32 %v2904, 7
      %v2906 = vsub.s32 0, %v2905
      %v2907 = vrot.slane %v2903, %v2906
      %v2908 = vmul.f32 %v2684, %v2907
      %v2909 = vmul.f32 %v2687, %v2907
      %v2910 = vmul.f32 %v2692, %v2907
      %v2911 = vmul.f32 %v2695, %v2907
      %v2912 = vmul.f32 %v2700, %v2907
      %v2913 = vmul.f32 %v2703, %v2907
      %v2914 = vmul.f32 %v2708, %v2907
      %v2915 = vmul.f32 %v2711, %v2907
      %v2916 = vadd.f32 %v2908, %v1617
      %v2917 = vadd.f32 %v2909, %v1620
      %v2918 = vadd.f32 %v2910, %v1625
      %v2919 = vadd.f32 %v2911, %v1628
      %v2920 = vadd.f32 %v2912, %v1633
      %v2921 = vadd.f32 %v2913, %v1636
      %v2922 = vadd.f32 %v2914, %v1641
      %v2923 = vadd.f32 %v2915, %v1644
      %2924 = vst.msk [vmem:[%s332] sm:$0xff] %vm1647, %v2916
      %2925 = vst.msk [vmem:[%s332 + $0x8] sm:$0xff] %vm1647, %v2917
      %2926 = vst.msk [vmem:[%s332 + $0x10] sm:$0xff] %vm1647, %v2918
      %2927 = vst.msk [vmem:[%s332 + $0x18] sm:$0xff] %vm1647, %v2919
      %2928 = vst.msk [vmem:[%s332 + $0x20] sm:$0xff] %vm1647, %v2920
      %2929 = vst.msk [vmem:[%s332 + $0x28] sm:$0xff] %vm1647, %v2921
      %2930 = vst.msk [vmem:[%s332 + $0x30] sm:$0xff] %vm1647, %v2922
      %2931 = vst.msk [vmem:[%s332 + $0x38] sm:$0xff] %vm1647, %v2923
      %s2932 = smul.u32 8, %s20
      %p2933 = scmp.lt.s32.totalorder %s2932, 15
      %s2934 = scalar_select %p2933, %s2932, 15
      %s2935 = smul.addr %s2934, 8
      %s2936 = scalar_lea.vmem %s9, %s2935
      // Predicated region
      $region57: #{tpu_custom_call.1} parent=55 // pred_check
        %p2937 = pneg %p232
      $region58: #{tpu_custom_call.1} parent=55 // pred_check_branch
        %2939 = sbr.rel (%p2937) target = $region60
      $region59: #{tpu_custom_call.1} parent=55 // pred_region
        %s2940 = smul.u32 8, %s20
      $region60: #{tpu_custom_call.1} parent=55 // pred_fallthru
        _
    $region56: #{tpu_custom_call.1} parent=5 // pred_fallthru
      _
    %p2941 = scmp.le.s32.totalorder 2, %s15
    // Predicated region
    $region61: #{tpu_custom_call.1} parent=5 // pred_check
      %p2942 = pneg %p2941
    $region62: #{tpu_custom_call.1} parent=5 // pred_check_branch
      %2944 = sbr.rel (%p2942) target = $region64
    $region63: #{tpu_custom_call.1} parent=5 // pred_region
      %s2945 = ssub.s32 %s15, 2
      // Predicated region
      $region65: #{tpu_custom_call.1} parent=63 // pred_check
        %p2946 = pneg %p238
      $region66: #{tpu_custom_call.1} parent=63 // pred_check_branch
        %2948 = sbr.rel (%p2946) target = $region68
      $region67: #{tpu_custom_call.1} parent=63 // pred_region
        %s2949 = smul.u32 8, %s21
        %p2950 = scmp.lt.s32.totalorder %s2949, 15
        %s2951 = scalar_select %p2950, %s2949, 15
        %s2952 = smul.addr %s2951, 8
        %s2953 = scalar_lea.vmem %s9, %s2952
      $region68: #{tpu_custom_call.1} parent=63 // pred_fallthru
        _
    $region64: #{tpu_custom_call.1} parent=5 // pred_fallthru
      _
  $region6: #{tpu_custom_call.1} parent=0 // loop_footer
    %s19 = sadd.s32 1, %s15
  $region7: #{tpu_custom_call.1} parent=0 // loop_footer_branch
    %14 = sbr.rel target = $region3
  $region8: #{tpu_custom_call.1} parent=0 // loop_exit
    _

</llo_original>
